<compile_context>
chip_gen: v7x
topology: tpu7x:2x2x1
jax: 0.10.0
libtpu: 0.0.40
codegen_flags: <defaults>
</compile_context>

<pallas_src>
import functools
import math

import jax
import jax.numpy as jnp
from jax.experimental import pallas as pl
from jax.experimental.pallas import tpu as pltpu

LN_EPS = 1e-12
VOCAB_COL_TILE = 512  # N-tile for the final vocab projection (multiple of 128)


# ---------------------------------------------------------------------------
# Per-generation tuning (v5e/v6e: 128 MiB VMEM; v7x: 64 MiB per TensorCore)
# ---------------------------------------------------------------------------
def _vmem_capacity_bytes():
    try:
        return int(pltpu.get_tpu_info().vmem_capacity_bytes)
    except Exception:
        pass
    try:
        kind = jax.devices()[0].device_kind.lower()
        if "v5" in kind or "v6" in kind:
            return 128 * 1024 * 1024
    except Exception:
        pass
    return 64 * 1024 * 1024  # conservative default (v7x-class)


_VMEM_PHYS = _vmem_capacity_bytes()
if _VMEM_PHYS <= 64 * 1024 * 1024:       # v7x-class
    ROW_TILE_CAP = 256
    VMEM_LIMIT_BYTES = 48 * 1024 * 1024
else:                                     # v5e / v6e
    ROW_TILE_CAP = 512
    VMEM_LIMIT_BYTES = 80 * 1024 * 1024


def _row_tile(m, cap=None):
    cap = ROW_TILE_CAP if cap is None else cap
    return m if m <= cap else cap


def _compiler_params(n_grid_dims=1):
    return pltpu.CompilerParams(
        dimension_semantics=("parallel",) * n_grid_dims,
        vmem_limit_bytes=VMEM_LIMIT_BYTES,
    )


# ---------------------------------------------------------------------------
# In-kernel helpers: bf16 operands on the MXU, f32 accumulation; f32 elementwise
# ---------------------------------------------------------------------------
def _mxu_dot(a, b):
    """a[m,k] @ b[k,n] -> f32[m,n] (bf16 operands, f32 accumulate).

    Weights are already bf16 in HBM, so only the activation operand is cast."""
    return jax.lax.dot_general(
        a.astype(jnp.bfloat16), b.astype(jnp.bfloat16),
        (((a.ndim - 1,), (0,)), ((), ())),
        preferred_element_type=jnp.float32)


def _layernorm_f32(h, g, b):
    # biased variance, eps=1e-12 (matches the PyTorch reference); math in f32
    mean = jnp.mean(h, axis=-1, keepdims=True)
    c = h - mean
    var = jnp.mean(c * c, axis=-1, keepdims=True)
    return c * jax.lax.rsqrt(var + LN_EPS) * g + b


# ---------------------------------------------------------------------------
# Pallas kernels
# ---------------------------------------------------------------------------
def _linear_kernel(x_ref, w_ref, b_ref, o_ref):
    # x: [tm, K], w: [K, tn] (bf16, resident), b: [1, tn] f32 -> o: [tm, tn]
    o_ref[...] = (_mxu_dot(x_ref[...], w_ref[...]) + b_ref[...]).astype(o_ref.dtype)


def _proj_residual_ln_kernel(x_ref, res_ref, w_ref, b_ref, g_ref, bt_ref, o_ref):
    # fused: LayerNorm(x @ w + b + residual); x may be bf16, residual is f32
    h = _mxu_dot(x_ref[...], w_ref[...]) + b_ref[...] + res_ref[...]
    o_ref[...] = _layernorm_f32(h, g_ref[...], bt_ref[...]).astype(o_ref.dtype)


def _ffn_residual_ln_kernel(x_ref, w1_ref, b1_ref, w2_ref, b2_ref, g_ref, bt_ref, o_ref):
    # fused: LayerNorm(relu(x @ w1 + b1) @ w2 + b2 + x)
    x = x_ref[...]
    h = jnp.maximum(_mxu_dot(x, w1_ref[...]) + b1_ref[...], 0.0)
    h = _mxu_dot(h, w2_ref[...]) + b2_ref[...] + x
    o_ref[...] = _layernorm_f32(h, g_ref[...], bt_ref[...]).astype(o_ref.dtype)


def _mha_block(q, kv, o_ref, n_head):
    # q: [Bt, Lq, D] bf16 (1/sqrt(dh) folded into Wq); kv: [Bt, Lk, 2D] bf16.
    # Heads stay concatenated on the lane axis; each head's context is written
    # directly into its lane slice of the output block (no concatenate).
    D = q.shape[-1]
    dh = D // n_head
    k = kv[..., :D]
    v = kv[..., D:]
    for h in range(n_head):                       # static head loop
        sl = slice(h * dh, (h + 1) * dh)
        s = jnp.einsum('bqd,bkd->bqk', q[..., sl], k[..., sl],
                       preferred_element_type=jnp.float32)      # [Bt, Lq, Lk] f32
        s = s - jnp.max(s, axis=-1, keepdims=True)               # softmax in f32
        p = jnp.exp(s)
        p = p * pl.reciprocal(jnp.sum(p, axis=-1, keepdims=True), approx=True)
        ctx = jnp.einsum('bqk,bkd->bqd', p.astype(jnp.bfloat16), v[..., sl],
                         preferred_element_type=jnp.float32)     # [Bt, Lq, dh]
        o_ref[:, :, sl] = ctx.astype(o_ref.dtype)


def _attn_kernel(q_ref, kv_ref, o_ref, *, n_head):
    _mha_block(q_ref[...], kv_ref[...], o_ref, n_head)


def _attn_packed_qkv_kernel(qkv_ref, o_ref, *, n_head):
    qkv = qkv_ref[...]
    D = qkv.shape[-1] // 3
    _mha_block(qkv[..., :D], qkv[..., D:], o_ref, n_head)


# ---------------------------------------------------------------------------
# Pallas wrappers (M-tiled grids, bf16 weights resident in VMEM)
# ---------------------------------------------------------------------------
def linear2d(x2d, w, b, out_dtype=jnp.float32):
    M, K = x2d.shape
    N = w.shape[1]
    tm = _row_tile(M)
    return pl.pallas_call(
        _linear_kernel,
        grid=(pl.cdiv(M, tm),),
        out_shape=jax.ShapeDtypeStruct((M, N), out_dtype),
        in_specs=[
            pl.BlockSpec((tm, K), lambda i: (i, 0)),
            pl.BlockSpec((K, N), lambda i: (0, 0)),
            pl.BlockSpec((1, N), lambda i: (0, 0)),
        ],
        out_specs=pl.BlockSpec((tm, N), lambda i: (i, 0)),
        compiler_params=_compiler_params(1),
        cost_estimate=pl.CostEstimate(
            flops=2 * M * K * N, transcendentals=0,
            bytes_accessed=4 * M * K + 2 * K * N + 2 * M * N),
    )(x2d, w, b.reshape(1, N))


def linear2d_col_tiled(x2d, w, b, tn=VOCAB_COL_TILE, out_dtype=jnp.float32):
    # N-tiled variant for wide outputs (vocab projection): the [K, N] weight is
    # streamed tile-by-tile instead of being fully resident in VMEM.
    M, K = x2d.shape
    N = w.shape[1]
    tm = _row_tile(M)
    tn = min(tn, N)
    return pl.pallas_call(
        _linear_kernel,
        grid=(pl.cdiv(M, tm), pl.cdiv(N, tn)),
        out_shape=jax.ShapeDtypeStruct((M, N), out_dtype),
        in_specs=[
            pl.BlockSpec((tm, K), lambda i, j: (i, 0)),
            pl.BlockSpec((K, tn), lambda i, j: (0, j)),
            pl.BlockSpec((1, tn), lambda i, j: (0, j)),
        ],
        out_specs=pl.BlockSpec((tm, tn), lambda i, j: (i, j)),
        compiler_params=_compiler_params(2),
        cost_estimate=pl.CostEstimate(
            flops=2 * M * K * N, transcendentals=0,
            bytes_accessed=4 * M * K + 2 * K * N + 4 * M * N),
    )(x2d, w, b.reshape(1, N))


def proj_residual_ln(x2d, res2d, w, b, g, beta):
    M, K = x2d.shape
    N = w.shape[1]
    tm = _row_tile(M)
    return pl.pallas_call(
        _proj_residual_ln_kernel,
        grid=(pl.cdiv(M, tm),),
        out_shape=jax.ShapeDtypeStruct((M, N), jnp.float32),
        in_specs=[
            pl.BlockSpec((tm, K), lambda i: (i, 0)),
            pl.BlockSpec((tm, N), lambda i: (i, 0)),
            pl.BlockSpec((K, N), lambda i: (0, 0)),
            pl.BlockSpec((1, N), lambda i: (0, 0)),
            pl.BlockSpec((1, N), lambda i: (0, 0)),
            pl.BlockSpec((1, N), lambda i: (0, 0)),
        ],
        out_specs=pl.BlockSpec((tm, N), lambda i: (i, 0)),
        compiler_params=_compiler_params(1),
        cost_estimate=pl.CostEstimate(
            flops=2 * M * K * N, transcendentals=0,
            bytes_accessed=2 * M * K + 4 * M * N + 2 * K * N + 4 * M * N),
    )(x2d, res2d, w, b.reshape(1, N), g.reshape(1, N), beta.reshape(1, N))


def ffn_residual_ln(x2d, w1, b1, w2, b2, g, beta):
    M, D = x2d.shape
    H = w1.shape[1]
    tm = _row_tile(M)
    return pl.pallas_call(
        _ffn_residual_ln_kernel,
        grid=(pl.cdiv(M, tm),),
        out_shape=jax.ShapeDtypeStruct((M, D), jnp.float32),
        in_specs=[
            pl.BlockSpec((tm, D), lambda i: (i, 0)),
            pl.BlockSpec((D, H), lambda i: (0, 0)),
            pl.BlockSpec((1, H), lambda i: (0, 0)),
            pl.BlockSpec((H, D), lambda i: (0, 0)),
            pl.BlockSpec((1, D), lambda i: (0, 0)),
            pl.BlockSpec((1, D), lambda i: (0, 0)),
            pl.BlockSpec((1, D), lambda i: (0, 0)),
        ],
        out_specs=pl.BlockSpec((tm, D), lambda i: (i, 0)),
        compiler_params=_compiler_params(1),
        cost_estimate=pl.CostEstimate(
            flops=4 * M * D * H, transcendentals=0,
            bytes_accessed=8 * M * D + 4 * D * H),
    )(x2d, w1, b1.reshape(1, H), w2, b2.reshape(1, D),
      g.reshape(1, D), beta.reshape(1, D))


def _batch_tile(B, Lq, target_rows=256):
    # Pack enough batch elements per grid step to fill the MXU M dimension,
    # choosing a divisor of B so no padded remainder steps are needed.
    bt = max(1, min(B, target_rows // max(Lq, 1)))
    while B % bt:
        bt -= 1
    return bt


def sdp_attention(q, kv, n_head):
    # q: [B, Lq, D] bf16; kv: [B, Lk, 2D] bf16 (packed K|V). Returns bf16 [B, Lq, D].
    B, Lq, D = q.shape
    Lk = kv.shape[1]
    bt = _batch_tile(B, Lq)
    kernel = functools.partial(_attn_kernel, n_head=n_head)
    return pl.pallas_call(
        kernel,
        grid=(B // bt,),
        out_shape=jax.ShapeDtypeStruct((B, Lq, D), jnp.bfloat16),
        in_specs=[
            pl.BlockSpec((bt, Lq, D), lambda b: (b, 0, 0)),
            pl.BlockSpec((bt, Lk, 2 * D), lambda b: (b, 0, 0)),
        ],
        out_specs=pl.BlockSpec((bt, Lq, D), lambda b: (b, 0, 0)),
        compiler_params=_compiler_params(1),
    )(q, kv)


def sdp_attention_packed(qkv, n_head):
    # qkv: [B, L, 3D] bf16 (packed Q|K|V from the fused self-attn projection).
    B, L, D3 = qkv.shape
    D = D3 // 3
    bt = _batch_tile(B, L)
    kernel = functools.partial(_attn_packed_qkv_kernel, n_head=n_head)
    return pl.pallas_call(
        kernel,
        grid=(B // bt,),
        out_shape=jax.ShapeDtypeStruct((B, L, D), jnp.bfloat16),
        in_specs=[pl.BlockSpec((bt, L, D3), lambda b: (b, 0, 0))],
        out_specs=pl.BlockSpec((bt, L, D), lambda b: (b, 0, 0)),
        compiler_params=_compiler_params(1),
    )(qkv)


# ---------------------------------------------------------------------------
# Model (glue in plain JAX, hot paths in the kernels above)
# ---------------------------------------------------------------------------
def attn_sublayer(p, x, mem, n_head):
    # post-LN sublayer: LN( out_proj(attn(q(x), kv(mem))) + x )
    B, Lq, D = x.shape
    x2d = x.reshape(B * Lq, D)
    if "w_qkv" in p:
        # self-attention (mem is x): fused Q|K|V projection, single launch
        qkv = linear2d(x2d, p["w_qkv"], p["b_qkv"], out_dtype=jnp.bfloat16)
        ctx = sdp_attention_packed(qkv.reshape(B, Lq, 3 * D), n_head)
    else:
        Lk = mem.shape[1]
        q = linear2d(x2d, p["wq"], p["bq"], out_dtype=jnp.bfloat16).reshape(B, Lq, D)
        kv = linear2d(mem.reshape(B * Lk, D), p["w_kv"], p["b_kv"],
                      out_dtype=jnp.bfloat16).reshape(B, Lk, 2 * D)
        ctx = sdp_attention(q, kv, n_head)
    out = proj_residual_ln(ctx.reshape(B * Lq, D), x2d,
                           p["wo"], p["bo"], p["ln_g"], p["ln_b"])
    return out.reshape(B, Lq, D)


def ffn_sublayer(p, x):
    B, L, D = x.shape
    out = ffn_residual_ln(x.reshape(B * L, D), p["w1"], p["b1"],
                          p["w2"], p["b2"], p["ln_g"], p["ln_b"])
    return out.reshape(B, L, D)


def encoder_layer(p, x, n_head):
    x = attn_sublayer(p["attn"], x, x, n_head)
    x = ffn_sublayer(p["ffn"], x)
    return x


def decoder_layer(p, x, enc_src, action_emb, n_head):
    x = attn_sublayer(p["self_attn"], x, x, n_head)
    x = attn_sublayer(p["enc_attn"], x, enc_src, n_head)
    x = attn_sublayer(p["act_attn"], x, action_emb, n_head)
    x = ffn_sublayer(p["ffn"], x)
    return x


def transformer_forward(params, src, trg, action_emb, n_head, dec_voc_size):
    # ---- Encoder over action_emb (mask = None) ----
    La = action_emb.shape[1]
    x = action_emb + params["pos_enc"][:La][None, :, :]
    for lp in params["enc_layers"]:
        x = encoder_layer(lp, x, n_head)
    action_enc = x

    # ---- Decoder (trg tokens; enc_src = src; masks = None) ----
    enc_src = src
    B, Lt = trg.shape
    y = params["tok_emb"][trg] + params["pos_enc"][:Lt][None, :, :]
    for lp in params["dec_layers"]:
        y = decoder_layer(lp, y, enc_src, action_enc, n_head)

    D = y.shape[-1]
    # output projection: N-tiled over the lane-padded vocab, sliced back
    out = linear2d_col_tiled(y.reshape(B * Lt, D), params["out_w"], params["out_b"])
    return out.reshape(B, Lt, -1)[:, :, :dec_voc_size]


# ---------------------------------------------------------------------------
# Deterministic parameter initialization (matmul weights stored in bf16)
# ---------------------------------------------------------------------------
def sinusoidal_pos_encoding(max_len, d_model):
    pos = jnp.arange(max_len, dtype=jnp.float32)[:, None]
    i2 = jnp.arange(0, d_model, 2, dtype=jnp.float32)[None, :]
    angle = pos / jnp.power(10000.0, i2 / d_model)
    pe = jnp.zeros((max_len, d_model), jnp.float32)
    pe = pe.at[:, 0::2].set(jnp.sin(angle))
    pe = pe.at[:, 1::2].set(jnp.cos(angle))
    return pe


def _init_dense(key, d_in, d_out):
    return (jax.random.normal(key, (d_in, d_out), jnp.float32) * 0.02,
            jnp.zeros((d_out,), jnp.float32))


def _ln_params(d):
    return jnp.ones((d,), jnp.float32), jnp.zeros((d,), jnp.float32)


def _init_attn_sublayer(key, d_model, n_head, self_attn):
    ks = jax.random.split(key, 4)
    scale = 1.0 / math.sqrt(d_model // n_head)
    wq, bq = _init_dense(ks[0], d_model, d_model)
    wk, bk = _init_dense(ks[1], d_model, d_model)
    wv, bv = _init_dense(ks[2], d_model, d_model)
    wo, bo = _init_dense(ks[3], d_model, d_model)
    # fold the 1/sqrt(d_head) attention scale into the Q projection
    wq = wq * scale
    bq = bq * scale
    g, b = _ln_params(d_model)
    p = dict(wo=wo.astype(jnp.bfloat16), bo=bo, ln_g=g, ln_b=b)
    if self_attn:
        p["w_qkv"] = jnp.concatenate([wq, wk, wv], axis=1).astype(jnp.bfloat16)
        p["b_qkv"] = jnp.concatenate([bq, bk, bv], axis=0)
    else:
        p["wq"] = wq.astype(jnp.bfloat16)
        p["bq"] = bq
        p["w_kv"] = jnp.concatenate([wk, wv], axis=1).astype(jnp.bfloat16)
        p["b_kv"] = jnp.concatenate([bk, bv], axis=0)
    return p


def _init_ffn_sublayer(key, d_model, hidden):
    k1, k2 = jax.random.split(key)
    w1, b1 = _init_dense(k1, d_model, hidden)
    w2, b2 = _init_dense(k2, hidden, d_model)
    g, b = _ln_params(d_model)
    return dict(w1=w1.astype(jnp.bfloat16), b1=b1,
                w2=w2.astype(jnp.bfloat16), b2=b2, ln_g=g, ln_b=b)


def init_params(key, d_model, n_head, n_layers, ffn_hidden, dec_voc_size, max_len):
    keys = jax.random.split(key, 2 + 2 * n_layers)
    enc_layers, dec_layers = [], []
    for i in range(n_layers):
        ka, kf = jax.random.split(keys[2 + i])
        enc_layers.append(dict(
            attn=_init_attn_sublayer(ka, d_model, n_head, self_attn=True),
            ffn=_init_ffn_sublayer(kf, d_model, ffn_hidden)))
    for i in range(n_layers):
        k1, k2, k3, kf = jax.random.split(keys[2 + n_layers + i], 4)
        dec_layers.append(dict(
            self_attn=_init_attn_sublayer(k1, d_model, n_head, self_attn=True),
            enc_attn=_init_attn_sublayer(k2, d_model, n_head, self_attn=False),
            act_attn=_init_attn_sublayer(k3, d_model, n_head, self_attn=False),
            ffn=_init_ffn_sublayer(kf, d_model, ffn_hidden)))
    tok_emb = jax.random.normal(keys[0], (dec_voc_size, d_model), jnp.float32) * 0.02
    out_w, out_b = _init_dense(keys[1], d_model, dec_voc_size)
    # Pad the vocab (output lane) dimension up to a multiple of 128 so the final
    # projection uses lane-dense, unmasked stores; padded columns are zero and
    # sliced off after the kernel (semantics unchanged).
    vpad = ((dec_voc_size + 127) // 128) * 128
    out_w = jnp.pad(out_w, ((0, 0), (0, vpad - dec_voc_size))).astype(jnp.bfloat16)
    out_b = jnp.pad(out_b, (0, vpad - dec_voc_size))
    return dict(enc_layers=enc_layers, dec_layers=dec_layers,
                tok_emb=tok_emb,
                pos_enc=sinusoidal_pos_encoding(max_len, d_model),
                out_w=out_w, out_b=out_b)


# ---------------------------------------------------------------------------
# Demo
# ---------------------------------------------------------------------------
if __name__ == "__main__":
    B = 2
    L_src, L_trg, L_act = 8, 8, 8
    d_model, n_head, ffn_hidden, n_layers = 32, 4, 64, 2
    dec_voc_size, max_len = 50, 16

    key = jax.random.PRNGKey(0)
    kp, ks, kt, ka = jax.random.split(key, 4)

    params = init_params(kp, d_model, n_head, n_layers, ffn_hidden,
                         dec_voc_size, max_len)

    src = jax.random.normal(ks, (B, L_src, d_model), jnp.float32)         # enc_src (continuous)
    trg = jax.random.randint(kt, (B, L_trg), 0, dec_voc_size, jnp.int32)  # target token ids
    action_emb = jax.random.normal(ka, (B, L_act, d_model), jnp.float32)  # encoder input

    fwd = jax.jit(functools.partial(transformer_forward,
                                    n_head=n_head, dec_voc_size=dec_voc_size))
    out = fwd(params, src, trg, action_emb)
    jax.block_until_ready(out)

    assert out.shape == (B, L_trg, dec_voc_size)
    assert out.dtype == jnp.float32
    print("KERNEL_OK")
</pallas_src>

<mosaic_0001>
module attributes {stable_mosaic.version = 11 : i64} {
  func.func @_linear_kernel(%arg0: i32, %arg1: memref<16x32xf32, #tpu.memory_space<vmem>>, %arg2: memref<32x96xbf16, #tpu.memory_space<vmem>>, %arg3: memref<1x96xf32, #tpu.memory_space<vmem>>, %arg4: memref<16x96xbf16, #tpu.memory_space<vmem>>) attributes {dimension_semantics = [#tpu.dimension_semantics<parallel>], iteration_bounds = array<i64: 1>, scalar_prefetch = 0 : i64, scratch_operands = 0 : i64, tpu.core_type = #tpu.core_type<tc>, window_params = [{transform_indices = @transform_0, window_bounds = array<i64: 16, 32>}, {pipeline_mode = #tpu.pipeline_mode<synchronous>, transform_indices = @transform_1, window_bounds = array<i64: 32, 96>}, {pipeline_mode = #tpu.pipeline_mode<synchronous>, transform_indices = @transform_2, window_bounds = array<i64: 1, 96>}, {transform_indices = @transform_3, window_bounds = array<i64: 16, 96>}]} {
    %c0 = arith.constant 0 : index
    %c0_0 = arith.constant 0 : index
    %0 = vector.load %arg1[%c0, %c0_0] : memref<16x32xf32, #tpu.memory_space<vmem>>, vector<16x32xf32>
    %c0_1 = arith.constant 0 : index
    %c0_2 = arith.constant 0 : index
    %1 = vector.load %arg2[%c0_1, %c0_2] : memref<32x96xbf16, #tpu.memory_space<vmem>>, vector<32x96xbf16>
    %2 = arith.truncf %0 : vector<16x32xf32> to vector<16x32xbf16>
    %cst = arith.constant dense<0.000000e+00> : vector<16x96xf32>
    %3 = tpu.matmul %2, %1, %cst {dimension_numbers = #tpu.dot_dimension_numbers<[1], [0], [0], [1], [0, 0, 1, 1], [], []>} : vector<16x32xbf16>, vector<32x96xbf16>, vector<16x96xf32> -> vector<16x96xf32>
    %c0_3 = arith.constant 0 : index
    %c0_4 = arith.constant 0 : index
    %4 = vector.load %arg3[%c0_3, %c0_4] : memref<1x96xf32, #tpu.memory_space<vmem>>, vector<1x96xf32>
    %5 = vector.broadcast %4 : vector<1x96xf32> to vector<16x96xf32>
    %6 = arith.addf %3, %5 : vector<16x96xf32>
    %7 = arith.truncf %6 : vector<16x96xf32> to vector<16x96xbf16>
    %c0_5 = arith.constant 0 : index
    %c0_6 = arith.constant 0 : index
    %8 = vector.load %arg4[%c0_5, %c0_6] : memref<16x96xbf16, #tpu.memory_space<vmem>>, vector<16x96xbf16>
    tpu.vector_store %arg4[%c0_5, %c0_6], %7 {strides = array<i32>} : memref<16x96xbf16, #tpu.memory_space<vmem>>, vector<16x96xbf16>,
    return
  }
  func.func @transform_0(%arg0: i32) -> (i32, i32) {
    %c0_i32 = arith.constant 0 : i32
    %c0_i32_0 = arith.constant 0 : i32
    return %arg0, %c0_i32 : i32, i32
  }
  func.func @transform_1(%arg0: i32) -> (i32, i32) {
    %c0_i32 = arith.constant 0 : i32
    %c0_i32_0 = arith.constant 0 : i32
    %c0_i32_1 = arith.constant 0 : i32
    return %c0_i32, %c0_i32_0 : i32, i32
  }
  func.func @transform_2(%arg0: i32) -> (i32, i32) {
    %c0_i32 = arith.constant 0 : i32
    %c0_i32_0 = arith.constant 0 : i32
    %c0_i32_1 = arith.constant 0 : i32
    return %c0_i32, %c0_i32_0 : i32, i32
  }
  func.func @transform_3(%arg0: i32) -> (i32, i32) {
    %c0_i32 = arith.constant 0 : i32
    %c0_i32_0 = arith.constant 0 : i32
    return %arg0, %c0_i32 : i32, i32
  }
}

module attributes {stable_mosaic.version = 11 : i64} {
  func.func @_proj_residual_ln_kernel(%arg0: i32, %arg1: memref<16x32xbf16, #tpu.memory_space<vmem>>, %arg2: memref<16x32xf32, #tpu.memory_space<vmem>>, %arg3: memref<32x32xbf16, #tpu.memory_space<vmem>>, %arg4: memref<1x32xf32, #tpu.memory_space<vmem>>, %arg5: memref<1x32xf32, #tpu.memory_space<vmem>>, %arg6: memref<1x32xf32, #tpu.memory_space<vmem>>, %arg7: memref<16x32xf32, #tpu.memory_space<vmem>>) attributes {dimension_semantics = [#tpu.dimension_semantics<parallel>], iteration_bounds = array<i64: 1>, scalar_prefetch = 0 : i64, scratch_operands = 0 : i64, tpu.core_type = #tpu.core_type<tc>, window_params = [{transform_indices = @transform_0, window_bounds = array<i64: 16, 32>}, {transform_indices = @transform_1, window_bounds = array<i64: 16, 32>}, {pipeline_mode = #tpu.pipeline_mode<synchronous>, transform_indices = @transform_2, window_bounds = array<i64: 32, 32>}, {pipeline_mode = #tpu.pipeline_mode<synchronous>, transform_indices = @transform_3, window_bounds = array<i64: 1, 32>}, {pipeline_mode = #tpu.pipeline_mode<synchronous>, transform_indices = @transform_4, window_bounds = array<i64: 1, 32>}, {pipeline_mode = #tpu.pipeline_mode<synchronous>, transform_indices = @transform_5, window_bounds = array<i64: 1, 32>}, {transform_indices = @transform_6, window_bounds = array<i64: 16, 32>}]} {
    %c0 = arith.constant 0 : index
    %c0_0 = arith.constant 0 : index
    %0 = vector.load %arg1[%c0, %c0_0] : memref<16x32xbf16, #tpu.memory_space<vmem>>, vector<16x32xbf16>
    %c0_1 = arith.constant 0 : index
    %c0_2 = arith.constant 0 : index
    %1 = vector.load %arg3[%c0_1, %c0_2] : memref<32x32xbf16, #tpu.memory_space<vmem>>, vector<32x32xbf16>
    %cst = arith.constant dense<0.000000e+00> : vector<16x32xf32>
    %2 = tpu.matmul %0, %1, %cst {dimension_numbers = #tpu.dot_dimension_numbers<[1], [0], [0], [1], [0, 0, 1, 1], [], []>} : vector<16x32xbf16>, vector<32x32xbf16>, vector<16x32xf32> -> vector<16x32xf32>
    %c0_3 = arith.constant 0 : index
    %c0_4 = arith.constant 0 : index
    %3 = vector.load %arg4[%c0_3, %c0_4] : memref<1x32xf32, #tpu.memory_space<vmem>>, vector<1x32xf32>
    %4 = vector.broadcast %3 : vector<1x32xf32> to vector<16x32xf32>
    %5 = arith.addf %2, %4 : vector<16x32xf32>
    %c0_5 = arith.constant 0 : index
    %c0_6 = arith.constant 0 : index
    %6 = vector.load %arg2[%c0_5, %c0_6] : memref<16x32xf32, #tpu.memory_space<vmem>>, vector<16x32xf32>
    %7 = arith.addf %5, %6 : vector<16x32xf32>
    %c0_7 = arith.constant 0 : index
    %c0_8 = arith.constant 0 : index
    %8 = vector.load %arg5[%c0_7, %c0_8] : memref<1x32xf32, #tpu.memory_space<vmem>>, vector<1x32xf32>
    %c0_9 = arith.constant 0 : index
    %c0_10 = arith.constant 0 : index
    %9 = vector.load %arg6[%c0_9, %c0_10] : memref<1x32xf32, #tpu.memory_space<vmem>>, vector<1x32xf32>
    %cst_11 = arith.constant dense<0.000000e+00> : vector<16xf32>
    %10 = vector.multi_reduction <add>, %7, %cst_11 [1] : vector<16x32xf32> to vector<16xf32>
    %11 = vector.shape_cast %10 : vector<16xf32> to vector<16x1xf32>
    %cst_12 = arith.constant 3.200000e+01 : f32
    %12 = vector.broadcast %cst_12 : f32 to vector<16x1xf32>
    %13 = arith.divf %11, %12 : vector<16x1xf32>
    %14 = vector.broadcast %13 : vector<16x1xf32> to vector<16x32xf32>
    %15 = arith.subf %7, %14 : vector<16x32xf32>
    %16 = arith.mulf %15, %15 : vector<16x32xf32>
    %cst_13 = arith.constant dense<0.000000e+00> : vector<16xf32>
    %17 = vector.multi_reduction <add>, %16, %cst_13 [1] : vector<16x32xf32> to vector<16xf32>
    %18 = vector.shape_cast %17 : vector<16xf32> to vector<16x1xf32>
    %cst_14 = arith.constant 3.200000e+01 : f32
    %19 = vector.broadcast %cst_14 : f32 to vector<16x1xf32>
    %20 = arith.divf %18, %19 : vector<16x1xf32>
    %cst_15 = arith.constant 9.99999996E-13 : f32
    %21 = vector.broadcast %cst_15 : f32 to vector<16x1xf32>
    %22 = arith.addf %20, %21 : vector<16x1xf32>
    %23 = math.rsqrt %22 : vector<16x1xf32>
    %24 = vector.broadcast %23 : vector<16x1xf32> to vector<16x32xf32>
    %25 = arith.mulf %15, %24 : vector<16x32xf32>
    %26 = vector.broadcast %8 : vector<1x32xf32> to vector<16x32xf32>
    %27 = arith.mulf %25, %26 : vector<16x32xf32>
    %28 = vector.broadcast %9 : vector<1x32xf32> to vector<16x32xf32>
    %29 = arith.addf %27, %28 : vector<16x32xf32>
    %c0_16 = arith.constant 0 : index
    %c0_17 = arith.constant 0 : index
    %30 = vector.load %arg7[%c0_16, %c0_17] : memref<16x32xf32, #tpu.memory_space<vmem>>, vector<16x32xf32>
    tpu.vector_store %arg7[%c0_16, %c0_17], %29 {strides = array<i32>} : memref<16x32xf32, #tpu.memory_space<vmem>>, vector<16x32xf32>,
    return
  }
  func.func @transform_0(%arg0: i32) -> (i32, i32) {
    %c0_i32 = arith.constant 0 : i32
    %c0_i32_0 = arith.constant 0 : i32
    return %arg0, %c0_i32 : i32, i32
  }
  func.func @transform_1(%arg0: i32) -> (i32, i32) {
    %c0_i32 = arith.constant 0 : i32
    %c0_i32_0 = arith.constant 0 : i32
    return %arg0, %c0_i32 : i32, i32
  }
  func.func @transform_2(%arg0: i32) -> (i32, i32) {
    %c0_i32 = arith.constant 0 : i32
    %c0_i32_0 = arith.constant 0 : i32
    %c0_i32_1 = arith.constant 0 : i32
    return %c0_i32, %c0_i32_0 : i32, i32
  }
  func.func @transform_3(%arg0: i32) -> (i32, i32) {
    %c0_i32 = arith.constant 0 : i32
    %c0_i32_0 = arith.constant 0 : i32
    %c0_i32_1 = arith.constant 0 : i32
    return %c0_i32, %c0_i32_0 : i32, i32
  }
  func.func @transform_4(%arg0: i32) -> (i32, i32) {
    %c0_i32 = arith.constant 0 : i32
    %c0_i32_0 = arith.constant 0 : i32
    %c0_i32_1 = arith.constant 0 : i32
    return %c0_i32, %c0_i32_0 : i32, i32
  }
  func.func @transform_5(%arg0: i32) -> (i32, i32) {
    %c0_i32 = arith.constant 0 : i32
    %c0_i32_0 = arith.constant 0 : i32
    %c0_i32_1 = arith.constant 0 : i32
    return %c0_i32, %c0_i32_0 : i32, i32
  }
  func.func @transform_6(%arg0: i32) -> (i32, i32) {
    %c0_i32 = arith.constant 0 : i32
    %c0_i32_0 = arith.constant 0 : i32
    return %arg0, %c0_i32 : i32, i32
  }
}

module attributes {stable_mosaic.version = 11 : i64} {
  func.func @_attn_packed_qkv_kernel(%arg0: i32, %arg1: memref<2x8x96xbf16, #tpu.memory_space<vmem>>, %arg2: memref<2x8x32xbf16, #tpu.memory_space<vmem>>) attributes {dimension_semantics = [#tpu.dimension_semantics<parallel>], iteration_bounds = array<i64: 1>, scalar_prefetch = 0 : i64, scratch_operands = 0 : i64, tpu.core_type = #tpu.core_type<tc>, window_params = [{transform_indices = @transform_0, window_bounds = array<i64: 2, 8, 96>}, {transform_indices = @transform_1, window_bounds = array<i64: 2, 8, 32>}]} {
    %c0 = arith.constant 0 : index
    %c0_0 = arith.constant 0 : index
    %c0_1 = arith.constant 0 : index
    %0 = vector.load %arg1[%c0, %c0_0, %c0_1] : memref<2x8x96xbf16, #tpu.memory_space<vmem>>, vector<2x8x96xbf16>
    %1 = vector.extract_strided_slice %0 {offsets = [0, 0, 0], sizes = [2, 8, 32], strides = [1, 1, 1]} : vector<2x8x96xbf16> to vector<2x8x32xbf16>
    %2 = vector.extract_strided_slice %0 {offsets = [0, 0, 32], sizes = [2, 8, 64], strides = [1, 1, 1]} : vector<2x8x96xbf16> to vector<2x8x64xbf16>
    %3 = vector.extract_strided_slice %2 {offsets = [0, 0, 0], sizes = [2, 8, 32], strides = [1, 1, 1]} : vector<2x8x64xbf16> to vector<2x8x32xbf16>
    %4 = vector.extract_strided_slice %2 {offsets = [0, 0, 32], sizes = [2, 8, 32], strides = [1, 1, 1]} : vector<2x8x64xbf16> to vector<2x8x32xbf16>
    %5 = vector.extract_strided_slice %1 {offsets = [0, 0, 0], sizes = [2, 8, 8], strides = [1, 1, 1]} : vector<2x8x32xbf16> to vector<2x8x8xbf16>
    %6 = vector.extract_strided_slice %3 {offsets = [0, 0, 0], sizes = [2, 8, 8], strides = [1, 1, 1]} : vector<2x8x32xbf16> to vector<2x8x8xbf16>
    "tpu.trace_start"() <{level = 10 : i32, message = "bqd,bkd->bqk"}> : () -> ()
    %cst = arith.constant dense<0.000000e+00> : vector<2x8x8xf32>
    %7 = tpu.matmul %5, %6, %cst {dimension_numbers = #tpu.dot_dimension_numbers<[2], [2], [1], [1], [0, 0, 0, 1, 1, 1], [0], [0]>} : vector<2x8x8xbf16>, vector<2x8x8xbf16>, vector<2x8x8xf32> -> vector<2x8x8xf32>
    "tpu.trace_stop"() : () -> ()
    %cst_2 = arith.constant dense<0xFF800000> : vector<2x8xf32>
    %8 = vector.multi_reduction <maximumf>, %7, %cst_2 [2] : vector<2x8x8xf32> to vector<2x8xf32>
    %9 = vector.shape_cast %8 : vector<2x8xf32> to vector<2x8x1xf32>
    %10 = vector.broadcast %9 : vector<2x8x1xf32> to vector<2x8x8xf32>
    %11 = arith.subf %7, %10 : vector<2x8x8xf32>
    %12 = math.exp %11 : vector<2x8x8xf32>
    %cst_3 = arith.constant dense<0.000000e+00> : vector<2x8xf32>
    %13 = vector.multi_reduction <add>, %12, %cst_3 [2] : vector<2x8x8xf32> to vector<2x8xf32>
    %14 = vector.shape_cast %13 : vector<2x8xf32> to vector<2x8x1xf32>
    %15 = tpu.reciprocal %14 {approx = true} : vector<2x8x1xf32> -> vector<2x8x1xf32>
    %16 = vector.broadcast %15 : vector<2x8x1xf32> to vector<2x8x8xf32>
    %17 = arith.mulf %12, %16 : vector<2x8x8xf32>
    %18 = arith.truncf %17 : vector<2x8x8xf32> to vector<2x8x8xbf16>
    %19 = vector.extract_strided_slice %4 {offsets = [0, 0, 0], sizes = [2, 8, 8], strides = [1, 1, 1]} : vector<2x8x32xbf16> to vector<2x8x8xbf16>
    "tpu.trace_start"() <{level = 10 : i32, message = "bqk,bkd->bqd"}> : () -> ()
    %cst_4 = arith.constant dense<0.000000e+00> : vector<2x8x8xf32>
    %20 = tpu.matmul %18, %19, %cst_4 {dimension_numbers = #tpu.dot_dimension_numbers<[2], [1], [1], [2], [0, 0, 0, 1, 1, 2], [0], [0]>} : vector<2x8x8xbf16>, vector<2x8x8xbf16>, vector<2x8x8xf32> -> vector<2x8x8xf32>
    "tpu.trace_stop"() : () -> ()
    %21 = arith.truncf %20 : vector<2x8x8xf32> to vector<2x8x8xbf16>
    %c0_5 = arith.constant 0 : index
    %c0_6 = arith.constant 0 : index
    %c0_7 = arith.constant 0 : index
    %22 = vector.load %arg2[%c0_5, %c0_6, %c0_7] : memref<2x8x32xbf16, #tpu.memory_space<vmem>>, vector<2x8x8xbf16>
    tpu.vector_store %arg2[%c0_5, %c0_6, %c0_7], %21 {strides = array<i32>} : memref<2x8x32xbf16, #tpu.memory_space<vmem>>, vector<2x8x8xbf16>,
    %23 = vector.extract_strided_slice %1 {offsets = [0, 0, 8], sizes = [2, 8, 8], strides = [1, 1, 1]} : vector<2x8x32xbf16> to vector<2x8x8xbf16>
    %24 = vector.extract_strided_slice %3 {offsets = [0, 0, 8], sizes = [2, 8, 8], strides = [1, 1, 1]} : vector<2x8x32xbf16> to vector<2x8x8xbf16>
    "tpu.trace_start"() <{level = 10 : i32, message = "bqd,bkd->bqk"}> : () -> ()
    %cst_8 = arith.constant dense<0.000000e+00> : vector<2x8x8xf32>
    %25 = tpu.matmul %23, %24, %cst_8 {dimension_numbers = #tpu.dot_dimension_numbers<[2], [2], [1], [1], [0, 0, 0, 1, 1, 1], [0], [0]>} : vector<2x8x8xbf16>, vector<2x8x8xbf16>, vector<2x8x8xf32> -> vector<2x8x8xf32>
    "tpu.trace_stop"() : () -> ()
    %cst_9 = arith.constant dense<0xFF800000> : vector<2x8xf32>
    %26 = vector.multi_reduction <maximumf>, %25, %cst_9 [2] : vector<2x8x8xf32> to vector<2x8xf32>
    %27 = vector.shape_cast %26 : vector<2x8xf32> to vector<2x8x1xf32>
    %28 = vector.broadcast %27 : vector<2x8x1xf32> to vector<2x8x8xf32>
    %29 = arith.subf %25, %28 : vector<2x8x8xf32>
    %30 = math.exp %29 : vector<2x8x8xf32>
    %cst_10 = arith.constant dense<0.000000e+00> : vector<2x8xf32>
    %31 = vector.multi_reduction <add>, %30, %cst_10 [2] : vector<2x8x8xf32> to vector<2x8xf32>
    %32 = vector.shape_cast %31 : vector<2x8xf32> to vector<2x8x1xf32>
    %33 = tpu.reciprocal %32 {approx = true} : vector<2x8x1xf32> -> vector<2x8x1xf32>
    %34 = vector.broadcast %33 : vector<2x8x1xf32> to vector<2x8x8xf32>
    %35 = arith.mulf %30, %34 : vector<2x8x8xf32>
    %36 = arith.truncf %35 : vector<2x8x8xf32> to vector<2x8x8xbf16>
    %37 = vector.extract_strided_slice %4 {offsets = [0, 0, 8], sizes = [2, 8, 8], strides = [1, 1, 1]} : vector<2x8x32xbf16> to vector<2x8x8xbf16>
    "tpu.trace_start"() <{level = 10 : i32, message = "bqk,bkd->bqd"}> : () -> ()
    %cst_11 = arith.constant dense<0.000000e+00> : vector<2x8x8xf32>
    %38 = tpu.matmul %36, %37, %cst_11 {dimension_numbers = #tpu.dot_dimension_numbers<[2], [1], [1], [2], [0, 0, 0, 1, 1, 2], [0], [0]>} : vector<2x8x8xbf16>, vector<2x8x8xbf16>, vector<2x8x8xf32> -> vector<2x8x8xf32>
    "tpu.trace_stop"() : () -> ()
    %39 = arith.truncf %38 : vector<2x8x8xf32> to vector<2x8x8xbf16>
    %c0_12 = arith.constant 0 : index
    %c0_13 = arith.constant 0 : index
    %c8 = arith.constant 8 : index
    %40 = vector.load %arg2[%c0_12, %c0_13, %c8] : memref<2x8x32xbf16, #tpu.memory_space<vmem>>, vector<2x8x8xbf16>
    tpu.vector_store %arg2[%c0_12, %c0_13, %c8], %39 {strides = array<i32>} : memref<2x8x32xbf16, #tpu.memory_space<vmem>>, vector<2x8x8xbf16>,
    %41 = vector.extract_strided_slice %1 {offsets = [0, 0, 16], sizes = [2, 8, 8], strides = [1, 1, 1]} : vector<2x8x32xbf16> to vector<2x8x8xbf16>
    %42 = vector.extract_strided_slice %3 {offsets = [0, 0, 16], sizes = [2, 8, 8], strides = [1, 1, 1]} : vector<2x8x32xbf16> to vector<2x8x8xbf16>
    "tpu.trace_start"() <{level = 10 : i32, message = "bqd,bkd->bqk"}> : () -> ()
    %cst_14 = arith.constant dense<0.000000e+00> : vector<2x8x8xf32>
    %43 = tpu.matmul %41, %42, %cst_14 {dimension_numbers = #tpu.dot_dimension_numbers<[2], [2], [1], [1], [0, 0, 0, 1, 1, 1], [0], [0]>} : vector<2x8x8xbf16>, vector<2x8x8xbf16>, vector<2x8x8xf32> -> vector<2x8x8xf32>
    "tpu.trace_stop"() : () -> ()
    %cst_15 = arith.constant dense<0xFF800000> : vector<2x8xf32>
    %44 = vector.multi_reduction <maximumf>, %43, %cst_15 [2] : vector<2x8x8xf32> to vector<2x8xf32>
    %45 = vector.shape_cast %44 : vector<2x8xf32> to vector<2x8x1xf32>
    %46 = vector.broadcast %45 : vector<2x8x1xf32> to vector<2x8x8xf32>
    %47 = arith.subf %43, %46 : vector<2x8x8xf32>
    %48 = math.exp %47 : vector<2x8x8xf32>
    %cst_16 = arith.constant dense<0.000000e+00> : vector<2x8xf32>
    %49 = vector.multi_reduction <add>, %48, %cst_16 [2] : vector<2x8x8xf32> to vector<2x8xf32>
    %50 = vector.shape_cast %49 : vector<2x8xf32> to vector<2x8x1xf32>
    %51 = tpu.reciprocal %50 {approx = true} : vector<2x8x1xf32> -> vector<2x8x1xf32>
    %52 = vector.broadcast %51 : vector<2x8x1xf32> to vector<2x8x8xf32>
    %53 = arith.mulf %48, %52 : vector<2x8x8xf32>
    %54 = arith.truncf %53 : vector<2x8x8xf32> to vector<2x8x8xbf16>
    %55 = vector.extract_strided_slice %4 {offsets = [0, 0, 16], sizes = [2, 8, 8], strides = [1, 1, 1]} : vector<2x8x32xbf16> to vector<2x8x8xbf16>
    "tpu.trace_start"() <{level = 10 : i32, message = "bqk,bkd->bqd"}> : () -> ()
    %cst_17 = arith.constant dense<0.000000e+00> : vector<2x8x8xf32>
    %56 = tpu.matmul %54, %55, %cst_17 {dimension_numbers = #tpu.dot_dimension_numbers<[2], [1], [1], [2], [0, 0, 0, 1, 1, 2], [0], [0]>} : vector<2x8x8xbf16>, vector<2x8x8xbf16>, vector<2x8x8xf32> -> vector<2x8x8xf32>
    "tpu.trace_stop"() : () -> ()
    %57 = arith.truncf %56 : vector<2x8x8xf32> to vector<2x8x8xbf16>
    %c0_18 = arith.constant 0 : index
    %c0_19 = arith.constant 0 : index
    %c16 = arith.constant 16 : index
    %58 = vector.load %arg2[%c0_18, %c0_19, %c16] : memref<2x8x32xbf16, #tpu.memory_space<vmem>>, vector<2x8x8xbf16>
    tpu.vector_store %arg2[%c0_18, %c0_19, %c16], %57 {strides = array<i32>} : memref<2x8x32xbf16, #tpu.memory_space<vmem>>, vector<2x8x8xbf16>,
    %59 = vector.extract_strided_slice %1 {offsets = [0, 0, 24], sizes = [2, 8, 8], strides = [1, 1, 1]} : vector<2x8x32xbf16> to vector<2x8x8xbf16>
    %60 = vector.extract_strided_slice %3 {offsets = [0, 0, 24], sizes = [2, 8, 8], strides = [1, 1, 1]} : vector<2x8x32xbf16> to vector<2x8x8xbf16>
    "tpu.trace_start"() <{level = 10 : i32, message = "bqd,bkd->bqk"}> : () -> ()
    %cst_20 = arith.constant dense<0.000000e+00> : vector<2x8x8xf32>
    %61 = tpu.matmul %59, %60, %cst_20 {dimension_numbers = #tpu.dot_dimension_numbers<[2], [2], [1], [1], [0, 0, 0, 1, 1, 1], [0], [0]>} : vector<2x8x8xbf16>, vector<2x8x8xbf16>, vector<2x8x8xf32> -> vector<2x8x8xf32>
    "tpu.trace_stop"() : () -> ()
    %cst_21 = arith.constant dense<0xFF800000> : vector<2x8xf32>
    %62 = vector.multi_reduction <maximumf>, %61, %cst_21 [2] : vector<2x8x8xf32> to vector<2x8xf32>
    %63 = vector.shape_cast %62 : vector<2x8xf32> to vector<2x8x1xf32>
    %64 = vector.broadcast %63 : vector<2x8x1xf32> to vector<2x8x8xf32>
    %65 = arith.subf %61, %64 : vector<2x8x8xf32>
    %66 = math.exp %65 : vector<2x8x8xf32>
    %cst_22 = arith.constant dense<0.000000e+00> : vector<2x8xf32>
    %67 = vector.multi_reduction <add>, %66, %cst_22 [2] : vector<2x8x8xf32> to vector<2x8xf32>
    %68 = vector.shape_cast %67 : vector<2x8xf32> to vector<2x8x1xf32>
    %69 = tpu.reciprocal %68 {approx = true} : vector<2x8x1xf32> -> vector<2x8x1xf32>
    %70 = vector.broadcast %69 : vector<2x8x1xf32> to vector<2x8x8xf32>
    %71 = arith.mulf %66, %70 : vector<2x8x8xf32>
    %72 = arith.truncf %71 : vector<2x8x8xf32> to vector<2x8x8xbf16>
    %73 = vector.extract_strided_slice %4 {offsets = [0, 0, 24], sizes = [2, 8, 8], strides = [1, 1, 1]} : vector<2x8x32xbf16> to vector<2x8x8xbf16>
    "tpu.trace_start"() <{level = 10 : i32, message = "bqk,bkd->bqd"}> : () -> ()
    %cst_23 = arith.constant dense<0.000000e+00> : vector<2x8x8xf32>
    %74 = tpu.matmul %72, %73, %cst_23 {dimension_numbers = #tpu.dot_dimension_numbers<[2], [1], [1], [2], [0, 0, 0, 1, 1, 2], [0], [0]>} : vector<2x8x8xbf16>, vector<2x8x8xbf16>, vector<2x8x8xf32> -> vector<2x8x8xf32>
    "tpu.trace_stop"() : () -> ()
    %75 = arith.truncf %74 : vector<2x8x8xf32> to vector<2x8x8xbf16>
    %c0_24 = arith.constant 0 : index
    %c0_25 = arith.constant 0 : index
    %c24 = arith.constant 24 : index
    %76 = vector.load %arg2[%c0_24, %c0_25, %c24] : memref<2x8x32xbf16, #tpu.memory_space<vmem>>, vector<2x8x8xbf16>
    tpu.vector_store %arg2[%c0_24, %c0_25, %c24], %75 {strides = array<i32>} : memref<2x8x32xbf16, #tpu.memory_space<vmem>>, vector<2x8x8xbf16>,
    return
  }
  func.func @transform_0(%arg0: i32) -> (i32, i32, i32) {
    %c0_i32 = arith.constant 0 : i32
    %c0_i32_0 = arith.constant 0 : i32
    %c0_i32_1 = arith.constant 0 : i32
    return %arg0, %c0_i32, %c0_i32_0 : i32, i32, i32
  }
  func.func @transform_1(%arg0: i32) -> (i32, i32, i32) {
    %c0_i32 = arith.constant 0 : i32
    %c0_i32_0 = arith.constant 0 : i32
    %c0_i32_1 = arith.constant 0 : i32
    return %arg0, %c0_i32, %c0_i32_0 : i32, i32, i32
  }
}

module attributes {stable_mosaic.version = 11 : i64} {
  func.func @_linear_kernel(%arg0: i32, %arg1: memref<16x32xf32, #tpu.memory_space<vmem>>, %arg2: memref<32x32xbf16, #tpu.memory_space<vmem>>, %arg3: memref<1x32xf32, #tpu.memory_space<vmem>>, %arg4: memref<16x32xbf16, #tpu.memory_space<vmem>>) attributes {dimension_semantics = [#tpu.dimension_semantics<parallel>], iteration_bounds = array<i64: 1>, scalar_prefetch = 0 : i64, scratch_operands = 0 : i64, tpu.core_type = #tpu.core_type<tc>, window_params = [{transform_indices = @transform_0, window_bounds = array<i64: 16, 32>}, {pipeline_mode = #tpu.pipeline_mode<synchronous>, transform_indices = @transform_1, window_bounds = array<i64: 32, 32>}, {pipeline_mode = #tpu.pipeline_mode<synchronous>, transform_indices = @transform_2, window_bounds = array<i64: 1, 32>}, {transform_indices = @transform_3, window_bounds = array<i64: 16, 32>}]} {
    %c0 = arith.constant 0 : index
    %c0_0 = arith.constant 0 : index
    %0 = vector.load %arg1[%c0, %c0_0] : memref<16x32xf32, #tpu.memory_space<vmem>>, vector<16x32xf32>
    %c0_1 = arith.constant 0 : index
    %c0_2 = arith.constant 0 : index
    %1 = vector.load %arg2[%c0_1, %c0_2] : memref<32x32xbf16, #tpu.memory_space<vmem>>, vector<32x32xbf16>
    %2 = arith.truncf %0 : vector<16x32xf32> to vector<16x32xbf16>
    %cst = arith.constant dense<0.000000e+00> : vector<16x32xf32>
    %3 = tpu.matmul %2, %1, %cst {dimension_numbers = #tpu.dot_dimension_numbers<[1], [0], [0], [1], [0, 0, 1, 1], [], []>} : vector<16x32xbf16>, vector<32x32xbf16>, vector<16x32xf32> -> vector<16x32xf32>
    %c0_3 = arith.constant 0 : index
    %c0_4 = arith.constant 0 : index
    %4 = vector.load %arg3[%c0_3, %c0_4] : memref<1x32xf32, #tpu.memory_space<vmem>>, vector<1x32xf32>
    %5 = vector.broadcast %4 : vector<1x32xf32> to vector<16x32xf32>
    %6 = arith.addf %3, %5 : vector<16x32xf32>
    %7 = arith.truncf %6 : vector<16x32xf32> to vector<16x32xbf16>
    %c0_5 = arith.constant 0 : index
    %c0_6 = arith.constant 0 : index
    %8 = vector.load %arg4[%c0_5, %c0_6] : memref<16x32xbf16, #tpu.memory_space<vmem>>, vector<16x32xbf16>
    tpu.vector_store %arg4[%c0_5, %c0_6], %7 {strides = array<i32>} : memref<16x32xbf16, #tpu.memory_space<vmem>>, vector<16x32xbf16>,
    return
  }
  func.func @transform_0(%arg0: i32) -> (i32, i32) {
    %c0_i32 = arith.constant 0 : i32
    %c0_i32_0 = arith.constant 0 : i32
    return %arg0, %c0_i32 : i32, i32
  }
  func.func @transform_1(%arg0: i32) -> (i32, i32) {
    %c0_i32 = arith.constant 0 : i32
    %c0_i32_0 = arith.constant 0 : i32
    %c0_i32_1 = arith.constant 0 : i32
    return %c0_i32, %c0_i32_0 : i32, i32
  }
  func.func @transform_2(%arg0: i32) -> (i32, i32) {
    %c0_i32 = arith.constant 0 : i32
    %c0_i32_0 = arith.constant 0 : i32
    %c0_i32_1 = arith.constant 0 : i32
    return %c0_i32, %c0_i32_0 : i32, i32
  }
  func.func @transform_3(%arg0: i32) -> (i32, i32) {
    %c0_i32 = arith.constant 0 : i32
    %c0_i32_0 = arith.constant 0 : i32
    return %arg0, %c0_i32 : i32, i32
  }
}

module attributes {stable_mosaic.version = 11 : i64} {
  func.func @_attn_kernel(%arg0: i32, %arg1: memref<2x8x32xbf16, #tpu.memory_space<vmem>>, %arg2: memref<2x8x64xbf16, #tpu.memory_space<vmem>>, %arg3: memref<2x8x32xbf16, #tpu.memory_space<vmem>>) attributes {dimension_semantics = [#tpu.dimension_semantics<parallel>], iteration_bounds = array<i64: 1>, scalar_prefetch = 0 : i64, scratch_operands = 0 : i64, tpu.core_type = #tpu.core_type<tc>, window_params = [{transform_indices = @transform_0, window_bounds = array<i64: 2, 8, 32>}, {transform_indices = @transform_1, window_bounds = array<i64: 2, 8, 64>}, {transform_indices = @transform_2, window_bounds = array<i64: 2, 8, 32>}]} {
    %c0 = arith.constant 0 : index
    %c0_0 = arith.constant 0 : index
    %c0_1 = arith.constant 0 : index
    %0 = vector.load %arg1[%c0, %c0_0, %c0_1] : memref<2x8x32xbf16, #tpu.memory_space<vmem>>, vector<2x8x32xbf16>
    %c0_2 = arith.constant 0 : index
    %c0_3 = arith.constant 0 : index
    %c0_4 = arith.constant 0 : index
    %1 = vector.load %arg2[%c0_2, %c0_3, %c0_4] : memref<2x8x64xbf16, #tpu.memory_space<vmem>>, vector<2x8x64xbf16>
    %2 = vector.extract_strided_slice %1 {offsets = [0, 0, 0], sizes = [2, 8, 32], strides = [1, 1, 1]} : vector<2x8x64xbf16> to vector<2x8x32xbf16>
    %3 = vector.extract_strided_slice %1 {offsets = [0, 0, 32], sizes = [2, 8, 32], strides = [1, 1, 1]} : vector<2x8x64xbf16> to vector<2x8x32xbf16>
    %4 = vector.extract_strided_slice %0 {offsets = [0, 0, 0], sizes = [2, 8, 8], strides = [1, 1, 1]} : vector<2x8x32xbf16> to vector<2x8x8xbf16>
    %5 = vector.extract_strided_slice %2 {offsets = [0, 0, 0], sizes = [2, 8, 8], strides = [1, 1, 1]} : vector<2x8x32xbf16> to vector<2x8x8xbf16>
    "tpu.trace_start"() <{level = 10 : i32, message = "bqd,bkd->bqk"}> : () -> ()
    %cst = arith.constant dense<0.000000e+00> : vector<2x8x8xf32>
    %6 = tpu.matmul %4, %5, %cst {dimension_numbers = #tpu.dot_dimension_numbers<[2], [2], [1], [1], [0, 0, 0, 1, 1, 1], [0], [0]>} : vector<2x8x8xbf16>, vector<2x8x8xbf16>, vector<2x8x8xf32> -> vector<2x8x8xf32>
    "tpu.trace_stop"() : () -> ()
    %cst_5 = arith.constant dense<0xFF800000> : vector<2x8xf32>
    %7 = vector.multi_reduction <maximumf>, %6, %cst_5 [2] : vector<2x8x8xf32> to vector<2x8xf32>
    %8 = vector.shape_cast %7 : vector<2x8xf32> to vector<2x8x1xf32>
    %9 = vector.broadcast %8 : vector<2x8x1xf32> to vector<2x8x8xf32>
    %10 = arith.subf %6, %9 : vector<2x8x8xf32>
    %11 = math.exp %10 : vector<2x8x8xf32>
    %cst_6 = arith.constant dense<0.000000e+00> : vector<2x8xf32>
    %12 = vector.multi_reduction <add>, %11, %cst_6 [2] : vector<2x8x8xf32> to vector<2x8xf32>
    %13 = vector.shape_cast %12 : vector<2x8xf32> to vector<2x8x1xf32>
    %14 = tpu.reciprocal %13 {approx = true} : vector<2x8x1xf32> -> vector<2x8x1xf32>
    %15 = vector.broadcast %14 : vector<2x8x1xf32> to vector<2x8x8xf32>
    %16 = arith.mulf %11, %15 : vector<2x8x8xf32>
    %17 = arith.truncf %16 : vector<2x8x8xf32> to vector<2x8x8xbf16>
    %18 = vector.extract_strided_slice %3 {offsets = [0, 0, 0], sizes = [2, 8, 8], strides = [1, 1, 1]} : vector<2x8x32xbf16> to vector<2x8x8xbf16>
    "tpu.trace_start"() <{level = 10 : i32, message = "bqk,bkd->bqd"}> : () -> ()
    %cst_7 = arith.constant dense<0.000000e+00> : vector<2x8x8xf32>
    %19 = tpu.matmul %17, %18, %cst_7 {dimension_numbers = #tpu.dot_dimension_numbers<[2], [1], [1], [2], [0, 0, 0, 1, 1, 2], [0], [0]>} : vector<2x8x8xbf16>, vector<2x8x8xbf16>, vector<2x8x8xf32> -> vector<2x8x8xf32>
    "tpu.trace_stop"() : () -> ()
    %20 = arith.truncf %19 : vector<2x8x8xf32> to vector<2x8x8xbf16>
    %c0_8 = arith.constant 0 : index
    %c0_9 = arith.constant 0 : index
    %c0_10 = arith.constant 0 : index
    %21 = vector.load %arg3[%c0_8, %c0_9, %c0_10] : memref<2x8x32xbf16, #tpu.memory_space<vmem>>, vector<2x8x8xbf16>
    tpu.vector_store %arg3[%c0_8, %c0_9, %c0_10], %20 {strides = array<i32>} : memref<2x8x32xbf16, #tpu.memory_space<vmem>>, vector<2x8x8xbf16>,
    %22 = vector.extract_strided_slice %0 {offsets = [0, 0, 8], sizes = [2, 8, 8], strides = [1, 1, 1]} : vector<2x8x32xbf16> to vector<2x8x8xbf16>
    %23 = vector.extract_strided_slice %2 {offsets = [0, 0, 8], sizes = [2, 8, 8], strides = [1, 1, 1]} : vector<2x8x32xbf16> to vector<2x8x8xbf16>
    "tpu.trace_start"() <{level = 10 : i32, message = "bqd,bkd->bqk"}> : () -> ()
    %cst_11 = arith.constant dense<0.000000e+00> : vector<2x8x8xf32>
    %24 = tpu.matmul %22, %23, %cst_11 {dimension_numbers = #tpu.dot_dimension_numbers<[2], [2], [1], [1], [0, 0, 0, 1, 1, 1], [0], [0]>} : vector<2x8x8xbf16>, vector<2x8x8xbf16>, vector<2x8x8xf32> -> vector<2x8x8xf32>
    "tpu.trace_stop"() : () -> ()
    %cst_12 = arith.constant dense<0xFF800000> : vector<2x8xf32>
    %25 = vector.multi_reduction <maximumf>, %24, %cst_12 [2] : vector<2x8x8xf32> to vector<2x8xf32>
    %26 = vector.shape_cast %25 : vector<2x8xf32> to vector<2x8x1xf32>
    %27 = vector.broadcast %26 : vector<2x8x1xf32> to vector<2x8x8xf32>
    %28 = arith.subf %24, %27 : vector<2x8x8xf32>
    %29 = math.exp %28 : vector<2x8x8xf32>
    %cst_13 = arith.constant dense<0.000000e+00> : vector<2x8xf32>
    %30 = vector.multi_reduction <add>, %29, %cst_13 [2] : vector<2x8x8xf32> to vector<2x8xf32>
    %31 = vector.shape_cast %30 : vector<2x8xf32> to vector<2x8x1xf32>
    %32 = tpu.reciprocal %31 {approx = true} : vector<2x8x1xf32> -> vector<2x8x1xf32>
    %33 = vector.broadcast %32 : vector<2x8x1xf32> to vector<2x8x8xf32>
    %34 = arith.mulf %29, %33 : vector<2x8x8xf32>
    %35 = arith.truncf %34 : vector<2x8x8xf32> to vector<2x8x8xbf16>
    %36 = vector.extract_strided_slice %3 {offsets = [0, 0, 8], sizes = [2, 8, 8], strides = [1, 1, 1]} : vector<2x8x32xbf16> to vector<2x8x8xbf16>
    "tpu.trace_start"() <{level = 10 : i32, message = "bqk,bkd->bqd"}> : () -> ()
    %cst_14 = arith.constant dense<0.000000e+00> : vector<2x8x8xf32>
    %37 = tpu.matmul %35, %36, %cst_14 {dimension_numbers = #tpu.dot_dimension_numbers<[2], [1], [1], [2], [0, 0, 0, 1, 1, 2], [0], [0]>} : vector<2x8x8xbf16>, vector<2x8x8xbf16>, vector<2x8x8xf32> -> vector<2x8x8xf32>
    "tpu.trace_stop"() : () -> ()
    %38 = arith.truncf %37 : vector<2x8x8xf32> to vector<2x8x8xbf16>
    %c0_15 = arith.constant 0 : index
    %c0_16 = arith.constant 0 : index
    %c8 = arith.constant 8 : index
    %39 = vector.load %arg3[%c0_15, %c0_16, %c8] : memref<2x8x32xbf16, #tpu.memory_space<vmem>>, vector<2x8x8xbf16>
    tpu.vector_store %arg3[%c0_15, %c0_16, %c8], %38 {strides = array<i32>} : memref<2x8x32xbf16, #tpu.memory_space<vmem>>, vector<2x8x8xbf16>,
    %40 = vector.extract_strided_slice %0 {offsets = [0, 0, 16], sizes = [2, 8, 8], strides = [1, 1, 1]} : vector<2x8x32xbf16> to vector<2x8x8xbf16>
    %41 = vector.extract_strided_slice %2 {offsets = [0, 0, 16], sizes = [2, 8, 8], strides = [1, 1, 1]} : vector<2x8x32xbf16> to vector<2x8x8xbf16>
    "tpu.trace_start"() <{level = 10 : i32, message = "bqd,bkd->bqk"}> : () -> ()
    %cst_17 = arith.constant dense<0.000000e+00> : vector<2x8x8xf32>
    %42 = tpu.matmul %40, %41, %cst_17 {dimension_numbers = #tpu.dot_dimension_numbers<[2], [2], [1], [1], [0, 0, 0, 1, 1, 1], [0], [0]>} : vector<2x8x8xbf16>, vector<2x8x8xbf16>, vector<2x8x8xf32> -> vector<2x8x8xf32>
    "tpu.trace_stop"() : () -> ()
    %cst_18 = arith.constant dense<0xFF800000> : vector<2x8xf32>
    %43 = vector.multi_reduction <maximumf>, %42, %cst_18 [2] : vector<2x8x8xf32> to vector<2x8xf32>
    %44 = vector.shape_cast %43 : vector<2x8xf32> to vector<2x8x1xf32>
    %45 = vector.broadcast %44 : vector<2x8x1xf32> to vector<2x8x8xf32>
    %46 = arith.subf %42, %45 : vector<2x8x8xf32>
    %47 = math.exp %46 : vector<2x8x8xf32>
    %cst_19 = arith.constant dense<0.000000e+00> : vector<2x8xf32>
    %48 = vector.multi_reduction <add>, %47, %cst_19 [2] : vector<2x8x8xf32> to vector<2x8xf32>
    %49 = vector.shape_cast %48 : vector<2x8xf32> to vector<2x8x1xf32>
    %50 = tpu.reciprocal %49 {approx = true} : vector<2x8x1xf32> -> vector<2x8x1xf32>
    %51 = vector.broadcast %50 : vector<2x8x1xf32> to vector<2x8x8xf32>
    %52 = arith.mulf %47, %51 : vector<2x8x8xf32>
    %53 = arith.truncf %52 : vector<2x8x8xf32> to vector<2x8x8xbf16>
    %54 = vector.extract_strided_slice %3 {offsets = [0, 0, 16], sizes = [2, 8, 8], strides = [1, 1, 1]} : vector<2x8x32xbf16> to vector<2x8x8xbf16>
    "tpu.trace_start"() <{level = 10 : i32, message = "bqk,bkd->bqd"}> : () -> ()
    %cst_20 = arith.constant dense<0.000000e+00> : vector<2x8x8xf32>
    %55 = tpu.matmul %53, %54, %cst_20 {dimension_numbers = #tpu.dot_dimension_numbers<[2], [1], [1], [2], [0, 0, 0, 1, 1, 2], [0], [0]>} : vector<2x8x8xbf16>, vector<2x8x8xbf16>, vector<2x8x8xf32> -> vector<2x8x8xf32>
    "tpu.trace_stop"() : () -> ()
    %56 = arith.truncf %55 : vector<2x8x8xf32> to vector<2x8x8xbf16>
    %c0_21 = arith.constant 0 : index
    %c0_22 = arith.constant 0 : index
    %c16 = arith.constant 16 : index
    %57 = vector.load %arg3[%c0_21, %c0_22, %c16] : memref<2x8x32xbf16, #tpu.memory_space<vmem>>, vector<2x8x8xbf16>
    tpu.vector_store %arg3[%c0_21, %c0_22, %c16], %56 {strides = array<i32>} : memref<2x8x32xbf16, #tpu.memory_space<vmem>>, vector<2x8x8xbf16>,
    %58 = vector.extract_strided_slice %0 {offsets = [0, 0, 24], sizes = [2, 8, 8], strides = [1, 1, 1]} : vector<2x8x32xbf16> to vector<2x8x8xbf16>
    %59 = vector.extract_strided_slice %2 {offsets = [0, 0, 24], sizes = [2, 8, 8], strides = [1, 1, 1]} : vector<2x8x32xbf16> to vector<2x8x8xbf16>
    "tpu.trace_start"() <{level = 10 : i32, message = "bqd,bkd->bqk"}> : () -> ()
    %cst_23 = arith.constant dense<0.000000e+00> : vector<2x8x8xf32>
    %60 = tpu.matmul %58, %59, %cst_23 {dimension_numbers = #tpu.dot_dimension_numbers<[2], [2], [1], [1], [0, 0, 0, 1, 1, 1], [0], [0]>} : vector<2x8x8xbf16>, vector<2x8x8xbf16>, vector<2x8x8xf32> -> vector<2x8x8xf32>
    "tpu.trace_stop"() : () -> ()
    %cst_24 = arith.constant dense<0xFF800000> : vector<2x8xf32>
    %61 = vector.multi_reduction <maximumf>, %60, %cst_24 [2] : vector<2x8x8xf32> to vector<2x8xf32>
    %62 = vector.shape_cast %61 : vector<2x8xf32> to vector<2x8x1xf32>
    %63 = vector.broadcast %62 : vector<2x8x1xf32> to vector<2x8x8xf32>
    %64 = arith.subf %60, %63 : vector<2x8x8xf32>
    %65 = math.exp %64 : vector<2x8x8xf32>
    %cst_25 = arith.constant dense<0.000000e+00> : vector<2x8xf32>
    %66 = vector.multi_reduction <add>, %65, %cst_25 [2] : vector<2x8x8xf32> to vector<2x8xf32>
    %67 = vector.shape_cast %66 : vector<2x8xf32> to vector<2x8x1xf32>
    %68 = tpu.reciprocal %67 {approx = true} : vector<2x8x1xf32> -> vector<2x8x1xf32>
    %69 = vector.broadcast %68 : vector<2x8x1xf32> to vector<2x8x8xf32>
    %70 = arith.mulf %65, %69 : vector<2x8x8xf32>
    %71 = arith.truncf %70 : vector<2x8x8xf32> to vector<2x8x8xbf16>
    %72 = vector.extract_strided_slice %3 {offsets = [0, 0, 24], sizes = [2, 8, 8], strides = [1, 1, 1]} : vector<2x8x32xbf16> to vector<2x8x8xbf16>
    "tpu.trace_start"() <{level = 10 : i32, message = "bqk,bkd->bqd"}> : () -> ()
    %cst_26 = arith.constant dense<0.000000e+00> : vector<2x8x8xf32>
    %73 = tpu.matmul %71, %72, %cst_26 {dimension_numbers = #tpu.dot_dimension_numbers<[2], [1], [1], [2], [0, 0, 0, 1, 1, 2], [0], [0]>} : vector<2x8x8xbf16>, vector<2x8x8xbf16>, vector<2x8x8xf32> -> vector<2x8x8xf32>
    "tpu.trace_stop"() : () -> ()
    %74 = arith.truncf %73 : vector<2x8x8xf32> to vector<2x8x8xbf16>
    %c0_27 = arith.constant 0 : index
    %c0_28 = arith.constant 0 : index
    %c24 = arith.constant 24 : index
    %75 = vector.load %arg3[%c0_27, %c0_28, %c24] : memref<2x8x32xbf16, #tpu.memory_space<vmem>>, vector<2x8x8xbf16>
    tpu.vector_store %arg3[%c0_27, %c0_28, %c24], %74 {strides = array<i32>} : memref<2x8x32xbf16, #tpu.memory_space<vmem>>, vector<2x8x8xbf16>,
    return
  }
  func.func @transform_0(%arg0: i32) -> (i32, i32, i32) {
    %c0_i32 = arith.constant 0 : i32
    %c0_i32_0 = arith.constant 0 : i32
    %c0_i32_1 = arith.constant 0 : i32
    return %arg0, %c0_i32, %c0_i32_0 : i32, i32, i32
  }
  func.func @transform_1(%arg0: i32) -> (i32, i32, i32) {
    %c0_i32 = arith.constant 0 : i32
    %c0_i32_0 = arith.constant 0 : i32
    %c0_i32_1 = arith.constant 0 : i32
    return %arg0, %c0_i32, %c0_i32_0 : i32, i32, i32
  }
  func.func @transform_2(%arg0: i32) -> (i32, i32, i32) {
    %c0_i32 = arith.constant 0 : i32
    %c0_i32_0 = arith.constant 0 : i32
    %c0_i32_1 = arith.constant 0 : i32
    return %arg0, %c0_i32, %c0_i32_0 : i32, i32, i32
  }
}

module attributes {stable_mosaic.version = 11 : i64} {
  func.func @_ffn_residual_ln_kernel(%arg0: i32, %arg1: memref<16x32xf32, #tpu.memory_space<vmem>>, %arg2: memref<32x64xbf16, #tpu.memory_space<vmem>>, %arg3: memref<1x64xf32, #tpu.memory_space<vmem>>, %arg4: memref<64x32xbf16, #tpu.memory_space<vmem>>, %arg5: memref<1x32xf32, #tpu.memory_space<vmem>>, %arg6: memref<1x32xf32, #tpu.memory_space<vmem>>, %arg7: memref<1x32xf32, #tpu.memory_space<vmem>>, %arg8: memref<16x32xf32, #tpu.memory_space<vmem>>) attributes {dimension_semantics = [#tpu.dimension_semantics<parallel>], iteration_bounds = array<i64: 1>, scalar_prefetch = 0 : i64, scratch_operands = 0 : i64, tpu.core_type = #tpu.core_type<tc>, window_params = [{transform_indices = @transform_0, window_bounds = array<i64: 16, 32>}, {pipeline_mode = #tpu.pipeline_mode<synchronous>, transform_indices = @transform_1, window_bounds = array<i64: 32, 64>}, {pipeline_mode = #tpu.pipeline_mode<synchronous>, transform_indices = @transform_2, window_bounds = array<i64: 1, 64>}, {pipeline_mode = #tpu.pipeline_mode<synchronous>, transform_indices = @transform_3, window_bounds = array<i64: 64, 32>}, {pipeline_mode = #tpu.pipeline_mode<synchronous>, transform_indices = @transform_4, window_bounds = array<i64: 1, 32>}, {pipeline_mode = #tpu.pipeline_mode<synchronous>, transform_indices = @transform_5, window_bounds = array<i64: 1, 32>}, {pipeline_mode = #tpu.pipeline_mode<synchronous>, transform_indices = @transform_6, window_bounds = array<i64: 1, 32>}, {transform_indices = @transform_7, window_bounds = array<i64: 16, 32>}]} {
    %c0 = arith.constant 0 : index
    %c0_0 = arith.constant 0 : index
    %0 = vector.load %arg1[%c0, %c0_0] : memref<16x32xf32, #tpu.memory_space<vmem>>, vector<16x32xf32>
    %c0_1 = arith.constant 0 : index
    %c0_2 = arith.constant 0 : index
    %1 = vector.load %arg2[%c0_1, %c0_2] : memref<32x64xbf16, #tpu.memory_space<vmem>>, vector<32x64xbf16>
    %2 = arith.truncf %0 : vector<16x32xf32> to vector<16x32xbf16>
    %cst = arith.constant dense<0.000000e+00> : vector<16x64xf32>
    %3 = tpu.matmul %2, %1, %cst {dimension_numbers = #tpu.dot_dimension_numbers<[1], [0], [0], [1], [0, 0, 1, 1], [], []>} : vector<16x32xbf16>, vector<32x64xbf16>, vector<16x64xf32> -> vector<16x64xf32>
    %c0_3 = arith.constant 0 : index
    %c0_4 = arith.constant 0 : index
    %4 = vector.load %arg3[%c0_3, %c0_4] : memref<1x64xf32, #tpu.memory_space<vmem>>, vector<1x64xf32>
    %5 = vector.broadcast %4 : vector<1x64xf32> to vector<16x64xf32>
    %6 = arith.addf %3, %5 : vector<16x64xf32>
    %cst_5 = arith.constant 0.000000e+00 : f32
    %7 = vector.broadcast %cst_5 : f32 to vector<16x64xf32>
    %8 = arith.maximumf %6, %7 : vector<16x64xf32>
    %c0_6 = arith.constant 0 : index
    %c0_7 = arith.constant 0 : index
    %9 = vector.load %arg4[%c0_6, %c0_7] : memref<64x32xbf16, #tpu.memory_space<vmem>>, vector<64x32xbf16>
    %10 = arith.truncf %8 : vector<16x64xf32> to vector<16x64xbf16>
    %cst_8 = arith.constant dense<0.000000e+00> : vector<16x32xf32>
    %11 = tpu.matmul %10, %9, %cst_8 {dimension_numbers = #tpu.dot_dimension_numbers<[1], [0], [0], [1], [0, 0, 1, 1], [], []>} : vector<16x64xbf16>, vector<64x32xbf16>, vector<16x32xf32> -> vector<16x32xf32>
    %c0_9 = arith.constant 0 : index
    %c0_10 = arith.constant 0 : index
    %12 = vector.load %arg5[%c0_9, %c0_10] : memref<1x32xf32, #tpu.memory_space<vmem>>, vector<1x32xf32>
    %13 = vector.broadcast %12 : vector<1x32xf32> to vector<16x32xf32>
    %14 = arith.addf %11, %13 : vector<16x32xf32>
    %15 = arith.addf %14, %0 : vector<16x32xf32>
    %c0_11 = arith.constant 0 : index
    %c0_12 = arith.constant 0 : index
    %16 = vector.load %arg6[%c0_11, %c0_12] : memref<1x32xf32, #tpu.memory_space<vmem>>, vector<1x32xf32>
    %c0_13 = arith.constant 0 : index
    %c0_14 = arith.constant 0 : index
    %17 = vector.load %arg7[%c0_13, %c0_14] : memref<1x32xf32, #tpu.memory_space<vmem>>, vector<1x32xf32>
    %cst_15 = arith.constant dense<0.000000e+00> : vector<16xf32>
    %18 = vector.multi_reduction <add>, %15, %cst_15 [1] : vector<16x32xf32> to vector<16xf32>
    %19 = vector.shape_cast %18 : vector<16xf32> to vector<16x1xf32>
    %cst_16 = arith.constant 3.200000e+01 : f32
    %20 = vector.broadcast %cst_16 : f32 to vector<16x1xf32>
    %21 = arith.divf %19, %20 : vector<16x1xf32>
    %22 = vector.broadcast %21 : vector<16x1xf32> to vector<16x32xf32>
    %23 = arith.subf %15, %22 : vector<16x32xf32>
    %24 = arith.mulf %23, %23 : vector<16x32xf32>
    %cst_17 = arith.constant dense<0.000000e+00> : vector<16xf32>
    %25 = vector.multi_reduction <add>, %24, %cst_17 [1] : vector<16x32xf32> to vector<16xf32>
    %26 = vector.shape_cast %25 : vector<16xf32> to vector<16x1xf32>
    %cst_18 = arith.constant 3.200000e+01 : f32
    %27 = vector.broadcast %cst_18 : f32 to vector<16x1xf32>
    %28 = arith.divf %26, %27 : vector<16x1xf32>
    %cst_19 = arith.constant 9.99999996E-13 : f32
    %29 = vector.broadcast %cst_19 : f32 to vector<16x1xf32>
    %30 = arith.addf %28, %29 : vector<16x1xf32>
    %31 = math.rsqrt %30 : vector<16x1xf32>
    %32 = vector.broadcast %31 : vector<16x1xf32> to vector<16x32xf32>
    %33 = arith.mulf %23, %32 : vector<16x32xf32>
    %34 = vector.broadcast %16 : vector<1x32xf32> to vector<16x32xf32>
    %35 = arith.mulf %33, %34 : vector<16x32xf32>
    %36 = vector.broadcast %17 : vector<1x32xf32> to vector<16x32xf32>
    %37 = arith.addf %35, %36 : vector<16x32xf32>
    %c0_20 = arith.constant 0 : index
    %c0_21 = arith.constant 0 : index
    %38 = vector.load %arg8[%c0_20, %c0_21] : memref<16x32xf32, #tpu.memory_space<vmem>>, vector<16x32xf32>
    tpu.vector_store %arg8[%c0_20, %c0_21], %37 {strides = array<i32>} : memref<16x32xf32, #tpu.memory_space<vmem>>, vector<16x32xf32>,
    return
  }
  func.func @transform_0(%arg0: i32) -> (i32, i32) {
    %c0_i32 = arith.constant 0 : i32
    %c0_i32_0 = arith.constant 0 : i32
    return %arg0, %c0_i32 : i32, i32
  }
  func.func @transform_1(%arg0: i32) -> (i32, i32) {
    %c0_i32 = arith.constant 0 : i32
    %c0_i32_0 = arith.constant 0 : i32
    %c0_i32_1 = arith.constant 0 : i32
    return %c0_i32, %c0_i32_0 : i32, i32
  }
  func.func @transform_2(%arg0: i32) -> (i32, i32) {
    %c0_i32 = arith.constant 0 : i32
    %c0_i32_0 = arith.constant 0 : i32
    %c0_i32_1 = arith.constant 0 : i32
    return %c0_i32, %c0_i32_0 : i32, i32
  }
  func.func @transform_3(%arg0: i32) -> (i32, i32) {
    %c0_i32 = arith.constant 0 : i32
    %c0_i32_0 = arith.constant 0 : i32
    %c0_i32_1 = arith.constant 0 : i32
    return %c0_i32, %c0_i32_0 : i32, i32
  }
  func.func @transform_4(%arg0: i32) -> (i32, i32) {
    %c0_i32 = arith.constant 0 : i32
    %c0_i32_0 = arith.constant 0 : i32
    %c0_i32_1 = arith.constant 0 : i32
    return %c0_i32, %c0_i32_0 : i32, i32
  }
  func.func @transform_5(%arg0: i32) -> (i32, i32) {
    %c0_i32 = arith.constant 0 : i32
    %c0_i32_0 = arith.constant 0 : i32
    %c0_i32_1 = arith.constant 0 : i32
    return %c0_i32, %c0_i32_0 : i32, i32
  }
  func.func @transform_6(%arg0: i32) -> (i32, i32) {
    %c0_i32 = arith.constant 0 : i32
    %c0_i32_0 = arith.constant 0 : i32
    %c0_i32_1 = arith.constant 0 : i32
    return %c0_i32, %c0_i32_0 : i32, i32
  }
  func.func @transform_7(%arg0: i32) -> (i32, i32) {
    %c0_i32 = arith.constant 0 : i32
    %c0_i32_0 = arith.constant 0 : i32
    return %arg0, %c0_i32 : i32, i32
  }
}

module attributes {stable_mosaic.version = 11 : i64} {
  func.func @_linear_kernel(%arg0: i32, %arg1: memref<16x32xf32, #tpu.memory_space<vmem>>, %arg2: memref<32x64xbf16, #tpu.memory_space<vmem>>, %arg3: memref<1x64xf32, #tpu.memory_space<vmem>>, %arg4: memref<16x64xbf16, #tpu.memory_space<vmem>>) attributes {dimension_semantics = [#tpu.dimension_semantics<parallel>], iteration_bounds = array<i64: 1>, scalar_prefetch = 0 : i64, scratch_operands = 0 : i64, tpu.core_type = #tpu.core_type<tc>, window_params = [{transform_indices = @transform_0, window_bounds = array<i64: 16, 32>}, {pipeline_mode = #tpu.pipeline_mode<synchronous>, transform_indices = @transform_1, window_bounds = array<i64: 32, 64>}, {pipeline_mode = #tpu.pipeline_mode<synchronous>, transform_indices = @transform_2, window_bounds = array<i64: 1, 64>}, {transform_indices = @transform_3, window_bounds = array<i64: 16, 64>}]} {
    %c0 = arith.constant 0 : index
    %c0_0 = arith.constant 0 : index
    %0 = vector.load %arg1[%c0, %c0_0] : memref<16x32xf32, #tpu.memory_space<vmem>>, vector<16x32xf32>
    %c0_1 = arith.constant 0 : index
    %c0_2 = arith.constant 0 : index
    %1 = vector.load %arg2[%c0_1, %c0_2] : memref<32x64xbf16, #tpu.memory_space<vmem>>, vector<32x64xbf16>
    %2 = arith.truncf %0 : vector<16x32xf32> to vector<16x32xbf16>
    %cst = arith.constant dense<0.000000e+00> : vector<16x64xf32>
    %3 = tpu.matmul %2, %1, %cst {dimension_numbers = #tpu.dot_dimension_numbers<[1], [0], [0], [1], [0, 0, 1, 1], [], []>} : vector<16x32xbf16>, vector<32x64xbf16>, vector<16x64xf32> -> vector<16x64xf32>
    %c0_3 = arith.constant 0 : index
    %c0_4 = arith.constant 0 : index
    %4 = vector.load %arg3[%c0_3, %c0_4] : memref<1x64xf32, #tpu.memory_space<vmem>>, vector<1x64xf32>
    %5 = vector.broadcast %4 : vector<1x64xf32> to vector<16x64xf32>
    %6 = arith.addf %3, %5 : vector<16x64xf32>
    %7 = arith.truncf %6 : vector<16x64xf32> to vector<16x64xbf16>
    %c0_5 = arith.constant 0 : index
    %c0_6 = arith.constant 0 : index
    %8 = vector.load %arg4[%c0_5, %c0_6] : memref<16x64xbf16, #tpu.memory_space<vmem>>, vector<16x64xbf16>
    tpu.vector_store %arg4[%c0_5, %c0_6], %7 {strides = array<i32>} : memref<16x64xbf16, #tpu.memory_space<vmem>>, vector<16x64xbf16>,
    return
  }
  func.func @transform_0(%arg0: i32) -> (i32, i32) {
    %c0_i32 = arith.constant 0 : i32
    %c0_i32_0 = arith.constant 0 : i32
    return %arg0, %c0_i32 : i32, i32
  }
  func.func @transform_1(%arg0: i32) -> (i32, i32) {
    %c0_i32 = arith.constant 0 : i32
    %c0_i32_0 = arith.constant 0 : i32
    %c0_i32_1 = arith.constant 0 : i32
    return %c0_i32, %c0_i32_0 : i32, i32
  }
  func.func @transform_2(%arg0: i32) -> (i32, i32) {
    %c0_i32 = arith.constant 0 : i32
    %c0_i32_0 = arith.constant 0 : i32
    %c0_i32_1 = arith.constant 0 : i32
    return %c0_i32, %c0_i32_0 : i32, i32
  }
  func.func @transform_3(%arg0: i32) -> (i32, i32) {
    %c0_i32 = arith.constant 0 : i32
    %c0_i32_0 = arith.constant 0 : i32
    return %arg0, %c0_i32 : i32, i32
  }
}

module attributes {stable_mosaic.version = 11 : i64} {
  func.func @_linear_kernel(%arg0: i32, %arg1: i32, %arg2: memref<16x32xf32, #tpu.memory_space<vmem>>, %arg3: memref<32x128xbf16, #tpu.memory_space<vmem>>, %arg4: memref<1x128xf32, #tpu.memory_space<vmem>>, %arg5: memref<16x128xf32, #tpu.memory_space<vmem>>) attributes {dimension_semantics = [#tpu.dimension_semantics<parallel>, #tpu.dimension_semantics<parallel>], iteration_bounds = array<i64: 1, 1>, scalar_prefetch = 0 : i64, scratch_operands = 0 : i64, tpu.core_type = #tpu.core_type<tc>, window_params = [{transform_indices = @transform_0, window_bounds = array<i64: 16, 32>}, {transform_indices = @transform_1, window_bounds = array<i64: 32, 128>}, {transform_indices = @transform_2, window_bounds = array<i64: 1, 128>}, {transform_indices = @transform_3, window_bounds = array<i64: 16, 128>}]} {
    %c0 = arith.constant 0 : index
    %c0_0 = arith.constant 0 : index
    %0 = vector.load %arg2[%c0, %c0_0] : memref<16x32xf32, #tpu.memory_space<vmem>>, vector<16x32xf32>
    %c0_1 = arith.constant 0 : index
    %c0_2 = arith.constant 0 : index
    %1 = vector.load %arg3[%c0_1, %c0_2] : memref<32x128xbf16, #tpu.memory_space<vmem>>, vector<32x128xbf16>
    %2 = arith.truncf %0 : vector<16x32xf32> to vector<16x32xbf16>
    %cst = arith.constant dense<0.000000e+00> : vector<16x128xf32>
    %3 = tpu.matmul %2, %1, %cst {dimension_numbers = #tpu.dot_dimension_numbers<[1], [0], [0], [1], [0, 0, 1, 1], [], []>} : vector<16x32xbf16>, vector<32x128xbf16>, vector<16x128xf32> -> vector<16x128xf32>
    %c0_3 = arith.constant 0 : index
    %c0_4 = arith.constant 0 : index
    %4 = vector.load %arg4[%c0_3, %c0_4] : memref<1x128xf32, #tpu.memory_space<vmem>>, vector<1x128xf32>
    %5 = vector.broadcast %4 : vector<1x128xf32> to vector<16x128xf32>
    %6 = arith.addf %3, %5 : vector<16x128xf32>
    %c0_5 = arith.constant 0 : index
    %c0_6 = arith.constant 0 : index
    %7 = vector.load %arg5[%c0_5, %c0_6] : memref<16x128xf32, #tpu.memory_space<vmem>>, vector<16x128xf32>
    tpu.vector_store %arg5[%c0_5, %c0_6], %6 {strides = array<i32>} : memref<16x128xf32, #tpu.memory_space<vmem>>, vector<16x128xf32>,
    return
  }
  func.func @transform_0(%arg0: i32, %arg1: i32) -> (i32, i32) {
    %c0_i32 = arith.constant 0 : i32
    %c0_i32_0 = arith.constant 0 : i32
    return %arg0, %c0_i32 : i32, i32
  }
  func.func @transform_1(%arg0: i32, %arg1: i32) -> (i32, i32) {
    %c0_i32 = arith.constant 0 : i32
    %c0_i32_0 = arith.constant 0 : i32
    return %c0_i32, %arg1 : i32, i32
  }
  func.func @transform_2(%arg0: i32, %arg1: i32) -> (i32, i32) {
    %c0_i32 = arith.constant 0 : i32
    %c0_i32_0 = arith.constant 0 : i32
    return %c0_i32, %arg1 : i32, i32
  }
  func.func @transform_3(%arg0: i32, %arg1: i32) -> (i32, i32) {
    %c0_i32 = arith.constant 0 : i32
    return %arg0, %arg1 : i32, i32
  }
}

</mosaic_0001>

<llo_original>
// kernel: transformer_forward.41
$region0: #{transformer_forward.41}
  #allocation0 [shape = 'u32[]', space=smem, size = 0x4, offset = 0x4, fixed_abs, tag = 'smem constant byte address 0x4 - core index']
  #allocation1 [shape = 'u32[144,128]{1,0:T(1,128)}', space=vmem, size = 0x12000, scoped, tag = 'internal scratch']
  %s0 = inlined_call_operand.vmem [shape: f32[16,32], index: 0, kind: input, shape index: {}]
  %s1 = inlined_call_operand.vmem [shape: bf16[32,96], index: 1, kind: input, shape index: {}]
  %s2 = inlined_call_operand.vmem [shape: f32[1,96], index: 2, kind: input, shape index: {}]
  %s3 = inlined_call_operand.vmem [shape: bf16[16,96], index: 3, kind: output, shape index: {}]
  %s4 = sld [smem:[#allocation0]]
  $region22: #{transformer_forward.41} parent=0
    _
  %s6 = ssub.s32 1, %s4
  %s7 = scalar_select 0, %s6, %s4
  // Predicated region
  $region2: #{transformer_forward.41} parent=0 // pred_check
    _
  $region3: #{transformer_forward.41} parent=0 // pred_check_branch
    %9 = sbr.rel (0) target = $region5
  $region4: #{transformer_forward.41} parent=0 // pred_region
    _
  $region5: #{transformer_forward.41} parent=0 // pred_fallthru
    _
  // Predicated region
  $region6: #{transformer_forward.41} parent=0 // pred_check
    _
  $region7: #{transformer_forward.41} parent=0 // pred_check_branch
    %11 = sbr.rel (0) target = $region9
  $region8: #{transformer_forward.41} parent=0 // pred_region
    _
  $region9: #{transformer_forward.41} parent=0 // pred_fallthru
    _
  // Predicated region
  $region10: #{transformer_forward.41} parent=0 // pred_check
    _
  $region11: #{transformer_forward.41} parent=0 // pred_check_branch
    %13 = sbr.rel (0) target = $region13
  $region12: #{transformer_forward.41} parent=0 // pred_region
    _
  $region13: #{transformer_forward.41} parent=0 // pred_fallthru
    _
  %v15 = vld [vmem:[%s0] sm:$0xff]
  %v16 = vld [vmem:[%s0 + $0x8] sm:$0xff]
  %v17 = vld [vmem:[%s1] sm:$0xf]
  %v18 = vld [vmem:[%s1 + $0x4] sm:$0xf]
  %v19 = vld [vmem:[%s1 + $0x8] sm:$0xf]
  %v20 = vld [vmem:[%s1 + $0xc] sm:$0xf]
  %v21 = vpack.c.bf16 %v16, %v15
  %v22 = vld [vmem:[%s2] sm:$0x1]
  %v24 = vlaneseq
  %v25 = vshrl.u32 %v24, 7
  %v26 = vsub.s32 0, %v25
  %v27 = vrot.slane %v22, %v26
  %v33 = vunpack.c.l.b16 %v17
  %v34 = vunpack.c.l.b16 %v18
  %v35 = vunpack.c.l.b16 %v19
  %v36 = vunpack.c.l.b16 %v20
  %v37 = vpack.c.b16 %v34, %v33
  %v38 = vpack.c.b16 %v36, %v35
  %vm41 = vcmask 261120
  %v43 = vsel %vm41, %v21, 0
  %45 = vmatprep.subr.bf16.mxu0 0
  %46 = vmatpush1.bf16.msra.mxu0 %v37
  %47 = vmatprep.subr.bf16.mxu0 0
  %48 = vmatpush1.bf16.msra.mxu0 %v38
  %49 = vmatprep.subr.bf16.mxu0 0
  %50 = vmatpush1.bf16.msra.mxu0 0
  %51 = vmatprep.subr.bf16.mxu0 0
  %52 = vmatpush1.bf16.msra.mxu0 0
  %53 = vmatprep.subr.bf16.mxu0 0
  %54 = vmatpush1.bf16.msra.mxu0 0
  %55 = vmatprep.subr.bf16.mxu0 0
  %56 = vmatpush1.bf16.msra.mxu0 0
  %57 = vmatprep.subr.bf16.mxu0 0
  %58 = vmatpush1.bf16.msra.mxu0 0
  %59 = vmatprep.subr.bf16.mxu0 0
  %60 = vmatpush1.bf16.msra.mxu0 0
  %61 = vmatprep.subr.bf16.mxu0 0
  %62 = vmatpush1.bf16.msra.mxu0 0
  %63 = vmatprep.subr.bf16.mxu0 0
  %64 = vmatpush1.bf16.msra.mxu0 0
  %65 = vmatprep.subr.bf16.mxu0 0
  %66 = vmatpush1.bf16.msra.mxu0 0
  %67 = vmatprep.subr.bf16.mxu0 0
  %68 = vmatpush1.bf16.msra.mxu0 0
  %69 = vmatprep.subr.bf16.mxu0 0
  %70 = vmatpush1.bf16.msra.mxu0 0
  %71 = vmatprep.subr.bf16.mxu0 0
  %72 = vmatpush1.bf16.msra.mxu0 0
  %73 = vmatprep.subr.bf16.mxu0 0
  %74 = vmatpush1.bf16.msra.mxu0 0
  %75 = vmatprep.subr.bf16.mxu0 0
  %76 = vmatpush1.bf16.msra.mxu0 0
  %77 = vmatprep.mubr.bf16.mxu0 0
  %78 = vmatmul.mubr.bf16.gmra.mrb[0].mxu0 %v43
  %v79 = vpop.f32.mrb[0].mxu0
  %v80 = vadd.f32 %v27, %v79
  %v81 = vpop.f32.mrb[0].mxu0
  %v82 = vpop.f32.mrb[0].mxu0
  %v83 = vadd.f32 %v27, %v82
  %v84 = vpop.f32.mrb[0].mxu0
  %85 = vdwg.mxu0
  %v86 = vpack.c.bf16 %v83, %v80
  %v88 = vunpack.c.l.b16 %v86
  %v89 = vunpack.c.h.b16 %v86
  %v90 = vpack.c.b16 %v88, %v88
  %v91 = vpack.c.b16 %v89, %v89
  %vm94 = vcmask 781312
  %95 = vst.msk [vmem:[%s3] sm:$0xf] %vm94, %v90
  %96 = vst.msk [vmem:[%s3 + $0x4] sm:$0xf] %vm94, %v91
  // Predicated region
  $region14: #{transformer_forward.41} parent=0 // pred_check
    _
  $region15: #{transformer_forward.41} parent=0 // pred_check_branch
    %98 = sbr.rel (0) target = $region17
  $region16: #{transformer_forward.41} parent=0 // pred_region
    _
  $region17: #{transformer_forward.41} parent=0 // pred_fallthru
    _
  // Predicated region
  $region18: #{transformer_forward.41} parent=0 // pred_check
    _
  $region19: #{transformer_forward.41} parent=0 // pred_check_branch
    %100 = sbr.rel (0) target = $region21
  $region20: #{transformer_forward.41} parent=0 // pred_region
    _
  $region21: #{transformer_forward.41} parent=0 // pred_fallthru
    _

// kernel: transformer_forward.43
$region0: #{transformer_forward.43}
  #allocation0 [shape = 'u32[]', space=smem, size = 0x4, offset = 0x4, fixed_abs, tag = 'smem constant byte address 0x4 - core index']
  #allocation1 [shape = 'u32[144,128]{1,0:T(1,128)}', space=vmem, size = 0x12000, scoped, tag = 'internal scratch']
  %s0 = inlined_call_operand.vmem [shape: bf16[16,32], index: 0, kind: input, shape index: {}]
  %s1 = inlined_call_operand.vmem [shape: f32[16,32], index: 1, kind: input, shape index: {}]
  %s2 = inlined_call_operand.vmem [shape: bf16[32,32], index: 2, kind: input, shape index: {}]
  %s3 = inlined_call_operand.vmem [shape: f32[1,32], index: 3, kind: input, shape index: {}]
  %s4 = inlined_call_operand.vmem [shape: f32[1,32], index: 4, kind: input, shape index: {}]
  %s5 = inlined_call_operand.vmem [shape: f32[1,32], index: 5, kind: input, shape index: {}]
  %s6 = inlined_call_operand.vmem [shape: f32[16,32], index: 6, kind: output, shape index: {}]
  %s7 = sld [smem:[#allocation0]]
  $region34: #{transformer_forward.43} parent=0
    _
  %s9 = ssub.s32 1, %s7
  %s10 = scalar_select 0, %s9, %s7
  // Predicated region
  $region2: #{transformer_forward.43} parent=0 // pred_check
    _
  $region3: #{transformer_forward.43} parent=0 // pred_check_branch
    %12 = sbr.rel (0) target = $region5
  $region4: #{transformer_forward.43} parent=0 // pred_region
    _
  $region5: #{transformer_forward.43} parent=0 // pred_fallthru
    _
  // Predicated region
  $region6: #{transformer_forward.43} parent=0 // pred_check
    _
  $region7: #{transformer_forward.43} parent=0 // pred_check_branch
    %14 = sbr.rel (0) target = $region9
  $region8: #{transformer_forward.43} parent=0 // pred_region
    _
  $region9: #{transformer_forward.43} parent=0 // pred_fallthru
    _
  // Predicated region
  $region10: #{transformer_forward.43} parent=0 // pred_check
    _
  $region11: #{transformer_forward.43} parent=0 // pred_check_branch
    %16 = sbr.rel (0) target = $region13
  $region12: #{transformer_forward.43} parent=0 // pred_region
    _
  $region13: #{transformer_forward.43} parent=0 // pred_fallthru
    _
  // Predicated region
  $region14: #{transformer_forward.43} parent=0 // pred_check
    _
  $region15: #{transformer_forward.43} parent=0 // pred_check_branch
    %18 = sbr.rel (0) target = $region17
  $region16: #{transformer_forward.43} parent=0 // pred_region
    _
  $region17: #{transformer_forward.43} parent=0 // pred_fallthru
    _
  // Predicated region
  $region18: #{transformer_forward.43} parent=0 // pred_check
    _
  $region19: #{transformer_forward.43} parent=0 // pred_check_branch
    %20 = sbr.rel (0) target = $region21
  $region20: #{transformer_forward.43} parent=0 // pred_region
    _
  $region21: #{transformer_forward.43} parent=0 // pred_fallthru
    _
  // Predicated region
  $region22: #{transformer_forward.43} parent=0 // pred_check
    _
  $region23: #{transformer_forward.43} parent=0 // pred_check_branch
    %22 = sbr.rel (0) target = $region25
  $region24: #{transformer_forward.43} parent=0 // pred_region
    _
  $region25: #{transformer_forward.43} parent=0 // pred_fallthru
    _
  %v24 = vld [vmem:[%s0] sm:$0xf]
  %v25 = vld [vmem:[%s0 + $0x4] sm:$0xf]
  %v26 = vld [vmem:[%s2] sm:$0xf]
  %v27 = vld [vmem:[%s2 + $0x4] sm:$0xf]
  %v28 = vld [vmem:[%s2 + $0x8] sm:$0xf]
  %v29 = vld [vmem:[%s2 + $0xc] sm:$0xf]
  %v30 = vld [vmem:[%s3] sm:$0x1]
  %v32 = vlaneseq
  %v33 = vshrl.u32 %v32, 7
  %v34 = vsub.s32 0, %v33
  %v35 = vrot.slane %v30, %v34
  %v39 = vunpack.c.l.b16 %v24
  %v40 = vunpack.c.l.b16 %v25
  %v41 = vpack.c.b16 %v40, %v39
  %v46 = vunpack.c.l.b16 %v26
  %v47 = vunpack.c.l.b16 %v27
  %v48 = vunpack.c.l.b16 %v28
  %v49 = vunpack.c.l.b16 %v29
  %v50 = vpack.c.b16 %v47, %v46
  %v51 = vpack.c.b16 %v49, %v48
  %vm54 = vcmask 261120
  %v56 = vsel %vm54, %v41, 0
  %58 = vmatprep.subr.bf16.mxu0 0
  %59 = vmatpush1.bf16.msra.mxu0 %v50
  %60 = vmatprep.subr.bf16.mxu0 0
  %61 = vmatpush1.bf16.msra.mxu0 %v51
  %62 = vmatprep.subr.bf16.mxu0 0
  %63 = vmatpush1.bf16.msra.mxu0 0
  %64 = vmatprep.subr.bf16.mxu0 0
  %65 = vmatpush1.bf16.msra.mxu0 0
  %66 = vmatprep.subr.bf16.mxu0 0
  %67 = vmatpush1.bf16.msra.mxu0 0
  %68 = vmatprep.subr.bf16.mxu0 0
  %69 = vmatpush1.bf16.msra.mxu0 0
  %70 = vmatprep.subr.bf16.mxu0 0
  %71 = vmatpush1.bf16.msra.mxu0 0
  %72 = vmatprep.subr.bf16.mxu0 0
  %73 = vmatpush1.bf16.msra.mxu0 0
  %74 = vmatprep.subr.bf16.mxu0 0
  %75 = vmatpush1.bf16.msra.mxu0 0
  %76 = vmatprep.subr.bf16.mxu0 0
  %77 = vmatpush1.bf16.msra.mxu0 0
  %78 = vmatprep.subr.bf16.mxu0 0
  %79 = vmatpush1.bf16.msra.mxu0 0
  %80 = vmatprep.subr.bf16.mxu0 0
  %81 = vmatpush1.bf16.msra.mxu0 0
  %82 = vmatprep.subr.bf16.mxu0 0
  %83 = vmatpush1.bf16.msra.mxu0 0
  %84 = vmatprep.subr.bf16.mxu0 0
  %85 = vmatpush1.bf16.msra.mxu0 0
  %86 = vmatprep.subr.bf16.mxu0 0
  %87 = vmatpush1.bf16.msra.mxu0 0
  %88 = vmatprep.subr.bf16.mxu0 0
  %89 = vmatpush1.bf16.msra.mxu0 0
  %90 = vmatprep.mubr.bf16.mxu0 0
  %91 = vmatmul.mubr.bf16.gmra.mrb[0].mxu0 %v56
  %v92 = vpop.f32.mrb[0].mxu0
  %v93 = vadd.f32 %v35, %v92
  %v94 = vpop.f32.mrb[0].mxu0
  %v95 = vpop.f32.mrb[0].mxu0
  %v96 = vadd.f32 %v35, %v95
  %v97 = vpop.f32.mrb[0].mxu0
  %98 = vdwg.mxu0
  %v99 = vld [vmem:[%s1] sm:$0xff]
  %v100 = vld [vmem:[%s1 + $0x8] sm:$0xff]
  %v101 = vadd.f32 %v93, %v99
  %v102 = vadd.f32 %v96, %v100
  %v103 = vld [vmem:[%s4] sm:$0x1]
  %v104 = vld [vmem:[%s5] sm:$0x1]
  %v105 = vsel %vm54, %v101, 0.0
  %106 = vadd.xlane.f32.xlu0 %v105
  %v107 = vpop.xlane.xlu0 %106
  %v108 = vsel %vm54, %v102, 0.0
  %109 = vadd.xlane.f32.xlu0 %v108
  %v110 = vpop.xlane.xlu0 %109
  %v111 = vrcp.pop 32.0
  %v112 = vmul.f32 %v107, %v111
  %v113 = vmul.f32 %v110, %v111
  %v114 = vsub.f32 %v101, %v112
  %v115 = vsub.f32 %v102, %v113
  %v116 = vmul.f32 %v114, %v114
  %v117 = vmul.f32 %v115, %v115
  %v118 = vsel %vm54, %v116, 0.0
  %119 = vadd.xlane.f32.xlu0 %v118
  %v120 = vpop.xlane.xlu0 %119
  %v121 = vsel %vm54, %v117, 0.0
  %122 = vadd.xlane.f32.xlu0 %v121
  %v123 = vpop.xlane.xlu0 %122
  %v124 = vmul.f32 %v120, %v111
  %v125 = vmul.f32 %v123, %v111
  %v126 = vadd.f32 %v124, 1e-12
  %v127 = vadd.f32 %v125, 1e-12
  %v128 = vrsqrt.pop %v126
  %v129 = vrsqrt.pop %v127
  %v130 = vmul.f32 %v114, %v128
  %v131 = vmul.f32 %v115, %v129
  %v133 = vlaneseq
  %v134 = vshrl.u32 %v133, 7
  %v135 = vsub.s32 0, %v134
  %v136 = vrot.slane %v103, %v135
  %v138 = vmul.f32 %v130, %v136
  %v139 = vmul.f32 %v131, %v136
  %v141 = vlaneseq
  %v142 = vshrl.u32 %v141, 7
  %v143 = vsub.s32 0, %v142
  %v144 = vrot.slane %v104, %v143
  %v146 = vadd.f32 %v138, %v144
  %v147 = vadd.f32 %v139, %v144
  %148 = vst.msk [vmem:[%s6] sm:$0xff] %vm54, %v146
  %149 = vst.msk [vmem:[%s6 + $0x8] sm:$0xff] %vm54, %v147
  // Predicated region
  $region26: #{transformer_forward.43} parent=0 // pred_check
    _
  $region27: #{transformer_forward.43} parent=0 // pred_check_branch
    %151 = sbr.rel (0) target = $region29
  $region28: #{transformer_forward.43} parent=0 // pred_region
    _
  $region29: #{transformer_forward.43} parent=0 // pred_fallthru
    _
  // Predicated region
  $region30: #{transformer_forward.43} parent=0 // pred_check
    _
  $region31: #{transformer_forward.43} parent=0 // pred_check_branch
    %153 = sbr.rel (0) target = $region33
  $region32: #{transformer_forward.43} parent=0 // pred_region
    _
  $region33: #{transformer_forward.43} parent=0 // pred_fallthru
    _

// kernel: transformer_forward.44
$region0: #{transformer_forward.44}
  #allocation0 [shape = 'u32[]', space=smem, size = 0x4, offset = 0x4, fixed_abs, tag = 'smem constant byte address 0x4 - core index']
  #allocation1 [shape = 'u32[144,128]{1,0:T(1,128)}', space=vmem, size = 0x12000, scoped, tag = 'internal scratch']
  %s0 = inlined_call_operand.vmem [shape: f32[16,32], index: 0, kind: input, shape index: {}]
  %s1 = inlined_call_operand.vmem [shape: bf16[32,32], index: 1, kind: input, shape index: {}]
  %s2 = inlined_call_operand.vmem [shape: f32[1,32], index: 2, kind: input, shape index: {}]
  %s3 = inlined_call_operand.vmem [shape: bf16[16,32], index: 3, kind: output, shape index: {}]
  %s4 = sld [smem:[#allocation0]]
  $region22: #{transformer_forward.44} parent=0
    _
  %s6 = ssub.s32 1, %s4
  %s7 = scalar_select 0, %s6, %s4
  // Predicated region
  $region2: #{transformer_forward.44} parent=0 // pred_check
    _
  $region3: #{transformer_forward.44} parent=0 // pred_check_branch
    %9 = sbr.rel (0) target = $region5
  $region4: #{transformer_forward.44} parent=0 // pred_region
    _
  $region5: #{transformer_forward.44} parent=0 // pred_fallthru
    _
  // Predicated region
  $region6: #{transformer_forward.44} parent=0 // pred_check
    _
  $region7: #{transformer_forward.44} parent=0 // pred_check_branch
    %11 = sbr.rel (0) target = $region9
  $region8: #{transformer_forward.44} parent=0 // pred_region
    _
  $region9: #{transformer_forward.44} parent=0 // pred_fallthru
    _
  // Predicated region
  $region10: #{transformer_forward.44} parent=0 // pred_check
    _
  $region11: #{transformer_forward.44} parent=0 // pred_check_branch
    %13 = sbr.rel (0) target = $region13
  $region12: #{transformer_forward.44} parent=0 // pred_region
    _
  $region13: #{transformer_forward.44} parent=0 // pred_fallthru
    _
  %v15 = vld [vmem:[%s0] sm:$0xff]
  %v16 = vld [vmem:[%s0 + $0x8] sm:$0xff]
  %v17 = vld [vmem:[%s1] sm:$0xf]
  %v18 = vld [vmem:[%s1 + $0x4] sm:$0xf]
  %v19 = vld [vmem:[%s1 + $0x8] sm:$0xf]
  %v20 = vld [vmem:[%s1 + $0xc] sm:$0xf]
  %v21 = vpack.c.bf16 %v16, %v15
  %v22 = vld [vmem:[%s2] sm:$0x1]
  %v24 = vlaneseq
  %v25 = vshrl.u32 %v24, 7
  %v26 = vsub.s32 0, %v25
  %v27 = vrot.slane %v22, %v26
  %v33 = vunpack.c.l.b16 %v17
  %v34 = vunpack.c.l.b16 %v18
  %v35 = vunpack.c.l.b16 %v19
  %v36 = vunpack.c.l.b16 %v20
  %v37 = vpack.c.b16 %v34, %v33
  %v38 = vpack.c.b16 %v36, %v35
  %vm41 = vcmask 261120
  %v43 = vsel %vm41, %v21, 0
  %45 = vmatprep.subr.bf16.mxu0 0
  %46 = vmatpush1.bf16.msra.mxu0 %v37
  %47 = vmatprep.subr.bf16.mxu0 0
  %48 = vmatpush1.bf16.msra.mxu0 %v38
  %49 = vmatprep.subr.bf16.mxu0 0
  %50 = vmatpush1.bf16.msra.mxu0 0
  %51 = vmatprep.subr.bf16.mxu0 0
  %52 = vmatpush1.bf16.msra.mxu0 0
  %53 = vmatprep.subr.bf16.mxu0 0
  %54 = vmatpush1.bf16.msra.mxu0 0
  %55 = vmatprep.subr.bf16.mxu0 0
  %56 = vmatpush1.bf16.msra.mxu0 0
  %57 = vmatprep.subr.bf16.mxu0 0
  %58 = vmatpush1.bf16.msra.mxu0 0
  %59 = vmatprep.subr.bf16.mxu0 0
  %60 = vmatpush1.bf16.msra.mxu0 0
  %61 = vmatprep.subr.bf16.mxu0 0
  %62 = vmatpush1.bf16.msra.mxu0 0
  %63 = vmatprep.subr.bf16.mxu0 0
  %64 = vmatpush1.bf16.msra.mxu0 0
  %65 = vmatprep.subr.bf16.mxu0 0
  %66 = vmatpush1.bf16.msra.mxu0 0
  %67 = vmatprep.subr.bf16.mxu0 0
  %68 = vmatpush1.bf16.msra.mxu0 0
  %69 = vmatprep.subr.bf16.mxu0 0
  %70 = vmatpush1.bf16.msra.mxu0 0
  %71 = vmatprep.subr.bf16.mxu0 0
  %72 = vmatpush1.bf16.msra.mxu0 0
  %73 = vmatprep.subr.bf16.mxu0 0
  %74 = vmatpush1.bf16.msra.mxu0 0
  %75 = vmatprep.subr.bf16.mxu0 0
  %76 = vmatpush1.bf16.msra.mxu0 0
  %77 = vmatprep.mubr.bf16.mxu0 0
  %78 = vmatmul.mubr.bf16.gmra.mrb[0].mxu0 %v43
  %v79 = vpop.f32.mrb[0].mxu0
  %v80 = vadd.f32 %v27, %v79
  %v81 = vpop.f32.mrb[0].mxu0
  %v82 = vpop.f32.mrb[0].mxu0
  %v83 = vadd.f32 %v27, %v82
  %v84 = vpop.f32.mrb[0].mxu0
  %85 = vdwg.mxu0
  %v86 = vpack.c.bf16 %v83, %v80
  %v88 = vunpack.c.l.b16 %v86
  %v89 = vunpack.c.h.b16 %v86
  %v90 = vpack.c.b16 %v88, %v88
  %v91 = vpack.c.b16 %v89, %v89
  %vm94 = vcmask 257024
  %95 = vst.msk [vmem:[%s3] sm:$0xf] %vm94, %v90
  %96 = vst.msk [vmem:[%s3 + $0x4] sm:$0xf] %vm94, %v91
  // Predicated region
  $region14: #{transformer_forward.44} parent=0 // pred_check
    _
  $region15: #{transformer_forward.44} parent=0 // pred_check_branch
    %98 = sbr.rel (0) target = $region17
  $region16: #{transformer_forward.44} parent=0 // pred_region
    _
  $region17: #{transformer_forward.44} parent=0 // pred_fallthru
    _
  // Predicated region
  $region18: #{transformer_forward.44} parent=0 // pred_check
    _
  $region19: #{transformer_forward.44} parent=0 // pred_check_branch
    %100 = sbr.rel (0) target = $region21
  $region20: #{transformer_forward.44} parent=0 // pred_region
    _
  $region21: #{transformer_forward.44} parent=0 // pred_fallthru
    _

// kernel: transformer_forward.42
$region0: #{transformer_forward.42}
  #allocation0 [shape = 'u32[]', space=smem, size = 0x4, offset = 0x4, fixed_abs, tag = 'smem constant byte address 0x4 - core index']
  #allocation1 [shape = 'u32[144,128]{1,0:T(1,128)}', space=vmem, size = 0x12000, scoped, tag = 'internal scratch']
  %s0 = inlined_call_operand.vmem [shape: bf16[2,8,96], index: 0, kind: input, shape index: {}]
  %s1 = inlined_call_operand.vmem [shape: bf16[2,8,32], index: 1, kind: output, shape index: {}]
  %s2 = sld [smem:[#allocation0]]
  $region14: #{transformer_forward.42} parent=0
    _
  %s4 = ssub.s32 1, %s2
  %s5 = scalar_select 0, %s4, %s2
  // Predicated region
  $region2: #{transformer_forward.42} parent=0 // pred_check
    _
  $region3: #{transformer_forward.42} parent=0 // pred_check_branch
    %7 = sbr.rel (0) target = $region5
  $region4: #{transformer_forward.42} parent=0 // pred_region
    _
  $region5: #{transformer_forward.42} parent=0 // pred_fallthru
    _
  %v9 = vld [vmem:[%s0] sm:$0xf]
  %v10 = vld [vmem:[%s0 + $0x4] sm:$0xf]
  %v12 = vunpack.c.l.b16 %v9
  %v13 = vpack.c.b16 %v12, %v12
  %14 = vrot.lane.b32.xlu0 %v13, 96
  %v15 = vpop.permute.xlu0 %14
  %vm16 = vcmask 64512
  %v18 = vsel %vm16, %v9, 0
  %v21 = vsel %vm16, %v15, 0
  %23 = vmatprep.subr.bf16.mxu0 0
  %24 = vmatpush1.bf16.xpose.msra.mxu0 %v21
  %25 = vmatprep.subr.bf16.mxu0 0
  %26 = vmatpush1.bf16.xpose.msra.mxu0 0
  %27 = vmatprep.subr.bf16.mxu0 0
  %28 = vmatpush1.bf16.xpose.msra.mxu0 0
  %29 = vmatprep.subr.bf16.mxu0 0
  %30 = vmatpush1.bf16.xpose.msra.mxu0 0
  %31 = vmatprep.subr.bf16.mxu0 0
  %32 = vmatpush1.bf16.xpose.msra.mxu0 0
  %33 = vmatprep.subr.bf16.mxu0 0
  %34 = vmatpush1.bf16.xpose.msra.mxu0 0
  %35 = vmatprep.subr.bf16.mxu0 0
  %36 = vmatpush1.bf16.xpose.msra.mxu0 0
  %37 = vmatprep.subr.bf16.mxu0 0
  %38 = vmatpush1.bf16.xpose.msra.mxu0 0
  %39 = vmatprep.subr.bf16.mxu0 0
  %40 = vmatpush1.bf16.xpose.msra.mxu0 0
  %41 = vmatprep.subr.bf16.mxu0 0
  %42 = vmatpush1.bf16.xpose.msra.mxu0 0
  %43 = vmatprep.subr.bf16.mxu0 0
  %44 = vmatpush1.bf16.xpose.msra.mxu0 0
  %45 = vmatprep.subr.bf16.mxu0 0
  %46 = vmatpush1.bf16.xpose.msra.mxu0 0
  %47 = vmatprep.subr.bf16.mxu0 0
  %48 = vmatpush1.bf16.xpose.msra.mxu0 0
  %49 = vmatprep.subr.bf16.mxu0 0
  %50 = vmatpush1.bf16.xpose.msra.mxu0 0
  %51 = vmatprep.subr.bf16.mxu0 0
  %52 = vmatpush1.bf16.xpose.msra.mxu0 0
  %53 = vmatprep.subr.bf16.mxu0 0
  %54 = vmatpush1.bf16.xpose.msra.mxu0 0
  %55 = vmatprep.mubr.bf16.mxu0 0
  %56 = vmatmul.mubr.bf16.gmra.mrb[0].mxu0 %v18
  %v57 = vpop.f32.mrb[0].mxu0
  %v58 = vadd.f32 0.0, %v57
  %v59 = vpop.f32.mrb[0].mxu0
  %v60 = vpop.f32.mrb[0].mxu0
  %v61 = vpop.f32.mrb[0].mxu0
  %62 = vdwg.mxu0
  %v64 = vunpack.c.l.b16 %v10
  %v65 = vpack.c.b16 %v64, %v64
  %66 = vrot.lane.b32.xlu0 %v65, 96
  %v67 = vpop.permute.xlu0 %66
  %v69 = vsel %vm16, %v10, 0
  %v72 = vsel %vm16, %v67, 0
  %74 = vmatprep.subr.bf16.mxu0 0
  %75 = vmatpush1.bf16.xpose.msra.mxu0 %v72
  %76 = vmatprep.subr.bf16.mxu0 0
  %77 = vmatpush1.bf16.xpose.msra.mxu0 0
  %78 = vmatprep.subr.bf16.mxu0 0
  %79 = vmatpush1.bf16.xpose.msra.mxu0 0
  %80 = vmatprep.subr.bf16.mxu0 0
  %81 = vmatpush1.bf16.xpose.msra.mxu0 0
  %82 = vmatprep.subr.bf16.mxu0 0
  %83 = vmatpush1.bf16.xpose.msra.mxu0 0
  %84 = vmatprep.subr.bf16.mxu0 0
  %85 = vmatpush1.bf16.xpose.msra.mxu0 0
  %86 = vmatprep.subr.bf16.mxu0 0
  %87 = vmatpush1.bf16.xpose.msra.mxu0 0
  %88 = vmatprep.subr.bf16.mxu0 0
  %89 = vmatpush1.bf16.xpose.msra.mxu0 0
  %90 = vmatprep.subr.bf16.mxu0 0
  %91 = vmatpush1.bf16.xpose.msra.mxu0 0
  %92 = vmatprep.subr.bf16.mxu0 0
  %93 = vmatpush1.bf16.xpose.msra.mxu0 0
  %94 = vmatprep.subr.bf16.mxu0 0
  %95 = vmatpush1.bf16.xpose.msra.mxu0 0
  %96 = vmatprep.subr.bf16.mxu0 0
  %97 = vmatpush1.bf16.xpose.msra.mxu0 0
  %98 = vmatprep.subr.bf16.mxu0 0
  %99 = vmatpush1.bf16.xpose.msra.mxu0 0
  %100 = vmatprep.subr.bf16.mxu0 0
  %101 = vmatpush1.bf16.xpose.msra.mxu0 0
  %102 = vmatprep.subr.bf16.mxu0 0
  %103 = vmatpush1.bf16.xpose.msra.mxu0 0
  %104 = vmatprep.subr.bf16.mxu0 0
  %105 = vmatpush1.bf16.xpose.msra.mxu0 0
  %106 = vmatprep.mubr.bf16.mxu0 0
  %107 = vmatmul.mubr.bf16.gmra.mrb[0].mxu0 %v69
  %v108 = vpop.f32.mrb[0].mxu0
  %v109 = vadd.f32 0.0, %v108
  %v110 = vpop.f32.mrb[0].mxu0
  %v111 = vpop.f32.mrb[0].mxu0
  %v112 = vpop.f32.mrb[0].mxu0
  %113 = vdwg.mxu0
  %v114 = vsel %vm16, %v58, -inf
  %115 = vmax.xlane.f32.xlu0 %v114
  %v116 = vpop.xlane.xlu0 %115
  %v117 = vsel %vm16, %v109, -inf
  %118 = vmax.xlane.f32.xlu0 %v117
  %v119 = vpop.xlane.xlu0 %118
  %v120 = vsub.f32 %v58, %v116
  %v121 = vsub.f32 %v109, %v119
  %v122 = vmul.f32 %v120, 1.442695
  %v123 = vpow.pop %v122
  %v124 = vmul.f32 %v121, 1.442695
  %v125 = vpow.pop %v124
  %v126 = vsel %vm16, %v123, 0.0
  %127 = vadd.xlane.f32.xlu0 %v126
  %v128 = vpop.xlane.xlu0 %127
  %v129 = vsel %vm16, %v125, 0.0
  %130 = vadd.xlane.f32.xlu0 %v129
  %v131 = vpop.xlane.xlu0 %130
  %v132 = vrcp.pop %v128
  %v133 = vrcp.pop %v131
  %v134 = vmul.f32 %v123, %v132
  %v135 = vmul.f32 %v125, %v133
  %v136 = vpack.c.bf16 %v134, %v134
  %v137 = vpack.c.bf16 %v135, %v135
  %138 = vrot.lane.b32.xlu0 %v13, 64
  %v139 = vpop.permute.xlu0 %138
  %v141 = vsel %vm16, %v136, 0
  %vm143 = vcmask 1043456
  %v145 = vsel %vm143, %v139, 0
  %147 = vmatprep.subr.bf16.mxu0 0
  %148 = vmatpush1.bf16.msra.mxu0 %v145
  %149 = vmatprep.subr.bf16.mxu0 0
  %150 = vmatpush1.bf16.msra.mxu0 0
  %151 = vmatprep.subr.bf16.mxu0 0
  %152 = vmatpush1.bf16.msra.mxu0 0
  %153 = vmatprep.subr.bf16.mxu0 0
  %154 = vmatpush1.bf16.msra.mxu0 0
  %155 = vmatprep.subr.bf16.mxu0 0
  %156 = vmatpush1.bf16.msra.mxu0 0
  %157 = vmatprep.subr.bf16.mxu0 0
  %158 = vmatpush1.bf16.msra.mxu0 0
  %159 = vmatprep.subr.bf16.mxu0 0
  %160 = vmatpush1.bf16.msra.mxu0 0
  %161 = vmatprep.subr.bf16.mxu0 0
  %162 = vmatpush1.bf16.msra.mxu0 0
  %163 = vmatprep.subr.bf16.mxu0 0
  %164 = vmatpush1.bf16.msra.mxu0 0
  %165 = vmatprep.subr.bf16.mxu0 0
  %166 = vmatpush1.bf16.msra.mxu0 0
  %167 = vmatprep.subr.bf16.mxu0 0
  %168 = vmatpush1.bf16.msra.mxu0 0
  %169 = vmatprep.subr.bf16.mxu0 0
  %170 = vmatpush1.bf16.msra.mxu0 0
  %171 = vmatprep.subr.bf16.mxu0 0
  %172 = vmatpush1.bf16.msra.mxu0 0
  %173 = vmatprep.subr.bf16.mxu0 0
  %174 = vmatpush1.bf16.msra.mxu0 0
  %175 = vmatprep.subr.bf16.mxu0 0
  %176 = vmatpush1.bf16.msra.mxu0 0
  %177 = vmatprep.subr.bf16.mxu0 0
  %178 = vmatpush1.bf16.msra.mxu0 0
  %179 = vmatprep.mubr.bf16.mxu0 0
  %180 = vmatmul.mubr.bf16.gmra.mrb[0].mxu0 %v141
  %v181 = vpop.f32.mrb[0].mxu0
  %v182 = vadd.f32 0.0, %v181
  %v183 = vpop.f32.mrb[0].mxu0
  %v184 = vpop.f32.mrb[0].mxu0
  %v185 = vpop.f32.mrb[0].mxu0
  %186 = vdwg.mxu0
  %187 = vrot.lane.b32.xlu0 %v65, 64
  %v188 = vpop.permute.xlu0 %187
  %v190 = vsel %vm16, %v137, 0
  %v193 = vsel %vm143, %v188, 0
  %195 = vmatprep.subr.bf16.mxu0 0
  %196 = vmatpush1.bf16.msra.mxu0 %v193
  %197 = vmatprep.subr.bf16.mxu0 0
  %198 = vmatpush1.bf16.msra.mxu0 0
  %199 = vmatprep.subr.bf16.mxu0 0
  %200 = vmatpush1.bf16.msra.mxu0 0
  %201 = vmatprep.subr.bf16.mxu0 0
  %202 = vmatpush1.bf16.msra.mxu0 0
  %203 = vmatprep.subr.bf16.mxu0 0
  %204 = vmatpush1.bf16.msra.mxu0 0
  %205 = vmatprep.subr.bf16.mxu0 0
  %206 = vmatpush1.bf16.msra.mxu0 0
  %207 = vmatprep.subr.bf16.mxu0 0
  %208 = vmatpush1.bf16.msra.mxu0 0
  %209 = vmatprep.subr.bf16.mxu0 0
  %210 = vmatpush1.bf16.msra.mxu0 0
  %211 = vmatprep.subr.bf16.mxu0 0
  %212 = vmatpush1.bf16.msra.mxu0 0
  %213 = vmatprep.subr.bf16.mxu0 0
  %214 = vmatpush1.bf16.msra.mxu0 0
  %215 = vmatprep.subr.bf16.mxu0 0
  %216 = vmatpush1.bf16.msra.mxu0 0
  %217 = vmatprep.subr.bf16.mxu0 0
  %218 = vmatpush1.bf16.msra.mxu0 0
  %219 = vmatprep.subr.bf16.mxu0 0
  %220 = vmatpush1.bf16.msra.mxu0 0
  %221 = vmatprep.subr.bf16.mxu0 0
  %222 = vmatpush1.bf16.msra.mxu0 0
  %223 = vmatprep.subr.bf16.mxu0 0
  %224 = vmatpush1.bf16.msra.mxu0 0
  %225 = vmatprep.subr.bf16.mxu0 0
  %226 = vmatpush1.bf16.msra.mxu0 0
  %227 = vmatprep.mubr.bf16.mxu0 0
  %228 = vmatmul.mubr.bf16.gmra.mrb[0].mxu0 %v190
  %v229 = vpop.f32.mrb[0].mxu0
  %v230 = vadd.f32 0.0, %v229
  %v231 = vpop.f32.mrb[0].mxu0
  %v232 = vpop.f32.mrb[0].mxu0
  %v233 = vpop.f32.mrb[0].mxu0
  %234 = vdwg.mxu0
  %v235 = vpack.c.bf16 %v182, %v182
  %v236 = vpack.c.bf16 %v230, %v230
  %vm237 = vcmask 60416
  %238 = vst.msk [vmem:[%s1] sm:$0xf] %vm237, %v235
  %239 = vst.msk [vmem:[%s1 + $0x4] sm:$0xf] %vm237, %v236
  %240 = vrot.lane.b32.xlu0 %v13, 120
  %v241 = vpop.permute.xlu0 %240
  %242 = vrot.lane.b32.xlu0 %v13, 88
  %v243 = vpop.permute.xlu0 %242
  %v245 = vsel %vm16, %v241, 0
  %v248 = vsel %vm16, %v243, 0
  %250 = vmatprep.subr.bf16.mxu0 0
  %251 = vmatpush1.bf16.xpose.msra.mxu0 %v248
  %252 = vmatprep.subr.bf16.mxu0 0
  %253 = vmatpush1.bf16.xpose.msra.mxu0 0
  %254 = vmatprep.subr.bf16.mxu0 0
  %255 = vmatpush1.bf16.xpose.msra.mxu0 0
  %256 = vmatprep.subr.bf16.mxu0 0
  %257 = vmatpush1.bf16.xpose.msra.mxu0 0
  %258 = vmatprep.subr.bf16.mxu0 0
  %259 = vmatpush1.bf16.xpose.msra.mxu0 0
  %260 = vmatprep.subr.bf16.mxu0 0
  %261 = vmatpush1.bf16.xpose.msra.mxu0 0
  %262 = vmatprep.subr.bf16.mxu0 0
  %263 = vmatpush1.bf16.xpose.msra.mxu0 0
  %264 = vmatprep.subr.bf16.mxu0 0
  %265 = vmatpush1.bf16.xpose.msra.mxu0 0
  %266 = vmatprep.subr.bf16.mxu0 0
  %267 = vmatpush1.bf16.xpose.msra.mxu0 0
  %268 = vmatprep.subr.bf16.mxu0 0
  %269 = vmatpush1.bf16.xpose.msra.mxu0 0
  %270 = vmatprep.subr.bf16.mxu0 0
  %271 = vmatpush1.bf16.xpose.msra.mxu0 0
  %272 = vmatprep.subr.bf16.mxu0 0
  %273 = vmatpush1.bf16.xpose.msra.mxu0 0
  %274 = vmatprep.subr.bf16.mxu0 0
  %275 = vmatpush1.bf16.xpose.msra.mxu0 0
  %276 = vmatprep.subr.bf16.mxu0 0
  %277 = vmatpush1.bf16.xpose.msra.mxu0 0
  %278 = vmatprep.subr.bf16.mxu0 0
  %279 = vmatpush1.bf16.xpose.msra.mxu0 0
  %280 = vmatprep.subr.bf16.mxu0 0
  %281 = vmatpush1.bf16.xpose.msra.mxu0 0
  %282 = vmatprep.mubr.bf16.mxu0 0
  %283 = vmatmul.mubr.bf16.gmra.mrb[0].mxu0 %v245
  %v284 = vpop.f32.mrb[0].mxu0
  %v285 = vadd.f32 0.0, %v284
  %v286 = vpop.f32.mrb[0].mxu0
  %v287 = vpop.f32.mrb[0].mxu0
  %v288 = vpop.f32.mrb[0].mxu0
  %289 = vdwg.mxu0
  %290 = vrot.lane.b32.xlu0 %v65, 120
  %v291 = vpop.permute.xlu0 %290
  %292 = vrot.lane.b32.xlu0 %v65, 88
  %v293 = vpop.permute.xlu0 %292
  %v295 = vsel %vm16, %v291, 0
  %v298 = vsel %vm16, %v293, 0
  %300 = vmatprep.subr.bf16.mxu0 0
  %301 = vmatpush1.bf16.xpose.msra.mxu0 %v298
  %302 = vmatprep.subr.bf16.mxu0 0
  %303 = vmatpush1.bf16.xpose.msra.mxu0 0
  %304 = vmatprep.subr.bf16.mxu0 0
  %305 = vmatpush1.bf16.xpose.msra.mxu0 0
  %306 = vmatprep.subr.bf16.mxu0 0
  %307 = vmatpush1.bf16.xpose.msra.mxu0 0
  %308 = vmatprep.subr.bf16.mxu0 0
  %309 = vmatpush1.bf16.xpose.msra.mxu0 0
  %310 = vmatprep.subr.bf16.mxu0 0
  %311 = vmatpush1.bf16.xpose.msra.mxu0 0
  %312 = vmatprep.subr.bf16.mxu0 0
  %313 = vmatpush1.bf16.xpose.msra.mxu0 0
  %314 = vmatprep.subr.bf16.mxu0 0
  %315 = vmatpush1.bf16.xpose.msra.mxu0 0
  %316 = vmatprep.subr.bf16.mxu0 0
  %317 = vmatpush1.bf16.xpose.msra.mxu0 0
  %318 = vmatprep.subr.bf16.mxu0 0
  %319 = vmatpush1.bf16.xpose.msra.mxu0 0
  %320 = vmatprep.subr.bf16.mxu0 0
  %321 = vmatpush1.bf16.xpose.msra.mxu0 0
  %322 = vmatprep.subr.bf16.mxu0 0
  %323 = vmatpush1.bf16.xpose.msra.mxu0 0
  %324 = vmatprep.subr.bf16.mxu0 0
  %325 = vmatpush1.bf16.xpose.msra.mxu0 0
  %326 = vmatprep.subr.bf16.mxu0 0
  %327 = vmatpush1.bf16.xpose.msra.mxu0 0
  %328 = vmatprep.subr.bf16.mxu0 0
  %329 = vmatpush1.bf16.xpose.msra.mxu0 0
  %330 = vmatprep.subr.bf16.mxu0 0
  %331 = vmatpush1.bf16.xpose.msra.mxu0 0
  %332 = vmatprep.mubr.bf16.mxu0 0
  %333 = vmatmul.mubr.bf16.gmra.mrb[0].mxu0 %v295
  %v334 = vpop.f32.mrb[0].mxu0
  %v335 = vadd.f32 0.0, %v334
  %v336 = vpop.f32.mrb[0].mxu0
  %v337 = vpop.f32.mrb[0].mxu0
  %v338 = vpop.f32.mrb[0].mxu0
  %339 = vdwg.mxu0
  %v340 = vsel %vm16, %v285, -inf
  %341 = vmax.xlane.f32.xlu0 %v340
  %v342 = vpop.xlane.xlu0 %341
  %v343 = vsel %vm16, %v335, -inf
  %344 = vmax.xlane.f32.xlu0 %v343
  %v345 = vpop.xlane.xlu0 %344
  %v346 = vsub.f32 %v285, %v342
  %v347 = vsub.f32 %v335, %v345
  %v348 = vmul.f32 %v346, 1.442695
  %v349 = vpow.pop %v348
  %v350 = vmul.f32 %v347, 1.442695
  %v351 = vpow.pop %v350
  %v352 = vsel %vm16, %v349, 0.0
  %353 = vadd.xlane.f32.xlu0 %v352
  %v354 = vpop.xlane.xlu0 %353
  %v355 = vsel %vm16, %v351, 0.0
  %356 = vadd.xlane.f32.xlu0 %v355
  %v357 = vpop.xlane.xlu0 %356
  %v358 = vrcp.pop %v354
  %v359 = vrcp.pop %v357
  %v360 = vmul.f32 %v349, %v358
  %v361 = vmul.f32 %v351, %v359
  %v362 = vpack.c.bf16 %v360, %v360
  %v363 = vpack.c.bf16 %v361, %v361
  %364 = vrot.lane.b32.xlu0 %v13, 56
  %v365 = vpop.permute.xlu0 %364
  %v367 = vsel %vm16, %v362, 0
  %v370 = vsel %vm143, %v365, 0
  %372 = vmatprep.subr.bf16.mxu0 0
  %373 = vmatpush1.bf16.msra.mxu0 %v370
  %374 = vmatprep.subr.bf16.mxu0 0
  %375 = vmatpush1.bf16.msra.mxu0 0
  %376 = vmatprep.subr.bf16.mxu0 0
  %377 = vmatpush1.bf16.msra.mxu0 0
  %378 = vmatprep.subr.bf16.mxu0 0
  %379 = vmatpush1.bf16.msra.mxu0 0
  %380 = vmatprep.subr.bf16.mxu0 0
  %381 = vmatpush1.bf16.msra.mxu0 0
  %382 = vmatprep.subr.bf16.mxu0 0
  %383 = vmatpush1.bf16.msra.mxu0 0
  %384 = vmatprep.subr.bf16.mxu0 0
  %385 = vmatpush1.bf16.msra.mxu0 0
  %386 = vmatprep.subr.bf16.mxu0 0
  %387 = vmatpush1.bf16.msra.mxu0 0
  %388 = vmatprep.subr.bf16.mxu0 0
  %389 = vmatpush1.bf16.msra.mxu0 0
  %390 = vmatprep.subr.bf16.mxu0 0
  %391 = vmatpush1.bf16.msra.mxu0 0
  %392 = vmatprep.subr.bf16.mxu0 0
  %393 = vmatpush1.bf16.msra.mxu0 0
  %394 = vmatprep.subr.bf16.mxu0 0
  %395 = vmatpush1.bf16.msra.mxu0 0
  %396 = vmatprep.subr.bf16.mxu0 0
  %397 = vmatpush1.bf16.msra.mxu0 0
  %398 = vmatprep.subr.bf16.mxu0 0
  %399 = vmatpush1.bf16.msra.mxu0 0
  %400 = vmatprep.subr.bf16.mxu0 0
  %401 = vmatpush1.bf16.msra.mxu0 0
  %402 = vmatprep.subr.bf16.mxu0 0
  %403 = vmatpush1.bf16.msra.mxu0 0
  %404 = vmatprep.mubr.bf16.mxu0 0
  %405 = vmatmul.mubr.bf16.gmra.mrb[0].mxu0 %v367
  %v406 = vpop.f32.mrb[0].mxu0
  %v407 = vadd.f32 0.0, %v406
  %v408 = vpop.f32.mrb[0].mxu0
  %v409 = vpop.f32.mrb[0].mxu0
  %v410 = vpop.f32.mrb[0].mxu0
  %411 = vdwg.mxu0
  %412 = vrot.lane.b32.xlu0 %v65, 56
  %v413 = vpop.permute.xlu0 %412
  %v415 = vsel %vm16, %v363, 0
  %v418 = vsel %vm143, %v413, 0
  %420 = vmatprep.subr.bf16.mxu0 0
  %421 = vmatpush1.bf16.msra.mxu0 %v418
  %422 = vmatprep.subr.bf16.mxu0 0
  %423 = vmatpush1.bf16.msra.mxu0 0
  %424 = vmatprep.subr.bf16.mxu0 0
  %425 = vmatpush1.bf16.msra.mxu0 0
  %426 = vmatprep.subr.bf16.mxu0 0
  %427 = vmatpush1.bf16.msra.mxu0 0
  %428 = vmatprep.subr.bf16.mxu0 0
  %429 = vmatpush1.bf16.msra.mxu0 0
  %430 = vmatprep.subr.bf16.mxu0 0
  %431 = vmatpush1.bf16.msra.mxu0 0
  %432 = vmatprep.subr.bf16.mxu0 0
  %433 = vmatpush1.bf16.msra.mxu0 0
  %434 = vmatprep.subr.bf16.mxu0 0
  %435 = vmatpush1.bf16.msra.mxu0 0
  %436 = vmatprep.subr.bf16.mxu0 0
  %437 = vmatpush1.bf16.msra.mxu0 0
  %438 = vmatprep.subr.bf16.mxu0 0
  %439 = vmatpush1.bf16.msra.mxu0 0
  %440 = vmatprep.subr.bf16.mxu0 0
  %441 = vmatpush1.bf16.msra.mxu0 0
  %442 = vmatprep.subr.bf16.mxu0 0
  %443 = vmatpush1.bf16.msra.mxu0 0
  %444 = vmatprep.subr.bf16.mxu0 0
  %445 = vmatpush1.bf16.msra.mxu0 0
  %446 = vmatprep.subr.bf16.mxu0 0
  %447 = vmatpush1.bf16.msra.mxu0 0
  %448 = vmatprep.subr.bf16.mxu0 0
  %449 = vmatpush1.bf16.msra.mxu0 0
  %450 = vmatprep.subr.bf16.mxu0 0
  %451 = vmatpush1.bf16.msra.mxu0 0
  %452 = vmatprep.mubr.bf16.mxu0 0
  %453 = vmatmul.mubr.bf16.gmra.mrb[0].mxu0 %v415
  %v454 = vpop.f32.mrb[0].mxu0
  %v455 = vadd.f32 0.0, %v454
  %v456 = vpop.f32.mrb[0].mxu0
  %v457 = vpop.f32.mrb[0].mxu0
  %v458 = vpop.f32.mrb[0].mxu0
  %459 = vdwg.mxu0
  %v460 = vpack.c.bf16 %v407, %v407
  %v461 = vpack.c.bf16 %v455, %v455
  %v464 = vunpack.c.l.b16 %v460
  %v465 = vunpack.c.l.b16 %v461
  %v466 = vpack.c.b16 %v464, %v464
  %v467 = vpack.c.b16 %v465, %v465
  %468 = vrot.lane.b32.xlu0 %v466, 8
  %v469 = vpop.permute.xlu0 %468
  %470 = vrot.lane.b32.xlu0 %v467, 8
  %v471 = vpop.permute.xlu0 %470
  %vm474 = vcmask 126016
  %475 = vst.msk [vmem:[%s1] sm:$0xf] %vm474, %v469
  %476 = vst.msk [vmem:[%s1 + $0x4] sm:$0xf] %vm474, %v471
  %477 = vrot.lane.b32.xlu0 %v13, 112
  %v478 = vpop.permute.xlu0 %477
  %479 = vrot.lane.b32.xlu0 %v13, 80
  %v480 = vpop.permute.xlu0 %479
  %v482 = vsel %vm16, %v478, 0
  %v485 = vsel %vm16, %v480, 0
  %487 = vmatprep.subr.bf16.mxu0 0
  %488 = vmatpush1.bf16.xpose.msra.mxu0 %v485
  %489 = vmatprep.subr.bf16.mxu0 0
  %490 = vmatpush1.bf16.xpose.msra.mxu0 0
  %491 = vmatprep.subr.bf16.mxu0 0
  %492 = vmatpush1.bf16.xpose.msra.mxu0 0
  %493 = vmatprep.subr.bf16.mxu0 0
  %494 = vmatpush1.bf16.xpose.msra.mxu0 0
  %495 = vmatprep.subr.bf16.mxu0 0
  %496 = vmatpush1.bf16.xpose.msra.mxu0 0
  %497 = vmatprep.subr.bf16.mxu0 0
  %498 = vmatpush1.bf16.xpose.msra.mxu0 0
  %499 = vmatprep.subr.bf16.mxu0 0
  %500 = vmatpush1.bf16.xpose.msra.mxu0 0
  %501 = vmatprep.subr.bf16.mxu0 0
  %502 = vmatpush1.bf16.xpose.msra.mxu0 0
  %503 = vmatprep.subr.bf16.mxu0 0
  %504 = vmatpush1.bf16.xpose.msra.mxu0 0
  %505 = vmatprep.subr.bf16.mxu0 0
  %506 = vmatpush1.bf16.xpose.msra.mxu0 0
  %507 = vmatprep.subr.bf16.mxu0 0
  %508 = vmatpush1.bf16.xpose.msra.mxu0 0
  %509 = vmatprep.subr.bf16.mxu0 0
  %510 = vmatpush1.bf16.xpose.msra.mxu0 0
  %511 = vmatprep.subr.bf16.mxu0 0
  %512 = vmatpush1.bf16.xpose.msra.mxu0 0
  %513 = vmatprep.subr.bf16.mxu0 0
  %514 = vmatpush1.bf16.xpose.msra.mxu0 0
  %515 = vmatprep.subr.bf16.mxu0 0
  %516 = vmatpush1.bf16.xpose.msra.mxu0 0
  %517 = vmatprep.subr.bf16.mxu0 0
  %518 = vmatpush1.bf16.xpose.msra.mxu0 0
  %519 = vmatprep.mubr.bf16.mxu0 0
  %520 = vmatmul.mubr.bf16.gmra.mrb[0].mxu0 %v482
  %v521 = vpop.f32.mrb[0].mxu0
  %v522 = vadd.f32 0.0, %v521
  %v523 = vpop.f32.mrb[0].mxu0
  %v524 = vpop.f32.mrb[0].mxu0
  %v525 = vpop.f32.mrb[0].mxu0
  %526 = vdwg.mxu0
  %527 = vrot.lane.b32.xlu0 %v65, 112
  %v528 = vpop.permute.xlu0 %527
  %529 = vrot.lane.b32.xlu0 %v65, 80
  %v530 = vpop.permute.xlu0 %529
  %v532 = vsel %vm16, %v528, 0
  %v535 = vsel %vm16, %v530, 0
  %537 = vmatprep.subr.bf16.mxu0 0
  %538 = vmatpush1.bf16.xpose.msra.mxu0 %v535
  %539 = vmatprep.subr.bf16.mxu0 0
  %540 = vmatpush1.bf16.xpose.msra.mxu0 0
  %541 = vmatprep.subr.bf16.mxu0 0
  %542 = vmatpush1.bf16.xpose.msra.mxu0 0
  %543 = vmatprep.subr.bf16.mxu0 0
  %544 = vmatpush1.bf16.xpose.msra.mxu0 0
  %545 = vmatprep.subr.bf16.mxu0 0
  %546 = vmatpush1.bf16.xpose.msra.mxu0 0
  %547 = vmatprep.subr.bf16.mxu0 0
  %548 = vmatpush1.bf16.xpose.msra.mxu0 0
  %549 = vmatprep.subr.bf16.mxu0 0
  %550 = vmatpush1.bf16.xpose.msra.mxu0 0
  %551 = vmatprep.subr.bf16.mxu0 0
  %552 = vmatpush1.bf16.xpose.msra.mxu0 0
  %553 = vmatprep.subr.bf16.mxu0 0
  %554 = vmatpush1.bf16.xpose.msra.mxu0 0
  %555 = vmatprep.subr.bf16.mxu0 0
  %556 = vmatpush1.bf16.xpose.msra.mxu0 0
  %557 = vmatprep.subr.bf16.mxu0 0
  %558 = vmatpush1.bf16.xpose.msra.mxu0 0
  %559 = vmatprep.subr.bf16.mxu0 0
  %560 = vmatpush1.bf16.xpose.msra.mxu0 0
  %561 = vmatprep.subr.bf16.mxu0 0
  %562 = vmatpush1.bf16.xpose.msra.mxu0 0
  %563 = vmatprep.subr.bf16.mxu0 0
  %564 = vmatpush1.bf16.xpose.msra.mxu0 0
  %565 = vmatprep.subr.bf16.mxu0 0
  %566 = vmatpush1.bf16.xpose.msra.mxu0 0
  %567 = vmatprep.subr.bf16.mxu0 0
  %568 = vmatpush1.bf16.xpose.msra.mxu0 0
  %569 = vmatprep.mubr.bf16.mxu0 0
  %570 = vmatmul.mubr.bf16.gmra.mrb[0].mxu0 %v532
  %v571 = vpop.f32.mrb[0].mxu0
  %v572 = vadd.f32 0.0, %v571
  %v573 = vpop.f32.mrb[0].mxu0
  %v574 = vpop.f32.mrb[0].mxu0
  %v575 = vpop.f32.mrb[0].mxu0
  %576 = vdwg.mxu0
  %v577 = vsel %vm16, %v522, -inf
  %578 = vmax.xlane.f32.xlu0 %v577
  %v579 = vpop.xlane.xlu0 %578
  %v580 = vsel %vm16, %v572, -inf
  %581 = vmax.xlane.f32.xlu0 %v580
  %v582 = vpop.xlane.xlu0 %581
  %v583 = vsub.f32 %v522, %v579
  %v584 = vsub.f32 %v572, %v582
  %v585 = vmul.f32 %v583, 1.442695
  %v586 = vpow.pop %v585
  %v587 = vmul.f32 %v584, 1.442695
  %v588 = vpow.pop %v587
  %v589 = vsel %vm16, %v586, 0.0
  %590 = vadd.xlane.f32.xlu0 %v589
  %v591 = vpop.xlane.xlu0 %590
  %v592 = vsel %vm16, %v588, 0.0
  %593 = vadd.xlane.f32.xlu0 %v592
  %v594 = vpop.xlane.xlu0 %593
  %v595 = vrcp.pop %v591
  %v596 = vrcp.pop %v594
  %v597 = vmul.f32 %v586, %v595
  %v598 = vmul.f32 %v588, %v596
  %v599 = vpack.c.bf16 %v597, %v597
  %v600 = vpack.c.bf16 %v598, %v598
  %601 = vrot.lane.b32.xlu0 %v13, 48
  %v602 = vpop.permute.xlu0 %601
  %v604 = vsel %vm16, %v599, 0
  %v607 = vsel %vm143, %v602, 0
  %609 = vmatprep.subr.bf16.mxu0 0
  %610 = vmatpush1.bf16.msra.mxu0 %v607
  %611 = vmatprep.subr.bf16.mxu0 0
  %612 = vmatpush1.bf16.msra.mxu0 0
  %613 = vmatprep.subr.bf16.mxu0 0
  %614 = vmatpush1.bf16.msra.mxu0 0
  %615 = vmatprep.subr.bf16.mxu0 0
  %616 = vmatpush1.bf16.msra.mxu0 0
  %617 = vmatprep.subr.bf16.mxu0 0
  %618 = vmatpush1.bf16.msra.mxu0 0
  %619 = vmatprep.subr.bf16.mxu0 0
  %620 = vmatpush1.bf16.msra.mxu0 0
  %621 = vmatprep.subr.bf16.mxu0 0
  %622 = vmatpush1.bf16.msra.mxu0 0
  %623 = vmatprep.subr.bf16.mxu0 0
  %624 = vmatpush1.bf16.msra.mxu0 0
  %625 = vmatprep.subr.bf16.mxu0 0
  %626 = vmatpush1.bf16.msra.mxu0 0
  %627 = vmatprep.subr.bf16.mxu0 0
  %628 = vmatpush1.bf16.msra.mxu0 0
  %629 = vmatprep.subr.bf16.mxu0 0
  %630 = vmatpush1.bf16.msra.mxu0 0
  %631 = vmatprep.subr.bf16.mxu0 0
  %632 = vmatpush1.bf16.msra.mxu0 0
  %633 = vmatprep.subr.bf16.mxu0 0
  %634 = vmatpush1.bf16.msra.mxu0 0
  %635 = vmatprep.subr.bf16.mxu0 0
  %636 = vmatpush1.bf16.msra.mxu0 0
  %637 = vmatprep.subr.bf16.mxu0 0
  %638 = vmatpush1.bf16.msra.mxu0 0
  %639 = vmatprep.subr.bf16.mxu0 0
  %640 = vmatpush1.bf16.msra.mxu0 0
  %641 = vmatprep.mubr.bf16.mxu0 0
  %642 = vmatmul.mubr.bf16.gmra.mrb[0].mxu0 %v604
  %v643 = vpop.f32.mrb[0].mxu0
  %v644 = vadd.f32 0.0, %v643
  %v645 = vpop.f32.mrb[0].mxu0
  %v646 = vpop.f32.mrb[0].mxu0
  %v647 = vpop.f32.mrb[0].mxu0
  %648 = vdwg.mxu0
  %649 = vrot.lane.b32.xlu0 %v65, 48
  %v650 = vpop.permute.xlu0 %649
  %v652 = vsel %vm16, %v600, 0
  %v655 = vsel %vm143, %v650, 0
  %657 = vmatprep.subr.bf16.mxu0 0
  %658 = vmatpush1.bf16.msra.mxu0 %v655
  %659 = vmatprep.subr.bf16.mxu0 0
  %660 = vmatpush1.bf16.msra.mxu0 0
  %661 = vmatprep.subr.bf16.mxu0 0
  %662 = vmatpush1.bf16.msra.mxu0 0
  %663 = vmatprep.subr.bf16.mxu0 0
  %664 = vmatpush1.bf16.msra.mxu0 0
  %665 = vmatprep.subr.bf16.mxu0 0
  %666 = vmatpush1.bf16.msra.mxu0 0
  %667 = vmatprep.subr.bf16.mxu0 0
  %668 = vmatpush1.bf16.msra.mxu0 0
  %669 = vmatprep.subr.bf16.mxu0 0
  %670 = vmatpush1.bf16.msra.mxu0 0
  %671 = vmatprep.subr.bf16.mxu0 0
  %672 = vmatpush1.bf16.msra.mxu0 0
  %673 = vmatprep.subr.bf16.mxu0 0
  %674 = vmatpush1.bf16.msra.mxu0 0
  %675 = vmatprep.subr.bf16.mxu0 0
  %676 = vmatpush1.bf16.msra.mxu0 0
  %677 = vmatprep.subr.bf16.mxu0 0
  %678 = vmatpush1.bf16.msra.mxu0 0
  %679 = vmatprep.subr.bf16.mxu0 0
  %680 = vmatpush1.bf16.msra.mxu0 0
  %681 = vmatprep.subr.bf16.mxu0 0
  %682 = vmatpush1.bf16.msra.mxu0 0
  %683 = vmatprep.subr.bf16.mxu0 0
  %684 = vmatpush1.bf16.msra.mxu0 0
  %685 = vmatprep.subr.bf16.mxu0 0
  %686 = vmatpush1.bf16.msra.mxu0 0
  %687 = vmatprep.subr.bf16.mxu0 0
  %688 = vmatpush1.bf16.msra.mxu0 0
  %689 = vmatprep.mubr.bf16.mxu0 0
  %690 = vmatmul.mubr.bf16.gmra.mrb[0].mxu0 %v652
  %v691 = vpop.f32.mrb[0].mxu0
  %v692 = vadd.f32 0.0, %v691
  %v693 = vpop.f32.mrb[0].mxu0
  %v694 = vpop.f32.mrb[0].mxu0
  %v695 = vpop.f32.mrb[0].mxu0
  %696 = vdwg.mxu0
  %v697 = vpack.c.bf16 %v644, %v644
  %v698 = vpack.c.bf16 %v692, %v692
  %v701 = vunpack.c.l.b16 %v697
  %v702 = vunpack.c.l.b16 %v698
  %v703 = vpack.c.b16 %v701, %v701
  %v704 = vpack.c.b16 %v702, %v702
  %705 = vrot.lane.b32.xlu0 %v703, 16
  %v706 = vpop.permute.xlu0 %705
  %707 = vrot.lane.b32.xlu0 %v704, 16
  %v708 = vpop.permute.xlu0 %707
  %vm711 = vcmask 191616
  %712 = vst.msk [vmem:[%s1] sm:$0xf] %vm711, %v706
  %713 = vst.msk [vmem:[%s1 + $0x4] sm:$0xf] %vm711, %v708
  %714 = vrot.lane.b32.xlu0 %v13, 104
  %v715 = vpop.permute.xlu0 %714
  %716 = vrot.lane.b32.xlu0 %v13, 72
  %v717 = vpop.permute.xlu0 %716
  %v719 = vsel %vm16, %v715, 0
  %v722 = vsel %vm16, %v717, 0
  %724 = vmatprep.subr.bf16.mxu0 0
  %725 = vmatpush1.bf16.xpose.msra.mxu0 %v722
  %726 = vmatprep.subr.bf16.mxu0 0
  %727 = vmatpush1.bf16.xpose.msra.mxu0 0
  %728 = vmatprep.subr.bf16.mxu0 0
  %729 = vmatpush1.bf16.xpose.msra.mxu0 0
  %730 = vmatprep.subr.bf16.mxu0 0
  %731 = vmatpush1.bf16.xpose.msra.mxu0 0
  %732 = vmatprep.subr.bf16.mxu0 0
  %733 = vmatpush1.bf16.xpose.msra.mxu0 0
  %734 = vmatprep.subr.bf16.mxu0 0
  %735 = vmatpush1.bf16.xpose.msra.mxu0 0
  %736 = vmatprep.subr.bf16.mxu0 0
  %737 = vmatpush1.bf16.xpose.msra.mxu0 0
  %738 = vmatprep.subr.bf16.mxu0 0
  %739 = vmatpush1.bf16.xpose.msra.mxu0 0
  %740 = vmatprep.subr.bf16.mxu0 0
  %741 = vmatpush1.bf16.xpose.msra.mxu0 0
  %742 = vmatprep.subr.bf16.mxu0 0
  %743 = vmatpush1.bf16.xpose.msra.mxu0 0
  %744 = vmatprep.subr.bf16.mxu0 0
  %745 = vmatpush1.bf16.xpose.msra.mxu0 0
  %746 = vmatprep.subr.bf16.mxu0 0
  %747 = vmatpush1.bf16.xpose.msra.mxu0 0
  %748 = vmatprep.subr.bf16.mxu0 0
  %749 = vmatpush1.bf16.xpose.msra.mxu0 0
  %750 = vmatprep.subr.bf16.mxu0 0
  %751 = vmatpush1.bf16.xpose.msra.mxu0 0
  %752 = vmatprep.subr.bf16.mxu0 0
  %753 = vmatpush1.bf16.xpose.msra.mxu0 0
  %754 = vmatprep.subr.bf16.mxu0 0
  %755 = vmatpush1.bf16.xpose.msra.mxu0 0
  %756 = vmatprep.mubr.bf16.mxu0 0
  %757 = vmatmul.mubr.bf16.gmra.mrb[0].mxu0 %v719
  %v758 = vpop.f32.mrb[0].mxu0
  %v759 = vadd.f32 0.0, %v758
  %v760 = vpop.f32.mrb[0].mxu0
  %v761 = vpop.f32.mrb[0].mxu0
  %v762 = vpop.f32.mrb[0].mxu0
  %763 = vdwg.mxu0
  %764 = vrot.lane.b32.xlu0 %v65, 104
  %v765 = vpop.permute.xlu0 %764
  %766 = vrot.lane.b32.xlu0 %v65, 72
  %v767 = vpop.permute.xlu0 %766
  %v769 = vsel %vm16, %v765, 0
  %v772 = vsel %vm16, %v767, 0
  %774 = vmatprep.subr.bf16.mxu0 0
  %775 = vmatpush1.bf16.xpose.msra.mxu0 %v772
  %776 = vmatprep.subr.bf16.mxu0 0
  %777 = vmatpush1.bf16.xpose.msra.mxu0 0
  %778 = vmatprep.subr.bf16.mxu0 0
  %779 = vmatpush1.bf16.xpose.msra.mxu0 0
  %780 = vmatprep.subr.bf16.mxu0 0
  %781 = vmatpush1.bf16.xpose.msra.mxu0 0
  %782 = vmatprep.subr.bf16.mxu0 0
  %783 = vmatpush1.bf16.xpose.msra.mxu0 0
  %784 = vmatprep.subr.bf16.mxu0 0
  %785 = vmatpush1.bf16.xpose.msra.mxu0 0
  %786 = vmatprep.subr.bf16.mxu0 0
  %787 = vmatpush1.bf16.xpose.msra.mxu0 0
  %788 = vmatprep.subr.bf16.mxu0 0
  %789 = vmatpush1.bf16.xpose.msra.mxu0 0
  %790 = vmatprep.subr.bf16.mxu0 0
  %791 = vmatpush1.bf16.xpose.msra.mxu0 0
  %792 = vmatprep.subr.bf16.mxu0 0
  %793 = vmatpush1.bf16.xpose.msra.mxu0 0
  %794 = vmatprep.subr.bf16.mxu0 0
  %795 = vmatpush1.bf16.xpose.msra.mxu0 0
  %796 = vmatprep.subr.bf16.mxu0 0
  %797 = vmatpush1.bf16.xpose.msra.mxu0 0
  %798 = vmatprep.subr.bf16.mxu0 0
  %799 = vmatpush1.bf16.xpose.msra.mxu0 0
  %800 = vmatprep.subr.bf16.mxu0 0
  %801 = vmatpush1.bf16.xpose.msra.mxu0 0
  %802 = vmatprep.subr.bf16.mxu0 0
  %803 = vmatpush1.bf16.xpose.msra.mxu0 0
  %804 = vmatprep.subr.bf16.mxu0 0
  %805 = vmatpush1.bf16.xpose.msra.mxu0 0
  %806 = vmatprep.mubr.bf16.mxu0 0
  %807 = vmatmul.mubr.bf16.gmra.mrb[0].mxu0 %v769
  %v808 = vpop.f32.mrb[0].mxu0
  %v809 = vadd.f32 0.0, %v808
  %v810 = vpop.f32.mrb[0].mxu0
  %v811 = vpop.f32.mrb[0].mxu0
  %v812 = vpop.f32.mrb[0].mxu0
  %813 = vdwg.mxu0
  %v814 = vsel %vm16, %v759, -inf
  %815 = vmax.xlane.f32.xlu0 %v814
  %v816 = vpop.xlane.xlu0 %815
  %v817 = vsel %vm16, %v809, -inf
  %818 = vmax.xlane.f32.xlu0 %v817
  %v819 = vpop.xlane.xlu0 %818
  %v820 = vsub.f32 %v759, %v816
  %v821 = vsub.f32 %v809, %v819
  %v822 = vmul.f32 %v820, 1.442695
  %v823 = vpow.pop %v822
  %v824 = vmul.f32 %v821, 1.442695
  %v825 = vpow.pop %v824
  %v826 = vsel %vm16, %v823, 0.0
  %827 = vadd.xlane.f32.xlu0 %v826
  %v828 = vpop.xlane.xlu0 %827
  %v829 = vsel %vm16, %v825, 0.0
  %830 = vadd.xlane.f32.xlu0 %v829
  %v831 = vpop.xlane.xlu0 %830
  %v832 = vrcp.pop %v828
  %v833 = vrcp.pop %v831
  %v834 = vmul.f32 %v823, %v832
  %v835 = vmul.f32 %v825, %v833
  %v836 = vpack.c.bf16 %v834, %v834
  %v837 = vpack.c.bf16 %v835, %v835
  %838 = vrot.lane.b32.xlu0 %v13, 40
  %v839 = vpop.permute.xlu0 %838
  %v841 = vsel %vm16, %v836, 0
  %v844 = vsel %vm143, %v839, 0
  %846 = vmatprep.subr.bf16.mxu0 0
  %847 = vmatpush1.bf16.msra.mxu0 %v844
  %848 = vmatprep.subr.bf16.mxu0 0
  %849 = vmatpush1.bf16.msra.mxu0 0
  %850 = vmatprep.subr.bf16.mxu0 0
  %851 = vmatpush1.bf16.msra.mxu0 0
  %852 = vmatprep.subr.bf16.mxu0 0
  %853 = vmatpush1.bf16.msra.mxu0 0
  %854 = vmatprep.subr.bf16.mxu0 0
  %855 = vmatpush1.bf16.msra.mxu0 0
  %856 = vmatprep.subr.bf16.mxu0 0
  %857 = vmatpush1.bf16.msra.mxu0 0
  %858 = vmatprep.subr.bf16.mxu0 0
  %859 = vmatpush1.bf16.msra.mxu0 0
  %860 = vmatprep.subr.bf16.mxu0 0
  %861 = vmatpush1.bf16.msra.mxu0 0
  %862 = vmatprep.subr.bf16.mxu0 0
  %863 = vmatpush1.bf16.msra.mxu0 0
  %864 = vmatprep.subr.bf16.mxu0 0
  %865 = vmatpush1.bf16.msra.mxu0 0
  %866 = vmatprep.subr.bf16.mxu0 0
  %867 = vmatpush1.bf16.msra.mxu0 0
  %868 = vmatprep.subr.bf16.mxu0 0
  %869 = vmatpush1.bf16.msra.mxu0 0
  %870 = vmatprep.subr.bf16.mxu0 0
  %871 = vmatpush1.bf16.msra.mxu0 0
  %872 = vmatprep.subr.bf16.mxu0 0
  %873 = vmatpush1.bf16.msra.mxu0 0
  %874 = vmatprep.subr.bf16.mxu0 0
  %875 = vmatpush1.bf16.msra.mxu0 0
  %876 = vmatprep.subr.bf16.mxu0 0
  %877 = vmatpush1.bf16.msra.mxu0 0
  %878 = vmatprep.mubr.bf16.mxu0 0
  %879 = vmatmul.mubr.bf16.gmra.mrb[0].mxu0 %v841
  %v880 = vpop.f32.mrb[0].mxu0
  %v881 = vadd.f32 0.0, %v880
  %v882 = vpop.f32.mrb[0].mxu0
  %v883 = vpop.f32.mrb[0].mxu0
  %v884 = vpop.f32.mrb[0].mxu0
  %885 = vdwg.mxu0
  %886 = vrot.lane.b32.xlu0 %v65, 40
  %v887 = vpop.permute.xlu0 %886
  %v889 = vsel %vm16, %v837, 0
  %v892 = vsel %vm143, %v887, 0
  %894 = vmatprep.subr.bf16.mxu0 0
  %895 = vmatpush1.bf16.msra.mxu0 %v892
  %896 = vmatprep.subr.bf16.mxu0 0
  %897 = vmatpush1.bf16.msra.mxu0 0
  %898 = vmatprep.subr.bf16.mxu0 0
  %899 = vmatpush1.bf16.msra.mxu0 0
  %900 = vmatprep.subr.bf16.mxu0 0
  %901 = vmatpush1.bf16.msra.mxu0 0
  %902 = vmatprep.subr.bf16.mxu0 0
  %903 = vmatpush1.bf16.msra.mxu0 0
  %904 = vmatprep.subr.bf16.mxu0 0
  %905 = vmatpush1.bf16.msra.mxu0 0
  %906 = vmatprep.subr.bf16.mxu0 0
  %907 = vmatpush1.bf16.msra.mxu0 0
  %908 = vmatprep.subr.bf16.mxu0 0
  %909 = vmatpush1.bf16.msra.mxu0 0
  %910 = vmatprep.subr.bf16.mxu0 0
  %911 = vmatpush1.bf16.msra.mxu0 0
  %912 = vmatprep.subr.bf16.mxu0 0
  %913 = vmatpush1.bf16.msra.mxu0 0
  %914 = vmatprep.subr.bf16.mxu0 0
  %915 = vmatpush1.bf16.msra.mxu0 0
  %916 = vmatprep.subr.bf16.mxu0 0
  %917 = vmatpush1.bf16.msra.mxu0 0
  %918 = vmatprep.subr.bf16.mxu0 0
  %919 = vmatpush1.bf16.msra.mxu0 0
  %920 = vmatprep.subr.bf16.mxu0 0
  %921 = vmatpush1.bf16.msra.mxu0 0
  %922 = vmatprep.subr.bf16.mxu0 0
  %923 = vmatpush1.bf16.msra.mxu0 0
  %924 = vmatprep.subr.bf16.mxu0 0
  %925 = vmatpush1.bf16.msra.mxu0 0
  %926 = vmatprep.mubr.bf16.mxu0 0
  %927 = vmatmul.mubr.bf16.gmra.mrb[0].mxu0 %v889
  %v928 = vpop.f32.mrb[0].mxu0
  %v929 = vadd.f32 0.0, %v928
  %v930 = vpop.f32.mrb[0].mxu0
  %v931 = vpop.f32.mrb[0].mxu0
  %v932 = vpop.f32.mrb[0].mxu0
  %933 = vdwg.mxu0
  %v934 = vpack.c.bf16 %v881, %v881
  %v935 = vpack.c.bf16 %v929, %v929
  %v938 = vunpack.c.l.b16 %v934
  %v939 = vunpack.c.l.b16 %v935
  %v940 = vpack.c.b16 %v938, %v938
  %v941 = vpack.c.b16 %v939, %v939
  %942 = vrot.lane.b32.xlu0 %v940, 24
  %v943 = vpop.permute.xlu0 %942
  %944 = vrot.lane.b32.xlu0 %v941, 24
  %v945 = vpop.permute.xlu0 %944
  %vm948 = vcmask 257216
  %949 = vst.msk [vmem:[%s1] sm:$0xf] %vm948, %v943
  %950 = vst.msk [vmem:[%s1 + $0x4] sm:$0xf] %vm948, %v945
  // Predicated region
  $region6: #{transformer_forward.42} parent=0 // pred_check
    _
  $region7: #{transformer_forward.42} parent=0 // pred_check_branch
    %952 = sbr.rel (0) target = $region9
  $region8: #{transformer_forward.42} parent=0 // pred_region
    _
  $region9: #{transformer_forward.42} parent=0 // pred_fallthru
    _
  // Predicated region
  $region10: #{transformer_forward.42} parent=0 // pred_check
    _
  $region11: #{transformer_forward.42} parent=0 // pred_check_branch
    %954 = sbr.rel (0) target = $region13
  $region12: #{transformer_forward.42} parent=0 // pred_region
    _
  $region13: #{transformer_forward.42} parent=0 // pred_fallthru
    _

// kernel: transformer_forward.36
$region0: #{transformer_forward.36}
  #allocation0 [shape = 'u32[]', space=smem, size = 0x4, offset = 0x4, fixed_abs, tag = 'smem constant byte address 0x4 - core index']
  #allocation1 [shape = 'u32[144,128]{1,0:T(1,128)}', space=vmem, size = 0x12000, scoped, tag = 'internal scratch']
  %s0 = inlined_call_operand.vmem [shape: f32[16,32], index: 0, kind: input, shape index: {}]
  %s1 = inlined_call_operand.vmem [shape: bf16[32,64], index: 1, kind: input, shape index: {}]
  %s2 = inlined_call_operand.vmem [shape: f32[1,64], index: 2, kind: input, shape index: {}]
  %s3 = inlined_call_operand.vmem [shape: bf16[64,32], index: 3, kind: input, shape index: {}]
  %s4 = inlined_call_operand.vmem [shape: f32[1,32], index: 4, kind: input, shape index: {}]
  %s5 = inlined_call_operand.vmem [shape: f32[1,32], index: 5, kind: input, shape index: {}]
  %s6 = inlined_call_operand.vmem [shape: f32[1,32], index: 6, kind: input, shape index: {}]
  %s7 = inlined_call_operand.vmem [shape: f32[16,32], index: 7, kind: output, shape index: {}]
  %s8 = sld [smem:[#allocation0]]
  $region38: #{transformer_forward.36} parent=0
    _
  %s10 = ssub.s32 1, %s8
  %s11 = scalar_select 0, %s10, %s8
  // Predicated region
  $region2: #{transformer_forward.36} parent=0 // pred_check
    _
  $region3: #{transformer_forward.36} parent=0 // pred_check_branch
    %13 = sbr.rel (0) target = $region5
  $region4: #{transformer_forward.36} parent=0 // pred_region
    _
  $region5: #{transformer_forward.36} parent=0 // pred_fallthru
    _
  // Predicated region
  $region6: #{transformer_forward.36} parent=0 // pred_check
    _
  $region7: #{transformer_forward.36} parent=0 // pred_check_branch
    %15 = sbr.rel (0) target = $region9
  $region8: #{transformer_forward.36} parent=0 // pred_region
    _
  $region9: #{transformer_forward.36} parent=0 // pred_fallthru
    _
  // Predicated region
  $region10: #{transformer_forward.36} parent=0 // pred_check
    _
  $region11: #{transformer_forward.36} parent=0 // pred_check_branch
    %17 = sbr.rel (0) target = $region13
  $region12: #{transformer_forward.36} parent=0 // pred_region
    _
  $region13: #{transformer_forward.36} parent=0 // pred_fallthru
    _
  // Predicated region
  $region14: #{transformer_forward.36} parent=0 // pred_check
    _
  $region15: #{transformer_forward.36} parent=0 // pred_check_branch
    %19 = sbr.rel (0) target = $region17
  $region16: #{transformer_forward.36} parent=0 // pred_region
    _
  $region17: #{transformer_forward.36} parent=0 // pred_fallthru
    _
  // Predicated region
  $region18: #{transformer_forward.36} parent=0 // pred_check
    _
  $region19: #{transformer_forward.36} parent=0 // pred_check_branch
    %21 = sbr.rel (0) target = $region21
  $region20: #{transformer_forward.36} parent=0 // pred_region
    _
  $region21: #{transformer_forward.36} parent=0 // pred_fallthru
    _
  // Predicated region
  $region22: #{transformer_forward.36} parent=0 // pred_check
    _
  $region23: #{transformer_forward.36} parent=0 // pred_check_branch
    %23 = sbr.rel (0) target = $region25
  $region24: #{transformer_forward.36} parent=0 // pred_region
    _
  $region25: #{transformer_forward.36} parent=0 // pred_fallthru
    _
  // Predicated region
  $region26: #{transformer_forward.36} parent=0 // pred_check
    _
  $region27: #{transformer_forward.36} parent=0 // pred_check_branch
    %25 = sbr.rel (0) target = $region29
  $region28: #{transformer_forward.36} parent=0 // pred_region
    _
  $region29: #{transformer_forward.36} parent=0 // pred_fallthru
    _
  %v27 = vld [vmem:[%s0] sm:$0xff]
  %v28 = vld [vmem:[%s0 + $0x8] sm:$0xff]
  %v29 = vld [vmem:[%s1] sm:$0xf]
  %v30 = vld [vmem:[%s1 + $0x4] sm:$0xf]
  %v31 = vld [vmem:[%s1 + $0x8] sm:$0xf]
  %v32 = vld [vmem:[%s1 + $0xc] sm:$0xf]
  %v33 = vpack.c.bf16 %v28, %v27
  %v34 = vld [vmem:[%s2] sm:$0x1]
  %v36 = vlaneseq
  %v37 = vshrl.u32 %v36, 7
  %v38 = vsub.s32 0, %v37
  %v39 = vrot.slane %v34, %v38
  %v45 = vunpack.c.l.b16 %v29
  %v46 = vunpack.c.l.b16 %v30
  %v47 = vunpack.c.l.b16 %v31
  %v48 = vunpack.c.l.b16 %v32
  %v49 = vpack.c.b16 %v46, %v45
  %v50 = vpack.c.b16 %v48, %v47
  %vm53 = vcmask 261120
  %v55 = vsel %vm53, %v33, 0
  %57 = vmatprep.subr.bf16.mxu0 0
  %58 = vmatpush1.bf16.msra.mxu0 %v49
  %59 = vmatprep.subr.bf16.mxu0 0
  %60 = vmatpush1.bf16.msra.mxu0 %v50
  %61 = vmatprep.subr.bf16.mxu0 0
  %62 = vmatpush1.bf16.msra.mxu0 0
  %63 = vmatprep.subr.bf16.mxu0 0
  %64 = vmatpush1.bf16.msra.mxu0 0
  %65 = vmatprep.subr.bf16.mxu0 0
  %66 = vmatpush1.bf16.msra.mxu0 0
  %67 = vmatprep.subr.bf16.mxu0 0
  %68 = vmatpush1.bf16.msra.mxu0 0
  %69 = vmatprep.subr.bf16.mxu0 0
  %70 = vmatpush1.bf16.msra.mxu0 0
  %71 = vmatprep.subr.bf16.mxu0 0
  %72 = vmatpush1.bf16.msra.mxu0 0
  %73 = vmatprep.subr.bf16.mxu0 0
  %74 = vmatpush1.bf16.msra.mxu0 0
  %75 = vmatprep.subr.bf16.mxu0 0
  %76 = vmatpush1.bf16.msra.mxu0 0
  %77 = vmatprep.subr.bf16.mxu0 0
  %78 = vmatpush1.bf16.msra.mxu0 0
  %79 = vmatprep.subr.bf16.mxu0 0
  %80 = vmatpush1.bf16.msra.mxu0 0
  %81 = vmatprep.subr.bf16.mxu0 0
  %82 = vmatpush1.bf16.msra.mxu0 0
  %83 = vmatprep.subr.bf16.mxu0 0
  %84 = vmatpush1.bf16.msra.mxu0 0
  %85 = vmatprep.subr.bf16.mxu0 0
  %86 = vmatpush1.bf16.msra.mxu0 0
  %87 = vmatprep.subr.bf16.mxu0 0
  %88 = vmatpush1.bf16.msra.mxu0 0
  %89 = vmatprep.mubr.bf16.mxu0 0
  %90 = vmatmul.mubr.bf16.gmra.mrb[0].mxu0 %v55
  %v91 = vpop.f32.mrb[0].mxu0
  %v92 = vadd.f32 %v39, %v91
  %v93 = vpop.f32.mrb[0].mxu0
  %v94 = vpop.f32.mrb[0].mxu0
  %v95 = vadd.f32 %v39, %v94
  %v96 = vpop.f32.mrb[0].mxu0
  %97 = vdwg.mxu0
  %v98 = vmax.f32 %v92, 0.0
  %v99 = vmax.f32 %v95, 0.0
  %v100 = vld [vmem:[%s3] sm:$0xf]
  %v101 = vld [vmem:[%s3 + $0x4] sm:$0xf]
  %v102 = vld [vmem:[%s3 + $0x8] sm:$0xf]
  %v103 = vld [vmem:[%s3 + $0xc] sm:$0xf]
  %v104 = vld [vmem:[%s3 + $0x10] sm:$0xf]
  %v105 = vld [vmem:[%s3 + $0x14] sm:$0xf]
  %v106 = vld [vmem:[%s3 + $0x18] sm:$0xf]
  %v107 = vld [vmem:[%s3 + $0x1c] sm:$0xf]
  %v108 = vpack.c.bf16 %v99, %v98
  %v109 = vld [vmem:[%s4] sm:$0x1]
  %v111 = vlaneseq
  %v112 = vshrl.u32 %v111, 7
  %v113 = vsub.s32 0, %v112
  %v114 = vrot.slane %v109, %v113
  %v124 = vunpack.c.l.b16 %v100
  %v125 = vunpack.c.l.b16 %v101
  %v126 = vunpack.c.l.b16 %v102
  %v127 = vunpack.c.l.b16 %v103
  %v128 = vunpack.c.l.b16 %v104
  %v129 = vunpack.c.l.b16 %v105
  %v130 = vunpack.c.l.b16 %v106
  %v131 = vunpack.c.l.b16 %v107
  %v132 = vpack.c.b16 %v125, %v124
  %v133 = vpack.c.b16 %v127, %v126
  %v134 = vpack.c.b16 %v129, %v128
  %v135 = vpack.c.b16 %v131, %v130
  %vm140 = vcmask 523264
  %v142 = vsel %vm140, %v108, 0
  %144 = vmatprep.subr.bf16.mxu0 0
  %145 = vmatpush1.bf16.msra.mxu0 %v132
  %146 = vmatprep.subr.bf16.mxu0 0
  %147 = vmatpush1.bf16.msra.mxu0 %v133
  %148 = vmatprep.subr.bf16.mxu0 0
  %149 = vmatpush1.bf16.msra.mxu0 %v134
  %150 = vmatprep.subr.bf16.mxu0 0
  %151 = vmatpush1.bf16.msra.mxu0 %v135
  %152 = vmatprep.subr.bf16.mxu0 0
  %153 = vmatpush1.bf16.msra.mxu0 0
  %154 = vmatprep.subr.bf16.mxu0 0
  %155 = vmatpush1.bf16.msra.mxu0 0
  %156 = vmatprep.subr.bf16.mxu0 0
  %157 = vmatpush1.bf16.msra.mxu0 0
  %158 = vmatprep.subr.bf16.mxu0 0
  %159 = vmatpush1.bf16.msra.mxu0 0
  %160 = vmatprep.subr.bf16.mxu0 0
  %161 = vmatpush1.bf16.msra.mxu0 0
  %162 = vmatprep.subr.bf16.mxu0 0
  %163 = vmatpush1.bf16.msra.mxu0 0
  %164 = vmatprep.subr.bf16.mxu0 0
  %165 = vmatpush1.bf16.msra.mxu0 0
  %166 = vmatprep.subr.bf16.mxu0 0
  %167 = vmatpush1.bf16.msra.mxu0 0
  %168 = vmatprep.subr.bf16.mxu0 0
  %169 = vmatpush1.bf16.msra.mxu0 0
  %170 = vmatprep.subr.bf16.mxu0 0
  %171 = vmatpush1.bf16.msra.mxu0 0
  %172 = vmatprep.subr.bf16.mxu0 0
  %173 = vmatpush1.bf16.msra.mxu0 0
  %174 = vmatprep.subr.bf16.mxu0 0
  %175 = vmatpush1.bf16.msra.mxu0 0
  %176 = vmatprep.mubr.bf16.mxu0 0
  %177 = vmatmul.mubr.bf16.gmra.mrb[0].mxu0 %v142
  %v178 = vpop.f32.mrb[0].mxu0
  %v179 = vadd.f32 %v114, %v178
  %v180 = vpop.f32.mrb[0].mxu0
  %v181 = vpop.f32.mrb[0].mxu0
  %v182 = vadd.f32 %v114, %v181
  %v183 = vpop.f32.mrb[0].mxu0
  %184 = vdwg.mxu0
  %v185 = vadd.f32 %v179, %v27
  %v186 = vadd.f32 %v182, %v28
  %v187 = vld [vmem:[%s5] sm:$0x1]
  %v188 = vld [vmem:[%s6] sm:$0x1]
  %v189 = vsel %vm53, %v185, 0.0
  %190 = vadd.xlane.f32.xlu0 %v189
  %v191 = vpop.xlane.xlu0 %190
  %v192 = vsel %vm53, %v186, 0.0
  %193 = vadd.xlane.f32.xlu0 %v192
  %v194 = vpop.xlane.xlu0 %193
  %v195 = vrcp.pop 32.0
  %v196 = vmul.f32 %v191, %v195
  %v197 = vmul.f32 %v194, %v195
  %v198 = vsub.f32 %v185, %v196
  %v199 = vsub.f32 %v186, %v197
  %v200 = vmul.f32 %v198, %v198
  %v201 = vmul.f32 %v199, %v199
  %v202 = vsel %vm53, %v200, 0.0
  %203 = vadd.xlane.f32.xlu0 %v202
  %v204 = vpop.xlane.xlu0 %203
  %v205 = vsel %vm53, %v201, 0.0
  %206 = vadd.xlane.f32.xlu0 %v205
  %v207 = vpop.xlane.xlu0 %206
  %v208 = vmul.f32 %v204, %v195
  %v209 = vmul.f32 %v207, %v195
  %v210 = vadd.f32 %v208, 1e-12
  %v211 = vadd.f32 %v209, 1e-12
  %v212 = vrsqrt.pop %v210
  %v213 = vrsqrt.pop %v211
  %v214 = vmul.f32 %v198, %v212
  %v215 = vmul.f32 %v199, %v213
  %v217 = vlaneseq
  %v218 = vshrl.u32 %v217, 7
  %v219 = vsub.s32 0, %v218
  %v220 = vrot.slane %v187, %v219
  %v222 = vmul.f32 %v214, %v220
  %v223 = vmul.f32 %v215, %v220
  %v225 = vlaneseq
  %v226 = vshrl.u32 %v225, 7
  %v227 = vsub.s32 0, %v226
  %v228 = vrot.slane %v188, %v227
  %v230 = vadd.f32 %v222, %v228
  %v231 = vadd.f32 %v223, %v228
  %232 = vst.msk [vmem:[%s7] sm:$0xff] %vm53, %v230
  %233 = vst.msk [vmem:[%s7 + $0x8] sm:$0xff] %vm53, %v231
  // Predicated region
  $region30: #{transformer_forward.36} parent=0 // pred_check
    _
  $region31: #{transformer_forward.36} parent=0 // pred_check_branch
    %235 = sbr.rel (0) target = $region33
  $region32: #{transformer_forward.36} parent=0 // pred_region
    _
  $region33: #{transformer_forward.36} parent=0 // pred_fallthru
    _
  // Predicated region
  $region34: #{transformer_forward.36} parent=0 // pred_check
    _
  $region35: #{transformer_forward.36} parent=0 // pred_check_branch
    %237 = sbr.rel (0) target = $region37
  $region36: #{transformer_forward.36} parent=0 // pred_region
    _
  $region37: #{transformer_forward.36} parent=0 // pred_fallthru
    _

// kernel: transformer_forward.45
$region0: #{transformer_forward.45}
  #allocation0 [shape = 'u32[]', space=smem, size = 0x4, offset = 0x4, fixed_abs, tag = 'smem constant byte address 0x4 - core index']
  #allocation1 [shape = 'u32[144,128]{1,0:T(1,128)}', space=vmem, size = 0x12000, scoped, tag = 'internal scratch']
  %s0 = inlined_call_operand.vmem [shape: f32[16,32], index: 0, kind: input, shape index: {}]
  %s1 = inlined_call_operand.vmem [shape: bf16[32,64], index: 1, kind: input, shape index: {}]
  %s2 = inlined_call_operand.vmem [shape: f32[1,64], index: 2, kind: input, shape index: {}]
  %s3 = inlined_call_operand.vmem [shape: bf16[16,64], index: 3, kind: output, shape index: {}]
  %s4 = sld [smem:[#allocation0]]
  $region22: #{transformer_forward.45} parent=0
    _
  %s6 = ssub.s32 1, %s4
  %s7 = scalar_select 0, %s6, %s4
  // Predicated region
  $region2: #{transformer_forward.45} parent=0 // pred_check
    _
  $region3: #{transformer_forward.45} parent=0 // pred_check_branch
    %9 = sbr.rel (0) target = $region5
  $region4: #{transformer_forward.45} parent=0 // pred_region
    _
  $region5: #{transformer_forward.45} parent=0 // pred_fallthru
    _
  // Predicated region
  $region6: #{transformer_forward.45} parent=0 // pred_check
    _
  $region7: #{transformer_forward.45} parent=0 // pred_check_branch
    %11 = sbr.rel (0) target = $region9
  $region8: #{transformer_forward.45} parent=0 // pred_region
    _
  $region9: #{transformer_forward.45} parent=0 // pred_fallthru
    _
  // Predicated region
  $region10: #{transformer_forward.45} parent=0 // pred_check
    _
  $region11: #{transformer_forward.45} parent=0 // pred_check_branch
    %13 = sbr.rel (0) target = $region13
  $region12: #{transformer_forward.45} parent=0 // pred_region
    _
  $region13: #{transformer_forward.45} parent=0 // pred_fallthru
    _
  %v15 = vld [vmem:[%s0] sm:$0xff]
  %v16 = vld [vmem:[%s0 + $0x8] sm:$0xff]
  %v17 = vld [vmem:[%s1] sm:$0xf]
  %v18 = vld [vmem:[%s1 + $0x4] sm:$0xf]
  %v19 = vld [vmem:[%s1 + $0x8] sm:$0xf]
  %v20 = vld [vmem:[%s1 + $0xc] sm:$0xf]
  %v21 = vpack.c.bf16 %v16, %v15
  %v22 = vld [vmem:[%s2] sm:$0x1]
  %v24 = vlaneseq
  %v25 = vshrl.u32 %v24, 7
  %v26 = vsub.s32 0, %v25
  %v27 = vrot.slane %v22, %v26
  %v33 = vunpack.c.l.b16 %v17
  %v34 = vunpack.c.l.b16 %v18
  %v35 = vunpack.c.l.b16 %v19
  %v36 = vunpack.c.l.b16 %v20
  %v37 = vpack.c.b16 %v34, %v33
  %v38 = vpack.c.b16 %v36, %v35
  %vm41 = vcmask 261120
  %v43 = vsel %vm41, %v21, 0
  %45 = vmatprep.subr.bf16.mxu0 0
  %46 = vmatpush1.bf16.msra.mxu0 %v37
  %47 = vmatprep.subr.bf16.mxu0 0
  %48 = vmatpush1.bf16.msra.mxu0 %v38
  %49 = vmatprep.subr.bf16.mxu0 0
  %50 = vmatpush1.bf16.msra.mxu0 0
  %51 = vmatprep.subr.bf16.mxu0 0
  %52 = vmatpush1.bf16.msra.mxu0 0
  %53 = vmatprep.subr.bf16.mxu0 0
  %54 = vmatpush1.bf16.msra.mxu0 0
  %55 = vmatprep.subr.bf16.mxu0 0
  %56 = vmatpush1.bf16.msra.mxu0 0
  %57 = vmatprep.subr.bf16.mxu0 0
  %58 = vmatpush1.bf16.msra.mxu0 0
  %59 = vmatprep.subr.bf16.mxu0 0
  %60 = vmatpush1.bf16.msra.mxu0 0
  %61 = vmatprep.subr.bf16.mxu0 0
  %62 = vmatpush1.bf16.msra.mxu0 0
  %63 = vmatprep.subr.bf16.mxu0 0
  %64 = vmatpush1.bf16.msra.mxu0 0
  %65 = vmatprep.subr.bf16.mxu0 0
  %66 = vmatpush1.bf16.msra.mxu0 0
  %67 = vmatprep.subr.bf16.mxu0 0
  %68 = vmatpush1.bf16.msra.mxu0 0
  %69 = vmatprep.subr.bf16.mxu0 0
  %70 = vmatpush1.bf16.msra.mxu0 0
  %71 = vmatprep.subr.bf16.mxu0 0
  %72 = vmatpush1.bf16.msra.mxu0 0
  %73 = vmatprep.subr.bf16.mxu0 0
  %74 = vmatpush1.bf16.msra.mxu0 0
  %75 = vmatprep.subr.bf16.mxu0 0
  %76 = vmatpush1.bf16.msra.mxu0 0
  %77 = vmatprep.mubr.bf16.mxu0 0
  %78 = vmatmul.mubr.bf16.gmra.mrb[0].mxu0 %v43
  %v79 = vpop.f32.mrb[0].mxu0
  %v80 = vadd.f32 %v27, %v79
  %v81 = vpop.f32.mrb[0].mxu0
  %v82 = vpop.f32.mrb[0].mxu0
  %v83 = vadd.f32 %v27, %v82
  %v84 = vpop.f32.mrb[0].mxu0
  %85 = vdwg.mxu0
  %v86 = vpack.c.bf16 %v83, %v80
  %v88 = vunpack.c.l.b16 %v86
  %v89 = vunpack.c.h.b16 %v86
  %v90 = vpack.c.b16 %v88, %v88
  %v91 = vpack.c.b16 %v89, %v89
  %vm94 = vcmask 519168
  %95 = vst.msk [vmem:[%s3] sm:$0xf] %vm94, %v90
  %96 = vst.msk [vmem:[%s3 + $0x4] sm:$0xf] %vm94, %v91
  // Predicated region
  $region14: #{transformer_forward.45} parent=0 // pred_check
    _
  $region15: #{transformer_forward.45} parent=0 // pred_check_branch
    %98 = sbr.rel (0) target = $region17
  $region16: #{transformer_forward.45} parent=0 // pred_region
    _
  $region17: #{transformer_forward.45} parent=0 // pred_fallthru
    _
  // Predicated region
  $region18: #{transformer_forward.45} parent=0 // pred_check
    _
  $region19: #{transformer_forward.45} parent=0 // pred_check_branch
    %100 = sbr.rel (0) target = $region21
  $region20: #{transformer_forward.45} parent=0 // pred_region
    _
  $region21: #{transformer_forward.45} parent=0 // pred_fallthru
    _

// kernel: transformer_forward.65
$region0: #{transformer_forward.65}
  #allocation0 [shape = 'u32[]', space=smem, size = 0x4, offset = 0x4, fixed_abs, tag = 'smem constant byte address 0x4 - core index']
  #allocation1 [shape = 'u32[144,128]{1,0:T(1,128)}', space=vmem, size = 0x12000, scoped, tag = 'internal scratch']
  %s0 = inlined_call_operand.vmem [shape: f32[16,32], index: 0, kind: input, shape index: {}]
  %s1 = inlined_call_operand.vmem [shape: bf16[32,128], index: 1, kind: input, shape index: {}]
  %s2 = inlined_call_operand.vmem [shape: f32[1,128], index: 2, kind: input, shape index: {}]
  %s3 = inlined_call_operand.hbm [shape: f32[16,128], index: 3, kind: output, shape index: {}]
  %s4 = sld [smem:[#allocation0]]
  $region22: #{transformer_forward.65} parent=0
    _
  %s6 = ssub.s32 1, %s4
  %s7 = scalar_select 0, %s6, %s4
  $region1: #{transformer_forward.65} parent=0
    #allocation2 [shape = 'u8[8192]{0}', space=vmem, size = 0x2000, scoped, tag = 'output window, operand 0, single buffered']
    #allocation3 [shape = 's32[1]{0}', space=sflag, size = 0x4, scoped, tag = 'scoped memory for transformer_forward.65']
    %8 = vsyncpa [#allocation3], 0
    // Predicated region
    $region2: #{transformer_forward.65} parent=1 // pred_check
      _
    $region3: #{transformer_forward.65} parent=1 // pred_check_branch
      %10 = sbr.rel (0) target = $region5
    $region4: #{transformer_forward.65} parent=1 // pred_region
      _
    $region5: #{transformer_forward.65} parent=1 // pred_fallthru
      _
    // Predicated region
    $region6: #{transformer_forward.65} parent=1 // pred_check
      _
    $region7: #{transformer_forward.65} parent=1 // pred_check_branch
      %12 = sbr.rel (0) target = $region9
    $region8: #{transformer_forward.65} parent=1 // pred_region
      _
    $region9: #{transformer_forward.65} parent=1 // pred_fallthru
      _
    // Predicated region
    $region10: #{transformer_forward.65} parent=1 // pred_check
      _
    $region11: #{transformer_forward.65} parent=1 // pred_check_branch
      %14 = sbr.rel (0) target = $region13
    $region12: #{transformer_forward.65} parent=1 // pred_region
      _
    $region13: #{transformer_forward.65} parent=1 // pred_fallthru
      _
    %v16 = vld [vmem:[%s0] sm:$0xff]
    %v17 = vld [vmem:[%s0 + $0x8] sm:$0xff]
    %v18 = vld [vmem:[%s1] sm:$0xf]
    %v19 = vld [vmem:[%s1 + $0x4] sm:$0xf]
    %v20 = vld [vmem:[%s1 + $0x8] sm:$0xf]
    %v21 = vld [vmem:[%s1 + $0xc] sm:$0xf]
    %v22 = vpack.c.bf16 %v17, %v16
    %v23 = vld [vmem:[%s2] sm:$0x1]
    %v25 = vlaneseq
    %v26 = vshrl.u32 %v25, 7
    %v27 = vsub.s32 0, %v26
    %v28 = vrot.slane %v23, %v27
    %v34 = vunpack.c.l.b16 %v18
    %v35 = vunpack.c.l.b16 %v19
    %v36 = vunpack.c.l.b16 %v20
    %v37 = vunpack.c.l.b16 %v21
    %v38 = vpack.c.b16 %v35, %v34
    %v39 = vpack.c.b16 %v37, %v36
    %vm42 = vcmask 261120
    %v44 = vsel %vm42, %v22, 0
    %46 = vmatprep.subr.bf16.mxu0 0
    %47 = vmatpush1.bf16.msra.mxu0 %v38
    %48 = vmatprep.subr.bf16.mxu0 0
    %49 = vmatpush1.bf16.msra.mxu0 %v39
    %50 = vmatprep.subr.bf16.mxu0 0
    %51 = vmatpush1.bf16.msra.mxu0 0
    %52 = vmatprep.subr.bf16.mxu0 0
    %53 = vmatpush1.bf16.msra.mxu0 0
    %54 = vmatprep.subr.bf16.mxu0 0
    %55 = vmatpush1.bf16.msra.mxu0 0
    %56 = vmatprep.subr.bf16.mxu0 0
    %57 = vmatpush1.bf16.msra.mxu0 0
    %58 = vmatprep.subr.bf16.mxu0 0
    %59 = vmatpush1.bf16.msra.mxu0 0
    %60 = vmatprep.subr.bf16.mxu0 0
    %61 = vmatpush1.bf16.msra.mxu0 0
    %62 = vmatprep.subr.bf16.mxu0 0
    %63 = vmatpush1.bf16.msra.mxu0 0
    %64 = vmatprep.subr.bf16.mxu0 0
    %65 = vmatpush1.bf16.msra.mxu0 0
    %66 = vmatprep.subr.bf16.mxu0 0
    %67 = vmatpush1.bf16.msra.mxu0 0
    %68 = vmatprep.subr.bf16.mxu0 0
    %69 = vmatpush1.bf16.msra.mxu0 0
    %70 = vmatprep.subr.bf16.mxu0 0
    %71 = vmatpush1.bf16.msra.mxu0 0
    %72 = vmatprep.subr.bf16.mxu0 0
    %73 = vmatpush1.bf16.msra.mxu0 0
    %74 = vmatprep.subr.bf16.mxu0 0
    %75 = vmatpush1.bf16.msra.mxu0 0
    %76 = vmatprep.subr.bf16.mxu0 0
    %77 = vmatpush1.bf16.msra.mxu0 0
    %78 = vmatprep.mubr.bf16.mxu0 0
    %79 = vmatmul.mubr.bf16.gmra.mrb[0].mxu0 %v44
    %v80 = vpop.f32.mrb[0].mxu0
    %v81 = vadd.f32 %v28, %v80
    %v82 = vpop.f32.mrb[0].mxu0
    %v83 = vpop.f32.mrb[0].mxu0
    %v84 = vadd.f32 %v28, %v83
    %v85 = vpop.f32.mrb[0].mxu0
    %86 = vdwg.mxu0
    %87 = vst [vmem:[#allocation2] sm:$0xff] %v81
    %88 = vst [vmem:[#allocation2 + $0x8] sm:$0xff] %v84
    // Predicated region
    $region14: #{transformer_forward.65} parent=1 // pred_check
      _
    $region15: #{transformer_forward.65} parent=1 // pred_check_branch
      %90 = sbr.rel (0) target = $region17
    $region16: #{transformer_forward.65} parent=1 // pred_region
      %s92 = ssub.s32 256, 256
      %93 = vsyncadd [#allocation3], %s92
      %s94 = sshll.u32 [#allocation2], 4
      %s95 = int_to_ptr.vmem [resolvable:$true] %s94
      %100 = dma.vmem_to_hbm [thread:$0]  %s95, 256, %s3, [#allocation3], 128, 128, 8
    $region17: #{transformer_forward.65} parent=1 // pred_fallthru
      _
    // Predicated region
    $region18: #{transformer_forward.65} parent=1 // pred_check
      _
    $region19: #{transformer_forward.65} parent=1 // pred_check_branch
      %102 = sbr.rel (0) target = $region21
    $region20: #{transformer_forward.65} parent=1 // pred_region
      %103 = dma.done [#allocation3], 256
    $region21: #{transformer_forward.65} parent=1 // pred_fallthru
      _
    %104 = vsyncpa [#allocation3], 1

// kernel: transformer_forward.46
$region0: #{transformer_forward.46}
  #allocation0 [shape = 'u32[]', space=smem, size = 0x4, offset = 0x4, fixed_abs, tag = 'smem constant byte address 0x4 - core index']
  #allocation1 [shape = 'u32[144,128]{1,0:T(1,128)}', space=vmem, size = 0x12000, scoped, tag = 'internal scratch']
  %s0 = inlined_call_operand.vmem [shape: bf16[2,8,32], index: 0, kind: input, shape index: {}]
  %s1 = inlined_call_operand.vmem [shape: bf16[2,8,64], index: 1, kind: input, shape index: {}]
  %s2 = inlined_call_operand.vmem [shape: bf16[2,8,32], index: 2, kind: output, shape index: {}]
  %s3 = sld [smem:[#allocation0]]
  $region18: #{transformer_forward.46} parent=0
    _
  %s5 = ssub.s32 1, %s3
  %s6 = scalar_select 0, %s5, %s3
  // Predicated region
  $region2: #{transformer_forward.46} parent=0 // pred_check
    _
  $region3: #{transformer_forward.46} parent=0 // pred_check_branch
    %8 = sbr.rel (0) target = $region5
  $region4: #{transformer_forward.46} parent=0 // pred_region
    _
  $region5: #{transformer_forward.46} parent=0 // pred_fallthru
    _
  // Predicated region
  $region6: #{transformer_forward.46} parent=0 // pred_check
    _
  $region7: #{transformer_forward.46} parent=0 // pred_check_branch
    %10 = sbr.rel (0) target = $region9
  $region8: #{transformer_forward.46} parent=0 // pred_region
    _
  $region9: #{transformer_forward.46} parent=0 // pred_fallthru
    _
  %v12 = vld [vmem:[%s0] sm:$0xf]
  %v13 = vld [vmem:[%s0 + $0x4] sm:$0xf]
  %v14 = vld [vmem:[%s1] sm:$0xf]
  %v15 = vld [vmem:[%s1 + $0x4] sm:$0xf]
  %vm16 = vcmask 64512
  %v18 = vsel %vm16, %v12, 0
  %v21 = vsel %vm16, %v14, 0
  %23 = vmatprep.subr.bf16.mxu0 0
  %24 = vmatpush1.bf16.xpose.msra.mxu0 %v21
  %25 = vmatprep.subr.bf16.mxu0 0
  %26 = vmatpush1.bf16.xpose.msra.mxu0 0
  %27 = vmatprep.subr.bf16.mxu0 0
  %28 = vmatpush1.bf16.xpose.msra.mxu0 0
  %29 = vmatprep.subr.bf16.mxu0 0
  %30 = vmatpush1.bf16.xpose.msra.mxu0 0
  %31 = vmatprep.subr.bf16.mxu0 0
  %32 = vmatpush1.bf16.xpose.msra.mxu0 0
  %33 = vmatprep.subr.bf16.mxu0 0
  %34 = vmatpush1.bf16.xpose.msra.mxu0 0
  %35 = vmatprep.subr.bf16.mxu0 0
  %36 = vmatpush1.bf16.xpose.msra.mxu0 0
  %37 = vmatprep.subr.bf16.mxu0 0
  %38 = vmatpush1.bf16.xpose.msra.mxu0 0
  %39 = vmatprep.subr.bf16.mxu0 0
  %40 = vmatpush1.bf16.xpose.msra.mxu0 0
  %41 = vmatprep.subr.bf16.mxu0 0
  %42 = vmatpush1.bf16.xpose.msra.mxu0 0
  %43 = vmatprep.subr.bf16.mxu0 0
  %44 = vmatpush1.bf16.xpose.msra.mxu0 0
  %45 = vmatprep.subr.bf16.mxu0 0
  %46 = vmatpush1.bf16.xpose.msra.mxu0 0
  %47 = vmatprep.subr.bf16.mxu0 0
  %48 = vmatpush1.bf16.xpose.msra.mxu0 0
  %49 = vmatprep.subr.bf16.mxu0 0
  %50 = vmatpush1.bf16.xpose.msra.mxu0 0
  %51 = vmatprep.subr.bf16.mxu0 0
  %52 = vmatpush1.bf16.xpose.msra.mxu0 0
  %53 = vmatprep.subr.bf16.mxu0 0
  %54 = vmatpush1.bf16.xpose.msra.mxu0 0
  %55 = vmatprep.mubr.bf16.mxu0 0
  %56 = vmatmul.mubr.bf16.gmra.mrb[0].mxu0 %v18
  %v57 = vpop.f32.mrb[0].mxu0
  %v58 = vadd.f32 0.0, %v57
  %v59 = vpop.f32.mrb[0].mxu0
  %v60 = vpop.f32.mrb[0].mxu0
  %v61 = vpop.f32.mrb[0].mxu0
  %62 = vdwg.mxu0
  %v64 = vsel %vm16, %v13, 0
  %v67 = vsel %vm16, %v15, 0
  %69 = vmatprep.subr.bf16.mxu0 0
  %70 = vmatpush1.bf16.xpose.msra.mxu0 %v67
  %71 = vmatprep.subr.bf16.mxu0 0
  %72 = vmatpush1.bf16.xpose.msra.mxu0 0
  %73 = vmatprep.subr.bf16.mxu0 0
  %74 = vmatpush1.bf16.xpose.msra.mxu0 0
  %75 = vmatprep.subr.bf16.mxu0 0
  %76 = vmatpush1.bf16.xpose.msra.mxu0 0
  %77 = vmatprep.subr.bf16.mxu0 0
  %78 = vmatpush1.bf16.xpose.msra.mxu0 0
  %79 = vmatprep.subr.bf16.mxu0 0
  %80 = vmatpush1.bf16.xpose.msra.mxu0 0
  %81 = vmatprep.subr.bf16.mxu0 0
  %82 = vmatpush1.bf16.xpose.msra.mxu0 0
  %83 = vmatprep.subr.bf16.mxu0 0
  %84 = vmatpush1.bf16.xpose.msra.mxu0 0
  %85 = vmatprep.subr.bf16.mxu0 0
  %86 = vmatpush1.bf16.xpose.msra.mxu0 0
  %87 = vmatprep.subr.bf16.mxu0 0
  %88 = vmatpush1.bf16.xpose.msra.mxu0 0
  %89 = vmatprep.subr.bf16.mxu0 0
  %90 = vmatpush1.bf16.xpose.msra.mxu0 0
  %91 = vmatprep.subr.bf16.mxu0 0
  %92 = vmatpush1.bf16.xpose.msra.mxu0 0
  %93 = vmatprep.subr.bf16.mxu0 0
  %94 = vmatpush1.bf16.xpose.msra.mxu0 0
  %95 = vmatprep.subr.bf16.mxu0 0
  %96 = vmatpush1.bf16.xpose.msra.mxu0 0
  %97 = vmatprep.subr.bf16.mxu0 0
  %98 = vmatpush1.bf16.xpose.msra.mxu0 0
  %99 = vmatprep.subr.bf16.mxu0 0
  %100 = vmatpush1.bf16.xpose.msra.mxu0 0
  %101 = vmatprep.mubr.bf16.mxu0 0
  %102 = vmatmul.mubr.bf16.gmra.mrb[0].mxu0 %v64
  %v103 = vpop.f32.mrb[0].mxu0
  %v104 = vadd.f32 0.0, %v103
  %v105 = vpop.f32.mrb[0].mxu0
  %v106 = vpop.f32.mrb[0].mxu0
  %v107 = vpop.f32.mrb[0].mxu0
  %108 = vdwg.mxu0
  %v109 = vsel %vm16, %v58, -inf
  %110 = vmax.xlane.f32.xlu0 %v109
  %v111 = vpop.xlane.xlu0 %110
  %v112 = vsel %vm16, %v104, -inf
  %113 = vmax.xlane.f32.xlu0 %v112
  %v114 = vpop.xlane.xlu0 %113
  %v115 = vsub.f32 %v58, %v111
  %v116 = vsub.f32 %v104, %v114
  %v117 = vmul.f32 %v115, 1.442695
  %v118 = vpow.pop %v117
  %v119 = vmul.f32 %v116, 1.442695
  %v120 = vpow.pop %v119
  %v121 = vsel %vm16, %v118, 0.0
  %122 = vadd.xlane.f32.xlu0 %v121
  %v123 = vpop.xlane.xlu0 %122
  %v124 = vsel %vm16, %v120, 0.0
  %125 = vadd.xlane.f32.xlu0 %v124
  %v126 = vpop.xlane.xlu0 %125
  %v127 = vrcp.pop %v123
  %v128 = vrcp.pop %v126
  %v129 = vmul.f32 %v118, %v127
  %v130 = vmul.f32 %v120, %v128
  %v131 = vpack.c.bf16 %v129, %v129
  %v132 = vpack.c.bf16 %v130, %v130
  %v134 = vunpack.c.l.b16 %v14
  %v135 = vpack.c.b16 %v134, %v134
  %136 = vrot.lane.b32.xlu0 %v135, 96
  %v137 = vpop.permute.xlu0 %136
  %v139 = vsel %vm16, %v131, 0
  %vm141 = vcmask 1043456
  %v143 = vsel %vm141, %v137, 0
  %145 = vmatprep.subr.bf16.mxu0 0
  %146 = vmatpush1.bf16.msra.mxu0 %v143
  %147 = vmatprep.subr.bf16.mxu0 0
  %148 = vmatpush1.bf16.msra.mxu0 0
  %149 = vmatprep.subr.bf16.mxu0 0
  %150 = vmatpush1.bf16.msra.mxu0 0
  %151 = vmatprep.subr.bf16.mxu0 0
  %152 = vmatpush1.bf16.msra.mxu0 0
  %153 = vmatprep.subr.bf16.mxu0 0
  %154 = vmatpush1.bf16.msra.mxu0 0
  %155 = vmatprep.subr.bf16.mxu0 0
  %156 = vmatpush1.bf16.msra.mxu0 0
  %157 = vmatprep.subr.bf16.mxu0 0
  %158 = vmatpush1.bf16.msra.mxu0 0
  %159 = vmatprep.subr.bf16.mxu0 0
  %160 = vmatpush1.bf16.msra.mxu0 0
  %161 = vmatprep.subr.bf16.mxu0 0
  %162 = vmatpush1.bf16.msra.mxu0 0
  %163 = vmatprep.subr.bf16.mxu0 0
  %164 = vmatpush1.bf16.msra.mxu0 0
  %165 = vmatprep.subr.bf16.mxu0 0
  %166 = vmatpush1.bf16.msra.mxu0 0
  %167 = vmatprep.subr.bf16.mxu0 0
  %168 = vmatpush1.bf16.msra.mxu0 0
  %169 = vmatprep.subr.bf16.mxu0 0
  %170 = vmatpush1.bf16.msra.mxu0 0
  %171 = vmatprep.subr.bf16.mxu0 0
  %172 = vmatpush1.bf16.msra.mxu0 0
  %173 = vmatprep.subr.bf16.mxu0 0
  %174 = vmatpush1.bf16.msra.mxu0 0
  %175 = vmatprep.subr.bf16.mxu0 0
  %176 = vmatpush1.bf16.msra.mxu0 0
  %177 = vmatprep.mubr.bf16.mxu0 0
  %178 = vmatmul.mubr.bf16.gmra.mrb[0].mxu0 %v139
  %v179 = vpop.f32.mrb[0].mxu0
  %v180 = vadd.f32 0.0, %v179
  %v181 = vpop.f32.mrb[0].mxu0
  %v182 = vpop.f32.mrb[0].mxu0
  %v183 = vpop.f32.mrb[0].mxu0
  %184 = vdwg.mxu0
  %v186 = vunpack.c.l.b16 %v15
  %v187 = vpack.c.b16 %v186, %v186
  %188 = vrot.lane.b32.xlu0 %v187, 96
  %v189 = vpop.permute.xlu0 %188
  %v191 = vsel %vm16, %v132, 0
  %v194 = vsel %vm141, %v189, 0
  %196 = vmatprep.subr.bf16.mxu0 0
  %197 = vmatpush1.bf16.msra.mxu0 %v194
  %198 = vmatprep.subr.bf16.mxu0 0
  %199 = vmatpush1.bf16.msra.mxu0 0
  %200 = vmatprep.subr.bf16.mxu0 0
  %201 = vmatpush1.bf16.msra.mxu0 0
  %202 = vmatprep.subr.bf16.mxu0 0
  %203 = vmatpush1.bf16.msra.mxu0 0
  %204 = vmatprep.subr.bf16.mxu0 0
  %205 = vmatpush1.bf16.msra.mxu0 0
  %206 = vmatprep.subr.bf16.mxu0 0
  %207 = vmatpush1.bf16.msra.mxu0 0
  %208 = vmatprep.subr.bf16.mxu0 0
  %209 = vmatpush1.bf16.msra.mxu0 0
  %210 = vmatprep.subr.bf16.mxu0 0
  %211 = vmatpush1.bf16.msra.mxu0 0
  %212 = vmatprep.subr.bf16.mxu0 0
  %213 = vmatpush1.bf16.msra.mxu0 0
  %214 = vmatprep.subr.bf16.mxu0 0
  %215 = vmatpush1.bf16.msra.mxu0 0
  %216 = vmatprep.subr.bf16.mxu0 0
  %217 = vmatpush1.bf16.msra.mxu0 0
  %218 = vmatprep.subr.bf16.mxu0 0
  %219 = vmatpush1.bf16.msra.mxu0 0
  %220 = vmatprep.subr.bf16.mxu0 0
  %221 = vmatpush1.bf16.msra.mxu0 0
  %222 = vmatprep.subr.bf16.mxu0 0
  %223 = vmatpush1.bf16.msra.mxu0 0
  %224 = vmatprep.subr.bf16.mxu0 0
  %225 = vmatpush1.bf16.msra.mxu0 0
  %226 = vmatprep.subr.bf16.mxu0 0
  %227 = vmatpush1.bf16.msra.mxu0 0
  %228 = vmatprep.mubr.bf16.mxu0 0
  %229 = vmatmul.mubr.bf16.gmra.mrb[0].mxu0 %v191
  %v230 = vpop.f32.mrb[0].mxu0
  %v231 = vadd.f32 0.0, %v230
  %v232 = vpop.f32.mrb[0].mxu0
  %v233 = vpop.f32.mrb[0].mxu0
  %v234 = vpop.f32.mrb[0].mxu0
  %235 = vdwg.mxu0
  %v236 = vpack.c.bf16 %v180, %v180
  %v237 = vpack.c.bf16 %v231, %v231
  %vm238 = vcmask 60416
  %239 = vst.msk [vmem:[%s2] sm:$0xf] %vm238, %v236
  %240 = vst.msk [vmem:[%s2 + $0x4] sm:$0xf] %vm238, %v237
  %v242 = vunpack.c.l.b16 %v12
  %v243 = vpack.c.b16 %v242, %v242
  %244 = vrot.lane.b32.xlu0 %v243, 120
  %v245 = vpop.permute.xlu0 %244
  %246 = vrot.lane.b32.xlu0 %v135, 120
  %v247 = vpop.permute.xlu0 %246
  %v249 = vsel %vm16, %v245, 0
  %v252 = vsel %vm16, %v247, 0
  %254 = vmatprep.subr.bf16.mxu0 0
  %255 = vmatpush1.bf16.xpose.msra.mxu0 %v252
  %256 = vmatprep.subr.bf16.mxu0 0
  %257 = vmatpush1.bf16.xpose.msra.mxu0 0
  %258 = vmatprep.subr.bf16.mxu0 0
  %259 = vmatpush1.bf16.xpose.msra.mxu0 0
  %260 = vmatprep.subr.bf16.mxu0 0
  %261 = vmatpush1.bf16.xpose.msra.mxu0 0
  %262 = vmatprep.subr.bf16.mxu0 0
  %263 = vmatpush1.bf16.xpose.msra.mxu0 0
  %264 = vmatprep.subr.bf16.mxu0 0
  %265 = vmatpush1.bf16.xpose.msra.mxu0 0
  %266 = vmatprep.subr.bf16.mxu0 0
  %267 = vmatpush1.bf16.xpose.msra.mxu0 0
  %268 = vmatprep.subr.bf16.mxu0 0
  %269 = vmatpush1.bf16.xpose.msra.mxu0 0
  %270 = vmatprep.subr.bf16.mxu0 0
  %271 = vmatpush1.bf16.xpose.msra.mxu0 0
  %272 = vmatprep.subr.bf16.mxu0 0
  %273 = vmatpush1.bf16.xpose.msra.mxu0 0
  %274 = vmatprep.subr.bf16.mxu0 0
  %275 = vmatpush1.bf16.xpose.msra.mxu0 0
  %276 = vmatprep.subr.bf16.mxu0 0
  %277 = vmatpush1.bf16.xpose.msra.mxu0 0
  %278 = vmatprep.subr.bf16.mxu0 0
  %279 = vmatpush1.bf16.xpose.msra.mxu0 0
  %280 = vmatprep.subr.bf16.mxu0 0
  %281 = vmatpush1.bf16.xpose.msra.mxu0 0
  %282 = vmatprep.subr.bf16.mxu0 0
  %283 = vmatpush1.bf16.xpose.msra.mxu0 0
  %284 = vmatprep.subr.bf16.mxu0 0
  %285 = vmatpush1.bf16.xpose.msra.mxu0 0
  %286 = vmatprep.mubr.bf16.mxu0 0
  %287 = vmatmul.mubr.bf16.gmra.mrb[0].mxu0 %v249
  %v288 = vpop.f32.mrb[0].mxu0
  %v289 = vadd.f32 0.0, %v288
  %v290 = vpop.f32.mrb[0].mxu0
  %v291 = vpop.f32.mrb[0].mxu0
  %v292 = vpop.f32.mrb[0].mxu0
  %293 = vdwg.mxu0
  %v295 = vunpack.c.l.b16 %v13
  %v296 = vpack.c.b16 %v295, %v295
  %297 = vrot.lane.b32.xlu0 %v296, 120
  %v298 = vpop.permute.xlu0 %297
  %299 = vrot.lane.b32.xlu0 %v187, 120
  %v300 = vpop.permute.xlu0 %299
  %v302 = vsel %vm16, %v298, 0
  %v305 = vsel %vm16, %v300, 0
  %307 = vmatprep.subr.bf16.mxu0 0
  %308 = vmatpush1.bf16.xpose.msra.mxu0 %v305
  %309 = vmatprep.subr.bf16.mxu0 0
  %310 = vmatpush1.bf16.xpose.msra.mxu0 0
  %311 = vmatprep.subr.bf16.mxu0 0
  %312 = vmatpush1.bf16.xpose.msra.mxu0 0
  %313 = vmatprep.subr.bf16.mxu0 0
  %314 = vmatpush1.bf16.xpose.msra.mxu0 0
  %315 = vmatprep.subr.bf16.mxu0 0
  %316 = vmatpush1.bf16.xpose.msra.mxu0 0
  %317 = vmatprep.subr.bf16.mxu0 0
  %318 = vmatpush1.bf16.xpose.msra.mxu0 0
  %319 = vmatprep.subr.bf16.mxu0 0
  %320 = vmatpush1.bf16.xpose.msra.mxu0 0
  %321 = vmatprep.subr.bf16.mxu0 0
  %322 = vmatpush1.bf16.xpose.msra.mxu0 0
  %323 = vmatprep.subr.bf16.mxu0 0
  %324 = vmatpush1.bf16.xpose.msra.mxu0 0
  %325 = vmatprep.subr.bf16.mxu0 0
  %326 = vmatpush1.bf16.xpose.msra.mxu0 0
  %327 = vmatprep.subr.bf16.mxu0 0
  %328 = vmatpush1.bf16.xpose.msra.mxu0 0
  %329 = vmatprep.subr.bf16.mxu0 0
  %330 = vmatpush1.bf16.xpose.msra.mxu0 0
  %331 = vmatprep.subr.bf16.mxu0 0
  %332 = vmatpush1.bf16.xpose.msra.mxu0 0
  %333 = vmatprep.subr.bf16.mxu0 0
  %334 = vmatpush1.bf16.xpose.msra.mxu0 0
  %335 = vmatprep.subr.bf16.mxu0 0
  %336 = vmatpush1.bf16.xpose.msra.mxu0 0
  %337 = vmatprep.subr.bf16.mxu0 0
  %338 = vmatpush1.bf16.xpose.msra.mxu0 0
  %339 = vmatprep.mubr.bf16.mxu0 0
  %340 = vmatmul.mubr.bf16.gmra.mrb[0].mxu0 %v302
  %v341 = vpop.f32.mrb[0].mxu0
  %v342 = vadd.f32 0.0, %v341
  %v343 = vpop.f32.mrb[0].mxu0
  %v344 = vpop.f32.mrb[0].mxu0
  %v345 = vpop.f32.mrb[0].mxu0
  %346 = vdwg.mxu0
  %v347 = vsel %vm16, %v289, -inf
  %348 = vmax.xlane.f32.xlu0 %v347
  %v349 = vpop.xlane.xlu0 %348
  %v350 = vsel %vm16, %v342, -inf
  %351 = vmax.xlane.f32.xlu0 %v350
  %v352 = vpop.xlane.xlu0 %351
  %v353 = vsub.f32 %v289, %v349
  %v354 = vsub.f32 %v342, %v352
  %v355 = vmul.f32 %v353, 1.442695
  %v356 = vpow.pop %v355
  %v357 = vmul.f32 %v354, 1.442695
  %v358 = vpow.pop %v357
  %v359 = vsel %vm16, %v356, 0.0
  %360 = vadd.xlane.f32.xlu0 %v359
  %v361 = vpop.xlane.xlu0 %360
  %v362 = vsel %vm16, %v358, 0.0
  %363 = vadd.xlane.f32.xlu0 %v362
  %v364 = vpop.xlane.xlu0 %363
  %v365 = vrcp.pop %v361
  %v366 = vrcp.pop %v364
  %v367 = vmul.f32 %v356, %v365
  %v368 = vmul.f32 %v358, %v366
  %v369 = vpack.c.bf16 %v367, %v367
  %v370 = vpack.c.bf16 %v368, %v368
  %371 = vrot.lane.b32.xlu0 %v135, 88
  %v372 = vpop.permute.xlu0 %371
  %v374 = vsel %vm16, %v369, 0
  %v377 = vsel %vm141, %v372, 0
  %379 = vmatprep.subr.bf16.mxu0 0
  %380 = vmatpush1.bf16.msra.mxu0 %v377
  %381 = vmatprep.subr.bf16.mxu0 0
  %382 = vmatpush1.bf16.msra.mxu0 0
  %383 = vmatprep.subr.bf16.mxu0 0
  %384 = vmatpush1.bf16.msra.mxu0 0
  %385 = vmatprep.subr.bf16.mxu0 0
  %386 = vmatpush1.bf16.msra.mxu0 0
  %387 = vmatprep.subr.bf16.mxu0 0
  %388 = vmatpush1.bf16.msra.mxu0 0
  %389 = vmatprep.subr.bf16.mxu0 0
  %390 = vmatpush1.bf16.msra.mxu0 0
  %391 = vmatprep.subr.bf16.mxu0 0
  %392 = vmatpush1.bf16.msra.mxu0 0
  %393 = vmatprep.subr.bf16.mxu0 0
  %394 = vmatpush1.bf16.msra.mxu0 0
  %395 = vmatprep.subr.bf16.mxu0 0
  %396 = vmatpush1.bf16.msra.mxu0 0
  %397 = vmatprep.subr.bf16.mxu0 0
  %398 = vmatpush1.bf16.msra.mxu0 0
  %399 = vmatprep.subr.bf16.mxu0 0
  %400 = vmatpush1.bf16.msra.mxu0 0
  %401 = vmatprep.subr.bf16.mxu0 0
  %402 = vmatpush1.bf16.msra.mxu0 0
  %403 = vmatprep.subr.bf16.mxu0 0
  %404 = vmatpush1.bf16.msra.mxu0 0
  %405 = vmatprep.subr.bf16.mxu0 0
  %406 = vmatpush1.bf16.msra.mxu0 0
  %407 = vmatprep.subr.bf16.mxu0 0
  %408 = vmatpush1.bf16.msra.mxu0 0
  %409 = vmatprep.subr.bf16.mxu0 0
  %410 = vmatpush1.bf16.msra.mxu0 0
  %411 = vmatprep.mubr.bf16.mxu0 0
  %412 = vmatmul.mubr.bf16.gmra.mrb[0].mxu0 %v374
  %v413 = vpop.f32.mrb[0].mxu0
  %v414 = vadd.f32 0.0, %v413
  %v415 = vpop.f32.mrb[0].mxu0
  %v416 = vpop.f32.mrb[0].mxu0
  %v417 = vpop.f32.mrb[0].mxu0
  %418 = vdwg.mxu0
  %419 = vrot.lane.b32.xlu0 %v187, 88
  %v420 = vpop.permute.xlu0 %419
  %v422 = vsel %vm16, %v370, 0
  %v425 = vsel %vm141, %v420, 0
  %427 = vmatprep.subr.bf16.mxu0 0
  %428 = vmatpush1.bf16.msra.mxu0 %v425
  %429 = vmatprep.subr.bf16.mxu0 0
  %430 = vmatpush1.bf16.msra.mxu0 0
  %431 = vmatprep.subr.bf16.mxu0 0
  %432 = vmatpush1.bf16.msra.mxu0 0
  %433 = vmatprep.subr.bf16.mxu0 0
  %434 = vmatpush1.bf16.msra.mxu0 0
  %435 = vmatprep.subr.bf16.mxu0 0
  %436 = vmatpush1.bf16.msra.mxu0 0
  %437 = vmatprep.subr.bf16.mxu0 0
  %438 = vmatpush1.bf16.msra.mxu0 0
  %439 = vmatprep.subr.bf16.mxu0 0
  %440 = vmatpush1.bf16.msra.mxu0 0
  %441 = vmatprep.subr.bf16.mxu0 0
  %442 = vmatpush1.bf16.msra.mxu0 0
  %443 = vmatprep.subr.bf16.mxu0 0
  %444 = vmatpush1.bf16.msra.mxu0 0
  %445 = vmatprep.subr.bf16.mxu0 0
  %446 = vmatpush1.bf16.msra.mxu0 0
  %447 = vmatprep.subr.bf16.mxu0 0
  %448 = vmatpush1.bf16.msra.mxu0 0
  %449 = vmatprep.subr.bf16.mxu0 0
  %450 = vmatpush1.bf16.msra.mxu0 0
  %451 = vmatprep.subr.bf16.mxu0 0
  %452 = vmatpush1.bf16.msra.mxu0 0
  %453 = vmatprep.subr.bf16.mxu0 0
  %454 = vmatpush1.bf16.msra.mxu0 0
  %455 = vmatprep.subr.bf16.mxu0 0
  %456 = vmatpush1.bf16.msra.mxu0 0
  %457 = vmatprep.subr.bf16.mxu0 0
  %458 = vmatpush1.bf16.msra.mxu0 0
  %459 = vmatprep.mubr.bf16.mxu0 0
  %460 = vmatmul.mubr.bf16.gmra.mrb[0].mxu0 %v422
  %v461 = vpop.f32.mrb[0].mxu0
  %v462 = vadd.f32 0.0, %v461
  %v463 = vpop.f32.mrb[0].mxu0
  %v464 = vpop.f32.mrb[0].mxu0
  %v465 = vpop.f32.mrb[0].mxu0
  %466 = vdwg.mxu0
  %v467 = vpack.c.bf16 %v414, %v414
  %v468 = vpack.c.bf16 %v462, %v462
  %v471 = vunpack.c.l.b16 %v467
  %v472 = vunpack.c.l.b16 %v468
  %v473 = vpack.c.b16 %v471, %v471
  %v474 = vpack.c.b16 %v472, %v472
  %475 = vrot.lane.b32.xlu0 %v473, 8
  %v476 = vpop.permute.xlu0 %475
  %477 = vrot.lane.b32.xlu0 %v474, 8
  %v478 = vpop.permute.xlu0 %477
  %vm481 = vcmask 126016
  %482 = vst.msk [vmem:[%s2] sm:$0xf] %vm481, %v476
  %483 = vst.msk [vmem:[%s2 + $0x4] sm:$0xf] %vm481, %v478
  %484 = vrot.lane.b32.xlu0 %v243, 112
  %v485 = vpop.permute.xlu0 %484
  %486 = vrot.lane.b32.xlu0 %v135, 112
  %v487 = vpop.permute.xlu0 %486
  %v489 = vsel %vm16, %v485, 0
  %v492 = vsel %vm16, %v487, 0
  %494 = vmatprep.subr.bf16.mxu0 0
  %495 = vmatpush1.bf16.xpose.msra.mxu0 %v492
  %496 = vmatprep.subr.bf16.mxu0 0
  %497 = vmatpush1.bf16.xpose.msra.mxu0 0
  %498 = vmatprep.subr.bf16.mxu0 0
  %499 = vmatpush1.bf16.xpose.msra.mxu0 0
  %500 = vmatprep.subr.bf16.mxu0 0
  %501 = vmatpush1.bf16.xpose.msra.mxu0 0
  %502 = vmatprep.subr.bf16.mxu0 0
  %503 = vmatpush1.bf16.xpose.msra.mxu0 0
  %504 = vmatprep.subr.bf16.mxu0 0
  %505 = vmatpush1.bf16.xpose.msra.mxu0 0
  %506 = vmatprep.subr.bf16.mxu0 0
  %507 = vmatpush1.bf16.xpose.msra.mxu0 0
  %508 = vmatprep.subr.bf16.mxu0 0
  %509 = vmatpush1.bf16.xpose.msra.mxu0 0
  %510 = vmatprep.subr.bf16.mxu0 0
  %511 = vmatpush1.bf16.xpose.msra.mxu0 0
  %512 = vmatprep.subr.bf16.mxu0 0
  %513 = vmatpush1.bf16.xpose.msra.mxu0 0
  %514 = vmatprep.subr.bf16.mxu0 0
  %515 = vmatpush1.bf16.xpose.msra.mxu0 0
  %516 = vmatprep.subr.bf16.mxu0 0
  %517 = vmatpush1.bf16.xpose.msra.mxu0 0
  %518 = vmatprep.subr.bf16.mxu0 0
  %519 = vmatpush1.bf16.xpose.msra.mxu0 0
  %520 = vmatprep.subr.bf16.mxu0 0
  %521 = vmatpush1.bf16.xpose.msra.mxu0 0
  %522 = vmatprep.subr.bf16.mxu0 0
  %523 = vmatpush1.bf16.xpose.msra.mxu0 0
  %524 = vmatprep.subr.bf16.mxu0 0
  %525 = vmatpush1.bf16.xpose.msra.mxu0 0
  %526 = vmatprep.mubr.bf16.mxu0 0
  %527 = vmatmul.mubr.bf16.gmra.mrb[0].mxu0 %v489
  %v528 = vpop.f32.mrb[0].mxu0
  %v529 = vadd.f32 0.0, %v528
  %v530 = vpop.f32.mrb[0].mxu0
  %v531 = vpop.f32.mrb[0].mxu0
  %v532 = vpop.f32.mrb[0].mxu0
  %533 = vdwg.mxu0
  %534 = vrot.lane.b32.xlu0 %v296, 112
  %v535 = vpop.permute.xlu0 %534
  %536 = vrot.lane.b32.xlu0 %v187, 112
  %v537 = vpop.permute.xlu0 %536
  %v539 = vsel %vm16, %v535, 0
  %v542 = vsel %vm16, %v537, 0
  %544 = vmatprep.subr.bf16.mxu0 0
  %545 = vmatpush1.bf16.xpose.msra.mxu0 %v542
  %546 = vmatprep.subr.bf16.mxu0 0
  %547 = vmatpush1.bf16.xpose.msra.mxu0 0
  %548 = vmatprep.subr.bf16.mxu0 0
  %549 = vmatpush1.bf16.xpose.msra.mxu0 0
  %550 = vmatprep.subr.bf16.mxu0 0
  %551 = vmatpush1.bf16.xpose.msra.mxu0 0
  %552 = vmatprep.subr.bf16.mxu0 0
  %553 = vmatpush1.bf16.xpose.msra.mxu0 0
  %554 = vmatprep.subr.bf16.mxu0 0
  %555 = vmatpush1.bf16.xpose.msra.mxu0 0
  %556 = vmatprep.subr.bf16.mxu0 0
  %557 = vmatpush1.bf16.xpose.msra.mxu0 0
  %558 = vmatprep.subr.bf16.mxu0 0
  %559 = vmatpush1.bf16.xpose.msra.mxu0 0
  %560 = vmatprep.subr.bf16.mxu0 0
  %561 = vmatpush1.bf16.xpose.msra.mxu0 0
  %562 = vmatprep.subr.bf16.mxu0 0
  %563 = vmatpush1.bf16.xpose.msra.mxu0 0
  %564 = vmatprep.subr.bf16.mxu0 0
  %565 = vmatpush1.bf16.xpose.msra.mxu0 0
  %566 = vmatprep.subr.bf16.mxu0 0
  %567 = vmatpush1.bf16.xpose.msra.mxu0 0
  %568 = vmatprep.subr.bf16.mxu0 0
  %569 = vmatpush1.bf16.xpose.msra.mxu0 0
  %570 = vmatprep.subr.bf16.mxu0 0
  %571 = vmatpush1.bf16.xpose.msra.mxu0 0
  %572 = vmatprep.subr.bf16.mxu0 0
  %573 = vmatpush1.bf16.xpose.msra.mxu0 0
  %574 = vmatprep.subr.bf16.mxu0 0
  %575 = vmatpush1.bf16.xpose.msra.mxu0 0
  %576 = vmatprep.mubr.bf16.mxu0 0
  %577 = vmatmul.mubr.bf16.gmra.mrb[0].mxu0 %v539
  %v578 = vpop.f32.mrb[0].mxu0
  %v579 = vadd.f32 0.0, %v578
  %v580 = vpop.f32.mrb[0].mxu0
  %v581 = vpop.f32.mrb[0].mxu0
  %v582 = vpop.f32.mrb[0].mxu0
  %583 = vdwg.mxu0
  %v584 = vsel %vm16, %v529, -inf
  %585 = vmax.xlane.f32.xlu0 %v584
  %v586 = vpop.xlane.xlu0 %585
  %v587 = vsel %vm16, %v579, -inf
  %588 = vmax.xlane.f32.xlu0 %v587
  %v589 = vpop.xlane.xlu0 %588
  %v590 = vsub.f32 %v529, %v586
  %v591 = vsub.f32 %v579, %v589
  %v592 = vmul.f32 %v590, 1.442695
  %v593 = vpow.pop %v592
  %v594 = vmul.f32 %v591, 1.442695
  %v595 = vpow.pop %v594
  %v596 = vsel %vm16, %v593, 0.0
  %597 = vadd.xlane.f32.xlu0 %v596
  %v598 = vpop.xlane.xlu0 %597
  %v599 = vsel %vm16, %v595, 0.0
  %600 = vadd.xlane.f32.xlu0 %v599
  %v601 = vpop.xlane.xlu0 %600
  %v602 = vrcp.pop %v598
  %v603 = vrcp.pop %v601
  %v604 = vmul.f32 %v593, %v602
  %v605 = vmul.f32 %v595, %v603
  %v606 = vpack.c.bf16 %v604, %v604
  %v607 = vpack.c.bf16 %v605, %v605
  %608 = vrot.lane.b32.xlu0 %v135, 80
  %v609 = vpop.permute.xlu0 %608
  %v611 = vsel %vm16, %v606, 0
  %v614 = vsel %vm141, %v609, 0
  %616 = vmatprep.subr.bf16.mxu0 0
  %617 = vmatpush1.bf16.msra.mxu0 %v614
  %618 = vmatprep.subr.bf16.mxu0 0
  %619 = vmatpush1.bf16.msra.mxu0 0
  %620 = vmatprep.subr.bf16.mxu0 0
  %621 = vmatpush1.bf16.msra.mxu0 0
  %622 = vmatprep.subr.bf16.mxu0 0
  %623 = vmatpush1.bf16.msra.mxu0 0
  %624 = vmatprep.subr.bf16.mxu0 0
  %625 = vmatpush1.bf16.msra.mxu0 0
  %626 = vmatprep.subr.bf16.mxu0 0
  %627 = vmatpush1.bf16.msra.mxu0 0
  %628 = vmatprep.subr.bf16.mxu0 0
  %629 = vmatpush1.bf16.msra.mxu0 0
  %630 = vmatprep.subr.bf16.mxu0 0
  %631 = vmatpush1.bf16.msra.mxu0 0
  %632 = vmatprep.subr.bf16.mxu0 0
  %633 = vmatpush1.bf16.msra.mxu0 0
  %634 = vmatprep.subr.bf16.mxu0 0
  %635 = vmatpush1.bf16.msra.mxu0 0
  %636 = vmatprep.subr.bf16.mxu0 0
  %637 = vmatpush1.bf16.msra.mxu0 0
  %638 = vmatprep.subr.bf16.mxu0 0
  %639 = vmatpush1.bf16.msra.mxu0 0
  %640 = vmatprep.subr.bf16.mxu0 0
  %641 = vmatpush1.bf16.msra.mxu0 0
  %642 = vmatprep.subr.bf16.mxu0 0
  %643 = vmatpush1.bf16.msra.mxu0 0
  %644 = vmatprep.subr.bf16.mxu0 0
  %645 = vmatpush1.bf16.msra.mxu0 0
  %646 = vmatprep.subr.bf16.mxu0 0
  %647 = vmatpush1.bf16.msra.mxu0 0
  %648 = vmatprep.mubr.bf16.mxu0 0
  %649 = vmatmul.mubr.bf16.gmra.mrb[0].mxu0 %v611
  %v650 = vpop.f32.mrb[0].mxu0
  %v651 = vadd.f32 0.0, %v650
  %v652 = vpop.f32.mrb[0].mxu0
  %v653 = vpop.f32.mrb[0].mxu0
  %v654 = vpop.f32.mrb[0].mxu0
  %655 = vdwg.mxu0
  %656 = vrot.lane.b32.xlu0 %v187, 80
  %v657 = vpop.permute.xlu0 %656
  %v659 = vsel %vm16, %v607, 0
  %v662 = vsel %vm141, %v657, 0
  %664 = vmatprep.subr.bf16.mxu0 0
  %665 = vmatpush1.bf16.msra.mxu0 %v662
  %666 = vmatprep.subr.bf16.mxu0 0
  %667 = vmatpush1.bf16.msra.mxu0 0
  %668 = vmatprep.subr.bf16.mxu0 0
  %669 = vmatpush1.bf16.msra.mxu0 0
  %670 = vmatprep.subr.bf16.mxu0 0
  %671 = vmatpush1.bf16.msra.mxu0 0
  %672 = vmatprep.subr.bf16.mxu0 0
  %673 = vmatpush1.bf16.msra.mxu0 0
  %674 = vmatprep.subr.bf16.mxu0 0
  %675 = vmatpush1.bf16.msra.mxu0 0
  %676 = vmatprep.subr.bf16.mxu0 0
  %677 = vmatpush1.bf16.msra.mxu0 0
  %678 = vmatprep.subr.bf16.mxu0 0
  %679 = vmatpush1.bf16.msra.mxu0 0
  %680 = vmatprep.subr.bf16.mxu0 0
  %681 = vmatpush1.bf16.msra.mxu0 0
  %682 = vmatprep.subr.bf16.mxu0 0
  %683 = vmatpush1.bf16.msra.mxu0 0
  %684 = vmatprep.subr.bf16.mxu0 0
  %685 = vmatpush1.bf16.msra.mxu0 0
  %686 = vmatprep.subr.bf16.mxu0 0
  %687 = vmatpush1.bf16.msra.mxu0 0
  %688 = vmatprep.subr.bf16.mxu0 0
  %689 = vmatpush1.bf16.msra.mxu0 0
  %690 = vmatprep.subr.bf16.mxu0 0
  %691 = vmatpush1.bf16.msra.mxu0 0
  %692 = vmatprep.subr.bf16.mxu0 0
  %693 = vmatpush1.bf16.msra.mxu0 0
  %694 = vmatprep.subr.bf16.mxu0 0
  %695 = vmatpush1.bf16.msra.mxu0 0
  %696 = vmatprep.mubr.bf16.mxu0 0
  %697 = vmatmul.mubr.bf16.gmra.mrb[0].mxu0 %v659
  %v698 = vpop.f32.mrb[0].mxu0
  %v699 = vadd.f32 0.0, %v698
  %v700 = vpop.f32.mrb[0].mxu0
  %v701 = vpop.f32.mrb[0].mxu0
  %v702 = vpop.f32.mrb[0].mxu0
  %703 = vdwg.mxu0
  %v704 = vpack.c.bf16 %v651, %v651
  %v705 = vpack.c.bf16 %v699, %v699
  %v708 = vunpack.c.l.b16 %v704
  %v709 = vunpack.c.l.b16 %v705
  %v710 = vpack.c.b16 %v708, %v708
  %v711 = vpack.c.b16 %v709, %v709
  %712 = vrot.lane.b32.xlu0 %v710, 16
  %v713 = vpop.permute.xlu0 %712
  %714 = vrot.lane.b32.xlu0 %v711, 16
  %v715 = vpop.permute.xlu0 %714
  %vm718 = vcmask 191616
  %719 = vst.msk [vmem:[%s2] sm:$0xf] %vm718, %v713
  %720 = vst.msk [vmem:[%s2 + $0x4] sm:$0xf] %vm718, %v715
  %721 = vrot.lane.b32.xlu0 %v243, 104
  %v722 = vpop.permute.xlu0 %721
  %723 = vrot.lane.b32.xlu0 %v135, 104
  %v724 = vpop.permute.xlu0 %723
  %v726 = vsel %vm16, %v722, 0
  %v729 = vsel %vm16, %v724, 0
  %731 = vmatprep.subr.bf16.mxu0 0
  %732 = vmatpush1.bf16.xpose.msra.mxu0 %v729
  %733 = vmatprep.subr.bf16.mxu0 0
  %734 = vmatpush1.bf16.xpose.msra.mxu0 0
  %735 = vmatprep.subr.bf16.mxu0 0
  %736 = vmatpush1.bf16.xpose.msra.mxu0 0
  %737 = vmatprep.subr.bf16.mxu0 0
  %738 = vmatpush1.bf16.xpose.msra.mxu0 0
  %739 = vmatprep.subr.bf16.mxu0 0
  %740 = vmatpush1.bf16.xpose.msra.mxu0 0
  %741 = vmatprep.subr.bf16.mxu0 0
  %742 = vmatpush1.bf16.xpose.msra.mxu0 0
  %743 = vmatprep.subr.bf16.mxu0 0
  %744 = vmatpush1.bf16.xpose.msra.mxu0 0
  %745 = vmatprep.subr.bf16.mxu0 0
  %746 = vmatpush1.bf16.xpose.msra.mxu0 0
  %747 = vmatprep.subr.bf16.mxu0 0
  %748 = vmatpush1.bf16.xpose.msra.mxu0 0
  %749 = vmatprep.subr.bf16.mxu0 0
  %750 = vmatpush1.bf16.xpose.msra.mxu0 0
  %751 = vmatprep.subr.bf16.mxu0 0
  %752 = vmatpush1.bf16.xpose.msra.mxu0 0
  %753 = vmatprep.subr.bf16.mxu0 0
  %754 = vmatpush1.bf16.xpose.msra.mxu0 0
  %755 = vmatprep.subr.bf16.mxu0 0
  %756 = vmatpush1.bf16.xpose.msra.mxu0 0
  %757 = vmatprep.subr.bf16.mxu0 0
  %758 = vmatpush1.bf16.xpose.msra.mxu0 0
  %759 = vmatprep.subr.bf16.mxu0 0
  %760 = vmatpush1.bf16.xpose.msra.mxu0 0
  %761 = vmatprep.subr.bf16.mxu0 0
  %762 = vmatpush1.bf16.xpose.msra.mxu0 0
  %763 = vmatprep.mubr.bf16.mxu0 0
  %764 = vmatmul.mubr.bf16.gmra.mrb[0].mxu0 %v726
  %v765 = vpop.f32.mrb[0].mxu0
  %v766 = vadd.f32 0.0, %v765
  %v767 = vpop.f32.mrb[0].mxu0
  %v768 = vpop.f32.mrb[0].mxu0
  %v769 = vpop.f32.mrb[0].mxu0
  %770 = vdwg.mxu0
  %771 = vrot.lane.b32.xlu0 %v296, 104
  %v772 = vpop.permute.xlu0 %771
  %773 = vrot.lane.b32.xlu0 %v187, 104
  %v774 = vpop.permute.xlu0 %773
  %v776 = vsel %vm16, %v772, 0
  %v779 = vsel %vm16, %v774, 0
  %781 = vmatprep.subr.bf16.mxu0 0
  %782 = vmatpush1.bf16.xpose.msra.mxu0 %v779
  %783 = vmatprep.subr.bf16.mxu0 0
  %784 = vmatpush1.bf16.xpose.msra.mxu0 0
  %785 = vmatprep.subr.bf16.mxu0 0
  %786 = vmatpush1.bf16.xpose.msra.mxu0 0
  %787 = vmatprep.subr.bf16.mxu0 0
  %788 = vmatpush1.bf16.xpose.msra.mxu0 0
  %789 = vmatprep.subr.bf16.mxu0 0
  %790 = vmatpush1.bf16.xpose.msra.mxu0 0
  %791 = vmatprep.subr.bf16.mxu0 0
  %792 = vmatpush1.bf16.xpose.msra.mxu0 0
  %793 = vmatprep.subr.bf16.mxu0 0
  %794 = vmatpush1.bf16.xpose.msra.mxu0 0
  %795 = vmatprep.subr.bf16.mxu0 0
  %796 = vmatpush1.bf16.xpose.msra.mxu0 0
  %797 = vmatprep.subr.bf16.mxu0 0
  %798 = vmatpush1.bf16.xpose.msra.mxu0 0
  %799 = vmatprep.subr.bf16.mxu0 0
  %800 = vmatpush1.bf16.xpose.msra.mxu0 0
  %801 = vmatprep.subr.bf16.mxu0 0
  %802 = vmatpush1.bf16.xpose.msra.mxu0 0
  %803 = vmatprep.subr.bf16.mxu0 0
  %804 = vmatpush1.bf16.xpose.msra.mxu0 0
  %805 = vmatprep.subr.bf16.mxu0 0
  %806 = vmatpush1.bf16.xpose.msra.mxu0 0
  %807 = vmatprep.subr.bf16.mxu0 0
  %808 = vmatpush1.bf16.xpose.msra.mxu0 0
  %809 = vmatprep.subr.bf16.mxu0 0
  %810 = vmatpush1.bf16.xpose.msra.mxu0 0
  %811 = vmatprep.subr.bf16.mxu0 0
  %812 = vmatpush1.bf16.xpose.msra.mxu0 0
  %813 = vmatprep.mubr.bf16.mxu0 0
  %814 = vmatmul.mubr.bf16.gmra.mrb[0].mxu0 %v776
  %v815 = vpop.f32.mrb[0].mxu0
  %v816 = vadd.f32 0.0, %v815
  %v817 = vpop.f32.mrb[0].mxu0
  %v818 = vpop.f32.mrb[0].mxu0
  %v819 = vpop.f32.mrb[0].mxu0
  %820 = vdwg.mxu0
  %v821 = vsel %vm16, %v766, -inf
  %822 = vmax.xlane.f32.xlu0 %v821
  %v823 = vpop.xlane.xlu0 %822
  %v824 = vsel %vm16, %v816, -inf
  %825 = vmax.xlane.f32.xlu0 %v824
  %v826 = vpop.xlane.xlu0 %825
  %v827 = vsub.f32 %v766, %v823
  %v828 = vsub.f32 %v816, %v826
  %v829 = vmul.f32 %v827, 1.442695
  %v830 = vpow.pop %v829
  %v831 = vmul.f32 %v828, 1.442695
  %v832 = vpow.pop %v831
  %v833 = vsel %vm16, %v830, 0.0
  %834 = vadd.xlane.f32.xlu0 %v833
  %v835 = vpop.xlane.xlu0 %834
  %v836 = vsel %vm16, %v832, 0.0
  %837 = vadd.xlane.f32.xlu0 %v836
  %v838 = vpop.xlane.xlu0 %837
  %v839 = vrcp.pop %v835
  %v840 = vrcp.pop %v838
  %v841 = vmul.f32 %v830, %v839
  %v842 = vmul.f32 %v832, %v840
  %v843 = vpack.c.bf16 %v841, %v841
  %v844 = vpack.c.bf16 %v842, %v842
  %845 = vrot.lane.b32.xlu0 %v135, 72
  %v846 = vpop.permute.xlu0 %845
  %v848 = vsel %vm16, %v843, 0
  %v851 = vsel %vm141, %v846, 0
  %853 = vmatprep.subr.bf16.mxu0 0
  %854 = vmatpush1.bf16.msra.mxu0 %v851
  %855 = vmatprep.subr.bf16.mxu0 0
  %856 = vmatpush1.bf16.msra.mxu0 0
  %857 = vmatprep.subr.bf16.mxu0 0
  %858 = vmatpush1.bf16.msra.mxu0 0
  %859 = vmatprep.subr.bf16.mxu0 0
  %860 = vmatpush1.bf16.msra.mxu0 0
  %861 = vmatprep.subr.bf16.mxu0 0
  %862 = vmatpush1.bf16.msra.mxu0 0
  %863 = vmatprep.subr.bf16.mxu0 0
  %864 = vmatpush1.bf16.msra.mxu0 0
  %865 = vmatprep.subr.bf16.mxu0 0
  %866 = vmatpush1.bf16.msra.mxu0 0
  %867 = vmatprep.subr.bf16.mxu0 0
  %868 = vmatpush1.bf16.msra.mxu0 0
  %869 = vmatprep.subr.bf16.mxu0 0
  %870 = vmatpush1.bf16.msra.mxu0 0
  %871 = vmatprep.subr.bf16.mxu0 0
  %872 = vmatpush1.bf16.msra.mxu0 0
  %873 = vmatprep.subr.bf16.mxu0 0
  %874 = vmatpush1.bf16.msra.mxu0 0
  %875 = vmatprep.subr.bf16.mxu0 0
  %876 = vmatpush1.bf16.msra.mxu0 0
  %877 = vmatprep.subr.bf16.mxu0 0
  %878 = vmatpush1.bf16.msra.mxu0 0
  %879 = vmatprep.subr.bf16.mxu0 0
  %880 = vmatpush1.bf16.msra.mxu0 0
  %881 = vmatprep.subr.bf16.mxu0 0
  %882 = vmatpush1.bf16.msra.mxu0 0
  %883 = vmatprep.subr.bf16.mxu0 0
  %884 = vmatpush1.bf16.msra.mxu0 0
  %885 = vmatprep.mubr.bf16.mxu0 0
  %886 = vmatmul.mubr.bf16.gmra.mrb[0].mxu0 %v848
  %v887 = vpop.f32.mrb[0].mxu0
  %v888 = vadd.f32 0.0, %v887
  %v889 = vpop.f32.mrb[0].mxu0
  %v890 = vpop.f32.mrb[0].mxu0
  %v891 = vpop.f32.mrb[0].mxu0
  %892 = vdwg.mxu0
  %893 = vrot.lane.b32.xlu0 %v187, 72
  %v894 = vpop.permute.xlu0 %893
  %v896 = vsel %vm16, %v844, 0
  %v899 = vsel %vm141, %v894, 0
  %901 = vmatprep.subr.bf16.mxu0 0
  %902 = vmatpush1.bf16.msra.mxu0 %v899
  %903 = vmatprep.subr.bf16.mxu0 0
  %904 = vmatpush1.bf16.msra.mxu0 0
  %905 = vmatprep.subr.bf16.mxu0 0
  %906 = vmatpush1.bf16.msra.mxu0 0
  %907 = vmatprep.subr.bf16.mxu0 0
  %908 = vmatpush1.bf16.msra.mxu0 0
  %909 = vmatprep.subr.bf16.mxu0 0
  %910 = vmatpush1.bf16.msra.mxu0 0
  %911 = vmatprep.subr.bf16.mxu0 0
  %912 = vmatpush1.bf16.msra.mxu0 0
  %913 = vmatprep.subr.bf16.mxu0 0
  %914 = vmatpush1.bf16.msra.mxu0 0
  %915 = vmatprep.subr.bf16.mxu0 0
  %916 = vmatpush1.bf16.msra.mxu0 0
  %917 = vmatprep.subr.bf16.mxu0 0
  %918 = vmatpush1.bf16.msra.mxu0 0
  %919 = vmatprep.subr.bf16.mxu0 0
  %920 = vmatpush1.bf16.msra.mxu0 0
  %921 = vmatprep.subr.bf16.mxu0 0
  %922 = vmatpush1.bf16.msra.mxu0 0
  %923 = vmatprep.subr.bf16.mxu0 0
  %924 = vmatpush1.bf16.msra.mxu0 0
  %925 = vmatprep.subr.bf16.mxu0 0
  %926 = vmatpush1.bf16.msra.mxu0 0
  %927 = vmatprep.subr.bf16.mxu0 0
  %928 = vmatpush1.bf16.msra.mxu0 0
  %929 = vmatprep.subr.bf16.mxu0 0
  %930 = vmatpush1.bf16.msra.mxu0 0
  %931 = vmatprep.subr.bf16.mxu0 0
  %932 = vmatpush1.bf16.msra.mxu0 0
  %933 = vmatprep.mubr.bf16.mxu0 0
  %934 = vmatmul.mubr.bf16.gmra.mrb[0].mxu0 %v896
  %v935 = vpop.f32.mrb[0].mxu0
  %v936 = vadd.f32 0.0, %v935
  %v937 = vpop.f32.mrb[0].mxu0
  %v938 = vpop.f32.mrb[0].mxu0
  %v939 = vpop.f32.mrb[0].mxu0
  %940 = vdwg.mxu0
  %v941 = vpack.c.bf16 %v888, %v888
  %v942 = vpack.c.bf16 %v936, %v936
  %v945 = vunpack.c.l.b16 %v941
  %v946 = vunpack.c.l.b16 %v942
  %v947 = vpack.c.b16 %v945, %v945
  %v948 = vpack.c.b16 %v946, %v946
  %949 = vrot.lane.b32.xlu0 %v947, 24
  %v950 = vpop.permute.xlu0 %949
  %951 = vrot.lane.b32.xlu0 %v948, 24
  %v952 = vpop.permute.xlu0 %951
  %vm955 = vcmask 257216
  %956 = vst.msk [vmem:[%s2] sm:$0xf] %vm955, %v950
  %957 = vst.msk [vmem:[%s2 + $0x4] sm:$0xf] %vm955, %v952
  // Predicated region
  $region10: #{transformer_forward.46} parent=0 // pred_check
    _
  $region11: #{transformer_forward.46} parent=0 // pred_check_branch
    %959 = sbr.rel (0) target = $region13
  $region12: #{transformer_forward.46} parent=0 // pred_region
    _
  $region13: #{transformer_forward.46} parent=0 // pred_fallthru
    _
  // Predicated region
  $region14: #{transformer_forward.46} parent=0 // pred_check
    _
  $region15: #{transformer_forward.46} parent=0 // pred_check_branch
    %961 = sbr.rel (0) target = $region17
  $region16: #{transformer_forward.46} parent=0 // pred_region
    _
  $region17: #{transformer_forward.46} parent=0 // pred_fallthru
    _

</llo_original>
